<compile_context>
chip_gen: v7x
topology: tpu7x:2x2x1
jax: 0.10.0
libtpu: 0.0.40
codegen_flags: <defaults>
</compile_context>

<pallas_src>
import math

import jax
import jax.numpy as jnp
from jax.experimental import pallas as pl
from jax.experimental.pallas import tpu as pltpu

# ---------------- configuration (small stand-in shapes) ---------------------
B = 2              # albums
N = 7              # images per album (<= max_images)
C = 4              # image channels
H = W = 16         # spatial size
D = 64             # embed_dim stand-in for backbone.num_features
NHEAD = 8          # D % 8 == 0 -> nhead = 8 (as in the module)
DH = D // NHEAD
FF = 2048          # PyTorch TransformerEncoderLayer default dim_feedforward
NUM_LAYERS = 2
NUM_CLASSES = 23
OUT_PAD = 128      # lane-dense padded logits width (sliced to 23 in wrapper)
MAX_IMAGES = 32
S = N + 1          # cls token + N image tokens  (== 8, one sublane tile)
LN_EPS = 1e-5
SCALE = 1.0 / math.sqrt(DH)


def _layer_norm(x, gamma, beta):
    mu = jnp.mean(x, axis=-1, keepdims=True)
    var = jnp.mean((x - mu) ** 2, axis=-1, keepdims=True)
    return (x - mu) * jax.lax.rsqrt(var + LN_EPS) * gamma + beta


# ------------------------------- fused kernel -------------------------------
def fused_forward_kernel(
        pooled_ref, bbw_ref, bbb_ref, base_ref, scat_ref, gath_ref, hmask_ref,
        wqkv_ref, bqkv_ref, wo_ref, bo_ref,
        w1_ref, b1_ref, w2_ref, b2_ref,
        g1_ref, be1_ref, g2_ref, be2_ref,
        cg_ref, cbe_ref, cw1_ref, cb1_ref, cw2_ref, cb2_ref,
        out_ref, h_scratch):
    l = pl.program_id(0)

    # ---- prologue (layer 0 only): backbone stand-in + token assembly -------
    @pl.when(l == 0)
    def _():
        feats = jnp.dot(pooled_ref[...], bbw_ref[...],
                        preferred_element_type=jnp.float32) + bbb_ref[...]  # (B*N, D)
        # base holds cls+pos rows; image feats scattered into token rows via
        # a constant selection matmul (no concat / sublane scatter).
        h_scratch[...] = base_ref[...] + jnp.dot(
            scat_ref[...], feats, preferred_element_type=jnp.float32)       # (B*S, D)

    h = h_scratch[...]                                                       # (B*S, D) f32
    head_mask = hmask_ref[...]                                               # (NH, 1, D)

    # ---- one post-norm encoder layer (weights for layer l via BlockSpec) ---
    qkv = jnp.dot(h.astype(jnp.bfloat16), wqkv_ref[0],
                  preferred_element_type=jnp.float32) + bqkv_ref[0]          # (B*S, 3D)
    q = qkv[:, :D].reshape(B, S, D)
    k = qkv[:, D:2 * D].reshape(B, S, D)
    v = qkv[:, 2 * D:].reshape(B, S, D)

    # Multi-head attention as 2-D matmuls per album:
    # Q is masked per head, so contracting over full D only picks up that
    # head's lanes of K; the PV output is re-selected with the same mask.
    attn_rows = []
    for b in range(B):                                                       # static B=2
        qh = (q[b][None, :, :] * head_mask).reshape(NHEAD * S, D)            # (NH*S, D)
        s = jnp.einsum('nd,sd->ns', qh, k[b],
                       preferred_element_type=jnp.float32) * SCALE           # (NH*S, S)
        s = s - jnp.max(s, axis=-1, keepdims=True)
        p = jnp.exp(s)
        p = p / jnp.sum(p, axis=-1, keepdims=True)                           # exact softmax
        o = jnp.dot(p, v[b], preferred_element_type=jnp.float32)             # (NH*S, D)
        attn_rows.append(
            jnp.sum(o.reshape(NHEAD, S, D) * head_mask, axis=0))             # (S, D)
    attn = jnp.concatenate(attn_rows, axis=0)                                # (B*S, D)
    attn = jnp.dot(attn.astype(jnp.bfloat16), wo_ref[0],
                   preferred_element_type=jnp.float32) + bo_ref[0]

    # post-norm encoder layer (PyTorch default); dropout = identity (eval)
    src = _layer_norm(h + attn, g1_ref[0], be1_ref[0])
    ff = jnp.dot(src.astype(jnp.bfloat16), w1_ref[0],
                 preferred_element_type=jnp.float32) + b1_ref[0]
    ff = jnp.maximum(ff, 0.0)                                                # relu
    ff = jnp.dot(ff.astype(jnp.bfloat16), w2_ref[0],
                 preferred_element_type=jnp.float32) + b2_ref[0]
    h_scratch[...] = _layer_norm(src + ff, g2_ref[0], be2_ref[0])

    # ---- epilogue (last layer): cls-token pooling + classifier head --------
    @pl.when(l == NUM_LAYERS - 1)
    def _():
        h_fin = h_scratch[...]
        agg = jnp.dot(gath_ref[...], h_fin,
                      preferred_element_type=jnp.float32)                    # (B, D)
        xn = _layer_norm(agg, cg_ref[...], cbe_ref[...])
        hid = jnp.dot(xn, cw1_ref[...],
                      preferred_element_type=jnp.float32) + cb1_ref[...]
        hid = jnp.maximum(hid, 0.0)
        # lane-dense (B, 128) store; padded weight columns are zero
        out_ref[...] = jnp.dot(hid, cw2_ref[...],
                               preferred_element_type=jnp.float32) + cb2_ref[...]


# ------------------------------- block specs ---------------------------------
def _const_spec(shape):
    nd = len(shape)
    return pl.BlockSpec(shape, lambda l, _nd=nd: (0,) * _nd)     # DMA'd once


def _layer_spec(shape):
    # (L, d1, d2) -> per-grid-step slice (1, d1, d2) of layer l
    return pl.BlockSpec((1,) + tuple(shape[1:]), lambda l: (l, 0, 0))


# --------------------- host-side constants (built once) ----------------------
def prepare_constants(params):
    pos = params["pos_embedding"][0, :S, :]                                  # (S, D)
    base_album = pos.at[0].add(params["cls_token"][0, 0])                    # cls + pos[0]
    base = jnp.tile(base_album, (B, 1))                                      # (B*S, D)

    # constant selection matrices: scatter image feats into token rows,
    # gather the per-album cls rows
    img_idx = jnp.arange(B * N)
    tok_rows = (img_idx // N) * S + (img_idx % N) + 1
    scatter = jnp.zeros((B * S, B * N), jnp.float32).at[tok_rows, img_idx].set(1.0)
    gather = jnp.zeros((B, B * S), jnp.float32).at[
        jnp.arange(B), jnp.arange(B) * S].set(1.0)

    # per-head lane mask for masked-head attention
    head_mask = (jnp.arange(D)[None, None, :] // DH
                 == jnp.arange(NHEAD)[:, None, None]).astype(jnp.float32)    # (NH,1,D)

    ch = params["cls_head"]
    cw2p = jnp.zeros((D, OUT_PAD), jnp.float32).at[:, :NUM_CLASSES].set(ch["w2"])
    cb2p = jnp.zeros((1, OUT_PAD), jnp.float32).at[:, :NUM_CLASSES].set(ch["b2"])

    enc = params["enc"]
    bf16 = jnp.bfloat16
    consts = {
        "bbw": params["backbone_w"], "bbb": params["backbone_b"],
        "base": base, "scatter": scatter, "gather": gather,
        "head_mask": head_mask,
        # heavy encoder weights in bf16 (halves dominant HBM DMA)
        "wqkv": enc["wqkv"].astype(bf16), "bqkv": enc["bqkv"],
        "wo": enc["wo"].astype(bf16), "bo": enc["bo"],
        "w1": enc["w1"].astype(bf16), "b1": enc["b1"],
        "w2": enc["w2"].astype(bf16), "b2": enc["b2"],
        "g1": enc["g1"], "be1": enc["be1"], "g2": enc["g2"], "be2": enc["be2"],
        "cg": ch["g"], "cbe": ch["be"], "cw1": ch["w1"], "cb1": ch["b1"],
        "cw2": cw2p, "cb2": cb2p,
    }
    return jax.tree_util.tree_map(jax.block_until_ready,
                                  jax.tree_util.tree_map(jnp.asarray, consts))


# ------------------------------- forward -------------------------------------
def album_event_classifier_forward(album_imgs, consts):
    # album_imgs: (B, N, C, H, W) — NCHW per image, as in PyTorch
    Bb, Nn, Cc, Hh, Ww = album_imgs.shape
    Ss = Nn + 1

    # backbone stand-in GAP done in the wrapper (one tiny XLA mean), so the
    # kernel gets (B*N, C) and the un-inflated (C, D) projection weight.
    pooled = jnp.mean(album_imgs, axis=(3, 4)).reshape(Bb * Nn, Cc)

    const_inputs = [pooled, consts["bbw"], consts["bbb"], consts["base"],
                    consts["scatter"], consts["gather"], consts["head_mask"]]
    layer_inputs = [consts[k] for k in ("wqkv", "bqkv", "wo", "bo",
                                        "w1", "b1", "w2", "b2",
                                        "g1", "be1", "g2", "be2")]
    head_inputs = [consts[k] for k in ("cg", "cbe", "cw1", "cb1", "cw2", "cb2")]

    in_specs = ([_const_spec(a.shape) for a in const_inputs]
                + [_layer_spec(a.shape) for a in layer_inputs]
                + [_const_spec(a.shape) for a in head_inputs])

    out_pad = pl.pallas_call(
        fused_forward_kernel,
        out_shape=jax.ShapeDtypeStruct((Bb, OUT_PAD), jnp.float32),
        grid_spec=pltpu.PrefetchScalarGridSpec(
            num_scalar_prefetch=0,
            grid=(NUM_LAYERS,),
            in_specs=in_specs,
            out_specs=pl.BlockSpec((Bb, OUT_PAD), lambda l: (0, 0)),
            scratch_shapes=[pltpu.VMEM((Bb * Ss, D), jnp.float32)]),
        compiler_params=pltpu.CompilerParams(
            dimension_semantics=("arbitrary",)),
    )(*const_inputs, *layer_inputs, *head_inputs)

    return out_pad[:, :NUM_CLASSES]                                          # (B, 23)


# ------------------------------- parameters ----------------------------------
def init_params(key):
    ks = iter(jax.random.split(key, 32))
    nrm = lambda shape, s=0.02: s * jax.random.normal(next(ks), shape, jnp.float32)
    L = NUM_LAYERS
    return {
        "backbone_w": nrm((C, D)),
        "backbone_b": jnp.zeros((1, D), jnp.float32),
        "cls_token": jax.random.normal(next(ks), (1, 1, D), jnp.float32),
        "pos_embedding": jax.random.normal(next(ks), (1, MAX_IMAGES + 1, D), jnp.float32),
        "enc": {
            "wqkv": nrm((L, D, 3 * D)),                    # fused q|k|v projection
            "bqkv": jnp.zeros((L, 1, 3 * D), jnp.float32),
            "wo": nrm((L, D, D)),
            "bo": jnp.zeros((L, 1, D), jnp.float32),
            "w1": nrm((L, D, FF)),
            "b1": jnp.zeros((L, 1, FF), jnp.float32),
            "w2": nrm((L, FF, D)),
            "b2": jnp.zeros((L, 1, D), jnp.float32),
            "g1": jnp.ones((L, 1, D), jnp.float32),
            "be1": jnp.zeros((L, 1, D), jnp.float32),
            "g2": jnp.ones((L, 1, D), jnp.float32),
            "be2": jnp.zeros((L, 1, D), jnp.float32),
        },
        "cls_head": {
            "g": jnp.ones((1, D), jnp.float32),
            "be": jnp.zeros((1, D), jnp.float32),
            "w1": nrm((D, D)),
            "b1": jnp.zeros((1, D), jnp.float32),
            "w2": nrm((D, NUM_CLASSES)),
            "b2": jnp.zeros((1, NUM_CLASSES), jnp.float32),
        },
    }


if __name__ == "__main__":
    key = jax.random.PRNGKey(0)
    k_params, k_data = jax.random.split(key)
    params = init_params(k_params)
    consts = prepare_constants(params)          # built once, outside per-call path
    album_imgs = jax.random.normal(k_data, (B, N, C, H, W), jnp.float32)

    fwd = jax.jit(album_event_classifier_forward)
    out = fwd(album_imgs, consts)
    out = jax.block_until_ready(out)
    assert out.shape == (B, NUM_CLASSES) and out.dtype == jnp.float32
    assert bool(jnp.all(jnp.isfinite(out)))
    print("KERNEL_OK")
</pallas_src>

<mosaic_0001>
module attributes {stable_mosaic.version = 11 : i64} {
  func.func @fused_forward_kernel(%arg0: i32, %arg1: memref<14x4xf32, #tpu.memory_space<vmem>>, %arg2: memref<4x64xf32, #tpu.memory_space<vmem>>, %arg3: memref<1x64xf32, #tpu.memory_space<vmem>>, %arg4: memref<16x64xf32, #tpu.memory_space<vmem>>, %arg5: memref<16x14xf32, #tpu.memory_space<vmem>>, %arg6: memref<2x16xf32, #tpu.memory_space<vmem>>, %arg7: memref<8x1x64xf32, #tpu.memory_space<vmem>>, %arg8: memref<1x64x192xbf16, #tpu.memory_space<vmem>>, %arg9: memref<1x1x192xf32, #tpu.memory_space<vmem>>, %arg10: memref<1x64x64xbf16, #tpu.memory_space<vmem>>, %arg11: memref<1x1x64xf32, #tpu.memory_space<vmem>>, %arg12: memref<1x64x2048xbf16, #tpu.memory_space<vmem>>, %arg13: memref<1x1x2048xf32, #tpu.memory_space<vmem>>, %arg14: memref<1x2048x64xbf16, #tpu.memory_space<vmem>>, %arg15: memref<1x1x64xf32, #tpu.memory_space<vmem>>, %arg16: memref<1x1x64xf32, #tpu.memory_space<vmem>>, %arg17: memref<1x1x64xf32, #tpu.memory_space<vmem>>, %arg18: memref<1x1x64xf32, #tpu.memory_space<vmem>>, %arg19: memref<1x1x64xf32, #tpu.memory_space<vmem>>, %arg20: memref<1x64xf32, #tpu.memory_space<vmem>>, %arg21: memref<1x64xf32, #tpu.memory_space<vmem>>, %arg22: memref<64x64xf32, #tpu.memory_space<vmem>>, %arg23: memref<1x64xf32, #tpu.memory_space<vmem>>, %arg24: memref<64x128xf32, #tpu.memory_space<vmem>>, %arg25: memref<1x128xf32, #tpu.memory_space<vmem>>, %arg26: memref<2x128xf32, #tpu.memory_space<vmem>>, %arg27: memref<16x64xf32, #tpu.memory_space<vmem>>) attributes {dimension_semantics = [#tpu.dimension_semantics<arbitrary>], iteration_bounds = array<i64: 2>, scalar_prefetch = 0 : i64, scratch_operands = 1 : i64, tpu.core_type = #tpu.core_type<tc>, window_params = [{pipeline_mode = #tpu.pipeline_mode<synchronous>, transform_indices = @transform_0, window_bounds = array<i64: 14, 4>}, {pipeline_mode = #tpu.pipeline_mode<synchronous>, transform_indices = @transform_1, window_bounds = array<i64: 4, 64>}, {pipeline_mode = #tpu.pipeline_mode<synchronous>, transform_indices = @transform_2, window_bounds = array<i64: 1, 64>}, {pipeline_mode = #tpu.pipeline_mode<synchronous>, transform_indices = @transform_3, window_bounds = array<i64: 16, 64>}, {pipeline_mode = #tpu.pipeline_mode<synchronous>, transform_indices = @transform_4, window_bounds = array<i64: 16, 14>}, {pipeline_mode = #tpu.pipeline_mode<synchronous>, transform_indices = @transform_5, window_bounds = array<i64: 2, 16>}, {pipeline_mode = #tpu.pipeline_mode<synchronous>, transform_indices = @transform_6, window_bounds = array<i64: 8, 1, 64>}, {transform_indices = @transform_7, window_bounds = array<i64: 1, 64, 192>}, {transform_indices = @transform_8, window_bounds = array<i64: 1, 1, 192>}, {transform_indices = @transform_9, window_bounds = array<i64: 1, 64, 64>}, {transform_indices = @transform_10, window_bounds = array<i64: 1, 1, 64>}, {transform_indices = @transform_11, window_bounds = array<i64: 1, 64, 2048>}, {transform_indices = @transform_12, window_bounds = array<i64: 1, 1, 2048>}, {transform_indices = @transform_13, window_bounds = array<i64: 1, 2048, 64>}, {transform_indices = @transform_14, window_bounds = array<i64: 1, 1, 64>}, {transform_indices = @transform_15, window_bounds = array<i64: 1, 1, 64>}, {transform_indices = @transform_16, window_bounds = array<i64: 1, 1, 64>}, {transform_indices = @transform_17, window_bounds = array<i64: 1, 1, 64>}, {transform_indices = @transform_18, window_bounds = array<i64: 1, 1, 64>}, {pipeline_mode = #tpu.pipeline_mode<synchronous>, transform_indices = @transform_19, window_bounds = array<i64: 1, 64>}, {pipeline_mode = #tpu.pipeline_mode<synchronous>, transform_indices = @transform_20, window_bounds = array<i64: 1, 64>}, {pipeline_mode = #tpu.pipeline_mode<synchronous>, transform_indices = @transform_21, window_bounds = array<i64: 64, 64>}, {pipeline_mode = #tpu.pipeline_mode<synchronous>, transform_indices = @transform_22, window_bounds = array<i64: 1, 64>}, {pipeline_mode = #tpu.pipeline_mode<synchronous>, transform_indices = @transform_23, window_bounds = array<i64: 64, 128>}, {pipeline_mode = #tpu.pipeline_mode<synchronous>, transform_indices = @transform_24, window_bounds = array<i64: 1, 128>}, {pipeline_mode = #tpu.pipeline_mode<synchronous>, transform_indices = @transform_25, window_bounds = array<i64: 2, 128>}]} {
    %c0_i32 = arith.constant 0 : i32
    %0 = arith.cmpi eq, %arg0, %c0_i32 : i32
    %1 = arith.extui %0 : i1 to i32
    %c0_i32_0 = arith.constant 0 : i32
    %2 = arith.cmpi ne, %1, %c0_i32_0 : i32
    scf.if %2 {
      %c0_70 = arith.constant 0 : index
      %c0_71 = arith.constant 0 : index
      %160 = vector.load %arg1[%c0_70, %c0_71] : memref<14x4xf32, #tpu.memory_space<vmem>>, vector<14x4xf32>
      %c0_72 = arith.constant 0 : index
      %c0_73 = arith.constant 0 : index
      %161 = vector.load %arg2[%c0_72, %c0_73] : memref<4x64xf32, #tpu.memory_space<vmem>>, vector<4x64xf32>
      %cst_74 = arith.constant dense<0.000000e+00> : vector<14x64xf32>
      %162 = tpu.matmul %160, %161, %cst_74 {dimension_numbers = #tpu.dot_dimension_numbers<[1], [0], [0], [1], [0, 0, 1, 1], [], []>} : vector<14x4xf32>, vector<4x64xf32>, vector<14x64xf32> -> vector<14x64xf32>
      %c0_75 = arith.constant 0 : index
      %c0_76 = arith.constant 0 : index
      %163 = vector.load %arg3[%c0_75, %c0_76] : memref<1x64xf32, #tpu.memory_space<vmem>>, vector<1x64xf32>
      %164 = vector.broadcast %163 : vector<1x64xf32> to vector<14x64xf32>
      %165 = arith.addf %162, %164 : vector<14x64xf32>
      %c0_77 = arith.constant 0 : index
      %c0_78 = arith.constant 0 : index
      %166 = vector.load %arg4[%c0_77, %c0_78] : memref<16x64xf32, #tpu.memory_space<vmem>>, vector<16x64xf32>
      %c0_79 = arith.constant 0 : index
      %c0_80 = arith.constant 0 : index
      %167 = vector.load %arg5[%c0_79, %c0_80] : memref<16x14xf32, #tpu.memory_space<vmem>>, vector<16x14xf32>
      %cst_81 = arith.constant dense<0.000000e+00> : vector<16x64xf32>
      %168 = tpu.matmul %167, %165, %cst_81 {dimension_numbers = #tpu.dot_dimension_numbers<[1], [0], [0], [1], [0, 0, 1, 1], [], []>} : vector<16x14xf32>, vector<14x64xf32>, vector<16x64xf32> -> vector<16x64xf32>
      %169 = arith.addf %166, %168 : vector<16x64xf32>
      %c0_82 = arith.constant 0 : index
      %c0_83 = arith.constant 0 : index
      %170 = vector.load %arg27[%c0_82, %c0_83] : memref<16x64xf32, #tpu.memory_space<vmem>>, vector<16x64xf32>
      tpu.vector_store %arg27[%c0_82, %c0_83], %169 {strides = array<i32>} : memref<16x64xf32, #tpu.memory_space<vmem>>, vector<16x64xf32>,
    } else {
    }
    %c0 = arith.constant 0 : index
    %c0_1 = arith.constant 0 : index
    %3 = vector.load %arg27[%c0, %c0_1] : memref<16x64xf32, #tpu.memory_space<vmem>>, vector<16x64xf32>
    %c0_2 = arith.constant 0 : index
    %c0_3 = arith.constant 0 : index
    %c0_4 = arith.constant 0 : index
    %4 = vector.load %arg7[%c0_2, %c0_3, %c0_4] : memref<8x1x64xf32, #tpu.memory_space<vmem>>, vector<8x1x64xf32>
    %5 = arith.truncf %3 : vector<16x64xf32> to vector<16x64xbf16>
    %c0_5 = arith.constant 0 : index
    %c0_6 = arith.constant 0 : index
    %c0_7 = arith.constant 0 : index
    %6 = vector.load %arg8[%c0_5, %c0_6, %c0_7] : memref<1x64x192xbf16, #tpu.memory_space<vmem>>, vector<1x64x192xbf16>
    %7 = vector.shape_cast %6 : vector<1x64x192xbf16> to vector<64x192xbf16>
    %cst = arith.constant dense<0.000000e+00> : vector<16x192xf32>
    %8 = tpu.matmul %5, %7, %cst {dimension_numbers = #tpu.dot_dimension_numbers<[1], [0], [0], [1], [0, 0, 1, 1], [], []>} : vector<16x64xbf16>, vector<64x192xbf16>, vector<16x192xf32> -> vector<16x192xf32>
    %c0_8 = arith.constant 0 : index
    %c0_9 = arith.constant 0 : index
    %c0_10 = arith.constant 0 : index
    %9 = vector.load %arg9[%c0_8, %c0_9, %c0_10] : memref<1x1x192xf32, #tpu.memory_space<vmem>>, vector<1x1x192xf32>
    %10 = vector.shape_cast %9 : vector<1x1x192xf32> to vector<1x192xf32>
    %11 = vector.broadcast %10 : vector<1x192xf32> to vector<16x192xf32>
    %12 = arith.addf %8, %11 : vector<16x192xf32>
    %13 = vector.extract_strided_slice %12 {offsets = [0, 0], sizes = [16, 64], strides = [1, 1]} : vector<16x192xf32> to vector<16x64xf32>
    %14 = vector.shape_cast %13 : vector<16x64xf32> to vector<2x8x64xf32>
    %15 = vector.extract_strided_slice %12 {offsets = [0, 64], sizes = [16, 64], strides = [1, 1]} : vector<16x192xf32> to vector<16x64xf32>
    %16 = vector.shape_cast %15 : vector<16x64xf32> to vector<2x8x64xf32>
    %17 = vector.extract_strided_slice %12 {offsets = [0, 128], sizes = [16, 64], strides = [1, 1]} : vector<16x192xf32> to vector<16x64xf32>
    %18 = vector.shape_cast %17 : vector<16x64xf32> to vector<2x8x64xf32>
    %19 = vector.extract_strided_slice %14 {offsets = [0, 0, 0], sizes = [1, 8, 64], strides = [1, 1, 1]} : vector<2x8x64xf32> to vector<1x8x64xf32>
    %20 = vector.shape_cast %19 : vector<1x8x64xf32> to vector<8x64xf32>
    %21 = vector.shape_cast %20 : vector<8x64xf32> to vector<1x8x64xf32>
    %22 = vector.broadcast %21 : vector<1x8x64xf32> to vector<8x8x64xf32>
    %23 = vector.broadcast %4 : vector<8x1x64xf32> to vector<8x8x64xf32>
    %24 = arith.mulf %22, %23 : vector<8x8x64xf32>
    %25 = vector.shape_cast %24 : vector<8x8x64xf32> to vector<64x64xf32>
    %26 = vector.extract_strided_slice %16 {offsets = [0, 0, 0], sizes = [1, 8, 64], strides = [1, 1, 1]} : vector<2x8x64xf32> to vector<1x8x64xf32>
    %27 = vector.shape_cast %26 : vector<1x8x64xf32> to vector<8x64xf32>
    "tpu.trace_start"() <{level = 10 : i32, message = "nd,sd->ns"}> : () -> ()
    %cst_11 = arith.constant dense<0.000000e+00> : vector<64x8xf32>
    %28 = tpu.matmul %25, %27, %cst_11 {dimension_numbers = #tpu.dot_dimension_numbers<[1], [1], [0], [0], [0, 0, 1, 0], [], []>} : vector<64x64xf32>, vector<8x64xf32>, vector<64x8xf32> -> vector<64x8xf32>
    "tpu.trace_stop"() : () -> ()
    %cst_12 = arith.constant 0.353553385 : f32
    %29 = vector.broadcast %cst_12 : f32 to vector<64x8xf32>
    %30 = arith.mulf %28, %29 : vector<64x8xf32>
    %cst_13 = arith.constant dense<0xFF800000> : vector<64xf32>
    %31 = vector.multi_reduction <maximumf>, %30, %cst_13 [1] : vector<64x8xf32> to vector<64xf32>
    %32 = vector.shape_cast %31 : vector<64xf32> to vector<64x1xf32>
    %33 = vector.broadcast %32 : vector<64x1xf32> to vector<64x8xf32>
    %34 = arith.subf %30, %33 : vector<64x8xf32>
    %35 = math.exp %34 : vector<64x8xf32>
    %cst_14 = arith.constant dense<0.000000e+00> : vector<64xf32>
    %36 = vector.multi_reduction <add>, %35, %cst_14 [1] : vector<64x8xf32> to vector<64xf32>
    %37 = vector.shape_cast %36 : vector<64xf32> to vector<64x1xf32>
    %38 = vector.broadcast %37 : vector<64x1xf32> to vector<64x8xf32>
    %39 = arith.divf %35, %38 : vector<64x8xf32>
    %40 = vector.extract_strided_slice %18 {offsets = [0, 0, 0], sizes = [1, 8, 64], strides = [1, 1, 1]} : vector<2x8x64xf32> to vector<1x8x64xf32>
    %41 = vector.shape_cast %40 : vector<1x8x64xf32> to vector<8x64xf32>
    %cst_15 = arith.constant dense<0.000000e+00> : vector<64x64xf32>
    %42 = tpu.matmul %39, %41, %cst_15 {dimension_numbers = #tpu.dot_dimension_numbers<[1], [0], [0], [1], [0, 0, 1, 1], [], []>} : vector<64x8xf32>, vector<8x64xf32>, vector<64x64xf32> -> vector<64x64xf32>
    %43 = vector.shape_cast %42 : vector<64x64xf32> to vector<8x8x64xf32>
    %44 = vector.broadcast %4 : vector<8x1x64xf32> to vector<8x8x64xf32>
    %45 = arith.mulf %43, %44 : vector<8x8x64xf32>
    %cst_16 = arith.constant dense<0.000000e+00> : vector<8x64xf32>
    %46 = vector.multi_reduction <add>, %45, %cst_16 [0] : vector<8x8x64xf32> to vector<8x64xf32>
    %47 = vector.extract_strided_slice %14 {offsets = [1, 0, 0], sizes = [1, 8, 64], strides = [1, 1, 1]} : vector<2x8x64xf32> to vector<1x8x64xf32>
    %48 = vector.shape_cast %47 : vector<1x8x64xf32> to vector<8x64xf32>
    %49 = vector.shape_cast %48 : vector<8x64xf32> to vector<1x8x64xf32>
    %50 = vector.broadcast %49 : vector<1x8x64xf32> to vector<8x8x64xf32>
    %51 = vector.broadcast %4 : vector<8x1x64xf32> to vector<8x8x64xf32>
    %52 = arith.mulf %50, %51 : vector<8x8x64xf32>
    %53 = vector.shape_cast %52 : vector<8x8x64xf32> to vector<64x64xf32>
    %54 = vector.extract_strided_slice %16 {offsets = [1, 0, 0], sizes = [1, 8, 64], strides = [1, 1, 1]} : vector<2x8x64xf32> to vector<1x8x64xf32>
    %55 = vector.shape_cast %54 : vector<1x8x64xf32> to vector<8x64xf32>
    "tpu.trace_start"() <{level = 10 : i32, message = "nd,sd->ns"}> : () -> ()
    %cst_17 = arith.constant dense<0.000000e+00> : vector<64x8xf32>
    %56 = tpu.matmul %53, %55, %cst_17 {dimension_numbers = #tpu.dot_dimension_numbers<[1], [1], [0], [0], [0, 0, 1, 0], [], []>} : vector<64x64xf32>, vector<8x64xf32>, vector<64x8xf32> -> vector<64x8xf32>
    "tpu.trace_stop"() : () -> ()
    %cst_18 = arith.constant 0.353553385 : f32
    %57 = vector.broadcast %cst_18 : f32 to vector<64x8xf32>
    %58 = arith.mulf %56, %57 : vector<64x8xf32>
    %cst_19 = arith.constant dense<0xFF800000> : vector<64xf32>
    %59 = vector.multi_reduction <maximumf>, %58, %cst_19 [1] : vector<64x8xf32> to vector<64xf32>
    %60 = vector.shape_cast %59 : vector<64xf32> to vector<64x1xf32>
    %61 = vector.broadcast %60 : vector<64x1xf32> to vector<64x8xf32>
    %62 = arith.subf %58, %61 : vector<64x8xf32>
    %63 = math.exp %62 : vector<64x8xf32>
    %cst_20 = arith.constant dense<0.000000e+00> : vector<64xf32>
    %64 = vector.multi_reduction <add>, %63, %cst_20 [1] : vector<64x8xf32> to vector<64xf32>
    %65 = vector.shape_cast %64 : vector<64xf32> to vector<64x1xf32>
    %66 = vector.broadcast %65 : vector<64x1xf32> to vector<64x8xf32>
    %67 = arith.divf %63, %66 : vector<64x8xf32>
    %68 = vector.extract_strided_slice %18 {offsets = [1, 0, 0], sizes = [1, 8, 64], strides = [1, 1, 1]} : vector<2x8x64xf32> to vector<1x8x64xf32>
    %69 = vector.shape_cast %68 : vector<1x8x64xf32> to vector<8x64xf32>
    %cst_21 = arith.constant dense<0.000000e+00> : vector<64x64xf32>
    %70 = tpu.matmul %67, %69, %cst_21 {dimension_numbers = #tpu.dot_dimension_numbers<[1], [0], [0], [1], [0, 0, 1, 1], [], []>} : vector<64x8xf32>, vector<8x64xf32>, vector<64x64xf32> -> vector<64x64xf32>
    %71 = vector.shape_cast %70 : vector<64x64xf32> to vector<8x8x64xf32>
    %72 = vector.broadcast %4 : vector<8x1x64xf32> to vector<8x8x64xf32>
    %73 = arith.mulf %71, %72 : vector<8x8x64xf32>
    %cst_22 = arith.constant dense<0.000000e+00> : vector<8x64xf32>
    %74 = vector.multi_reduction <add>, %73, %cst_22 [0] : vector<8x8x64xf32> to vector<8x64xf32>
    %75 = tpu.concatenate %46, %74 in 0 : vector<8x64xf32>, vector<8x64xf32> -> vector<16x64xf32>
    %76 = arith.truncf %75 : vector<16x64xf32> to vector<16x64xbf16>
    %c0_23 = arith.constant 0 : index
    %c0_24 = arith.constant 0 : index
    %c0_25 = arith.constant 0 : index
    %77 = vector.load %arg10[%c0_23, %c0_24, %c0_25] : memref<1x64x64xbf16, #tpu.memory_space<vmem>>, vector<1x64x64xbf16>
    %78 = vector.shape_cast %77 : vector<1x64x64xbf16> to vector<64x64xbf16>
    %cst_26 = arith.constant dense<0.000000e+00> : vector<16x64xf32>
    %79 = tpu.matmul %76, %78, %cst_26 {dimension_numbers = #tpu.dot_dimension_numbers<[1], [0], [0], [1], [0, 0, 1, 1], [], []>} : vector<16x64xbf16>, vector<64x64xbf16>, vector<16x64xf32> -> vector<16x64xf32>
    %c0_27 = arith.constant 0 : index
    %c0_28 = arith.constant 0 : index
    %c0_29 = arith.constant 0 : index
    %80 = vector.load %arg11[%c0_27, %c0_28, %c0_29] : memref<1x1x64xf32, #tpu.memory_space<vmem>>, vector<1x1x64xf32>
    %81 = vector.shape_cast %80 : vector<1x1x64xf32> to vector<1x64xf32>
    %82 = vector.broadcast %81 : vector<1x64xf32> to vector<16x64xf32>
    %83 = arith.addf %79, %82 : vector<16x64xf32>
    %84 = arith.addf %3, %83 : vector<16x64xf32>
    %c0_30 = arith.constant 0 : index
    %c0_31 = arith.constant 0 : index
    %c0_32 = arith.constant 0 : index
    %85 = vector.load %arg16[%c0_30, %c0_31, %c0_32] : memref<1x1x64xf32, #tpu.memory_space<vmem>>, vector<1x1x64xf32>
    %86 = vector.shape_cast %85 : vector<1x1x64xf32> to vector<1x64xf32>
    %c0_33 = arith.constant 0 : index
    %c0_34 = arith.constant 0 : index
    %c0_35 = arith.constant 0 : index
    %87 = vector.load %arg17[%c0_33, %c0_34, %c0_35] : memref<1x1x64xf32, #tpu.memory_space<vmem>>, vector<1x1x64xf32>
    %88 = vector.shape_cast %87 : vector<1x1x64xf32> to vector<1x64xf32>
    %cst_36 = arith.constant dense<0.000000e+00> : vector<16xf32>
    %89 = vector.multi_reduction <add>, %84, %cst_36 [1] : vector<16x64xf32> to vector<16xf32>
    %90 = vector.shape_cast %89 : vector<16xf32> to vector<16x1xf32>
    %cst_37 = arith.constant 6.400000e+01 : f32
    %91 = vector.broadcast %cst_37 : f32 to vector<16x1xf32>
    %92 = arith.divf %90, %91 : vector<16x1xf32>
    %93 = vector.broadcast %92 : vector<16x1xf32> to vector<16x64xf32>
    %94 = arith.subf %84, %93 : vector<16x64xf32>
    %95 = arith.mulf %94, %94 : vector<16x64xf32>
    %cst_38 = arith.constant dense<0.000000e+00> : vector<16xf32>
    %96 = vector.multi_reduction <add>, %95, %cst_38 [1] : vector<16x64xf32> to vector<16xf32>
    %97 = vector.shape_cast %96 : vector<16xf32> to vector<16x1xf32>
    %cst_39 = arith.constant 6.400000e+01 : f32
    %98 = vector.broadcast %cst_39 : f32 to vector<16x1xf32>
    %99 = arith.divf %97, %98 : vector<16x1xf32>
    %100 = vector.broadcast %92 : vector<16x1xf32> to vector<16x64xf32>
    %101 = arith.subf %84, %100 : vector<16x64xf32>
    %cst_40 = arith.constant 9.99999974E-6 : f32
    %102 = vector.broadcast %cst_40 : f32 to vector<16x1xf32>
    %103 = arith.addf %99, %102 : vector<16x1xf32>
    %104 = math.rsqrt %103 : vector<16x1xf32>
    %105 = vector.broadcast %104 : vector<16x1xf32> to vector<16x64xf32>
    %106 = arith.mulf %101, %105 : vector<16x64xf32>
    %107 = vector.broadcast %86 : vector<1x64xf32> to vector<16x64xf32>
    %108 = arith.mulf %106, %107 : vector<16x64xf32>
    %109 = vector.broadcast %88 : vector<1x64xf32> to vector<16x64xf32>
    %110 = arith.addf %108, %109 : vector<16x64xf32>
    %111 = arith.truncf %110 : vector<16x64xf32> to vector<16x64xbf16>
    %c0_41 = arith.constant 0 : index
    %c0_42 = arith.constant 0 : index
    %c0_43 = arith.constant 0 : index
    %112 = vector.load %arg12[%c0_41, %c0_42, %c0_43] : memref<1x64x2048xbf16, #tpu.memory_space<vmem>>, vector<1x64x2048xbf16>
    %113 = vector.shape_cast %112 : vector<1x64x2048xbf16> to vector<64x2048xbf16>
    %cst_44 = arith.constant dense<0.000000e+00> : vector<16x2048xf32>
    %114 = tpu.matmul %111, %113, %cst_44 {dimension_numbers = #tpu.dot_dimension_numbers<[1], [0], [0], [1], [0, 0, 1, 1], [], []>} : vector<16x64xbf16>, vector<64x2048xbf16>, vector<16x2048xf32> -> vector<16x2048xf32>
    %c0_45 = arith.constant 0 : index
    %c0_46 = arith.constant 0 : index
    %c0_47 = arith.constant 0 : index
    %115 = vector.load %arg13[%c0_45, %c0_46, %c0_47] : memref<1x1x2048xf32, #tpu.memory_space<vmem>>, vector<1x1x2048xf32>
    %116 = vector.shape_cast %115 : vector<1x1x2048xf32> to vector<1x2048xf32>
    %117 = vector.broadcast %116 : vector<1x2048xf32> to vector<16x2048xf32>
    %118 = arith.addf %114, %117 : vector<16x2048xf32>
    %cst_48 = arith.constant 0.000000e+00 : f32
    %119 = vector.broadcast %cst_48 : f32 to vector<16x2048xf32>
    %120 = arith.maximumf %118, %119 : vector<16x2048xf32>
    %121 = arith.truncf %120 : vector<16x2048xf32> to vector<16x2048xbf16>
    %c0_49 = arith.constant 0 : index
    %c0_50 = arith.constant 0 : index
    %c0_51 = arith.constant 0 : index
    %122 = vector.load %arg14[%c0_49, %c0_50, %c0_51] : memref<1x2048x64xbf16, #tpu.memory_space<vmem>>, vector<1x2048x64xbf16>
    %123 = vector.shape_cast %122 : vector<1x2048x64xbf16> to vector<2048x64xbf16>
    %cst_52 = arith.constant dense<0.000000e+00> : vector<16x64xf32>
    %124 = tpu.matmul %121, %123, %cst_52 {dimension_numbers = #tpu.dot_dimension_numbers<[1], [0], [0], [1], [0, 0, 1, 1], [], []>} : vector<16x2048xbf16>, vector<2048x64xbf16>, vector<16x64xf32> -> vector<16x64xf32>
    %c0_53 = arith.constant 0 : index
    %c0_54 = arith.constant 0 : index
    %c0_55 = arith.constant 0 : index
    %125 = vector.load %arg15[%c0_53, %c0_54, %c0_55] : memref<1x1x64xf32, #tpu.memory_space<vmem>>, vector<1x1x64xf32>
    %126 = vector.shape_cast %125 : vector<1x1x64xf32> to vector<1x64xf32>
    %127 = vector.broadcast %126 : vector<1x64xf32> to vector<16x64xf32>
    %128 = arith.addf %124, %127 : vector<16x64xf32>
    %129 = arith.addf %110, %128 : vector<16x64xf32>
    %c0_56 = arith.constant 0 : index
    %c0_57 = arith.constant 0 : index
    %c0_58 = arith.constant 0 : index
    %130 = vector.load %arg18[%c0_56, %c0_57, %c0_58] : memref<1x1x64xf32, #tpu.memory_space<vmem>>, vector<1x1x64xf32>
    %131 = vector.shape_cast %130 : vector<1x1x64xf32> to vector<1x64xf32>
    %c0_59 = arith.constant 0 : index
    %c0_60 = arith.constant 0 : index
    %c0_61 = arith.constant 0 : index
    %132 = vector.load %arg19[%c0_59, %c0_60, %c0_61] : memref<1x1x64xf32, #tpu.memory_space<vmem>>, vector<1x1x64xf32>
    %133 = vector.shape_cast %132 : vector<1x1x64xf32> to vector<1x64xf32>
    %cst_62 = arith.constant dense<0.000000e+00> : vector<16xf32>
    %134 = vector.multi_reduction <add>, %129, %cst_62 [1] : vector<16x64xf32> to vector<16xf32>
    %135 = vector.shape_cast %134 : vector<16xf32> to vector<16x1xf32>
    %cst_63 = arith.constant 6.400000e+01 : f32
    %136 = vector.broadcast %cst_63 : f32 to vector<16x1xf32>
    %137 = arith.divf %135, %136 : vector<16x1xf32>
    %138 = vector.broadcast %137 : vector<16x1xf32> to vector<16x64xf32>
    %139 = arith.subf %129, %138 : vector<16x64xf32>
    %140 = arith.mulf %139, %139 : vector<16x64xf32>
    %cst_64 = arith.constant dense<0.000000e+00> : vector<16xf32>
    %141 = vector.multi_reduction <add>, %140, %cst_64 [1] : vector<16x64xf32> to vector<16xf32>
    %142 = vector.shape_cast %141 : vector<16xf32> to vector<16x1xf32>
    %cst_65 = arith.constant 6.400000e+01 : f32
    %143 = vector.broadcast %cst_65 : f32 to vector<16x1xf32>
    %144 = arith.divf %142, %143 : vector<16x1xf32>
    %145 = vector.broadcast %137 : vector<16x1xf32> to vector<16x64xf32>
    %146 = arith.subf %129, %145 : vector<16x64xf32>
    %cst_66 = arith.constant 9.99999974E-6 : f32
    %147 = vector.broadcast %cst_66 : f32 to vector<16x1xf32>
    %148 = arith.addf %144, %147 : vector<16x1xf32>
    %149 = math.rsqrt %148 : vector<16x1xf32>
    %150 = vector.broadcast %149 : vector<16x1xf32> to vector<16x64xf32>
    %151 = arith.mulf %146, %150 : vector<16x64xf32>
    %152 = vector.broadcast %131 : vector<1x64xf32> to vector<16x64xf32>
    %153 = arith.mulf %151, %152 : vector<16x64xf32>
    %154 = vector.broadcast %133 : vector<1x64xf32> to vector<16x64xf32>
    %155 = arith.addf %153, %154 : vector<16x64xf32>
    %c0_67 = arith.constant 0 : index
    %c0_68 = arith.constant 0 : index
    %156 = vector.load %arg27[%c0_67, %c0_68] : memref<16x64xf32, #tpu.memory_space<vmem>>, vector<16x64xf32>
    tpu.vector_store %arg27[%c0_67, %c0_68], %155 {strides = array<i32>} : memref<16x64xf32, #tpu.memory_space<vmem>>, vector<16x64xf32>,
    %c1_i32 = arith.constant 1 : i32
    %157 = arith.cmpi eq, %arg0, %c1_i32 : i32
    %158 = arith.extui %157 : i1 to i32
    %c0_i32_69 = arith.constant 0 : i32
    %159 = arith.cmpi ne, %158, %c0_i32_69 : i32
    scf.if %159 {
      %c0_70 = arith.constant 0 : index
      %c0_71 = arith.constant 0 : index
      %160 = vector.load %arg27[%c0_70, %c0_71] : memref<16x64xf32, #tpu.memory_space<vmem>>, vector<16x64xf32>
      %c0_72 = arith.constant 0 : index
      %c0_73 = arith.constant 0 : index
      %161 = vector.load %arg6[%c0_72, %c0_73] : memref<2x16xf32, #tpu.memory_space<vmem>>, vector<2x16xf32>
      %cst_74 = arith.constant dense<0.000000e+00> : vector<2x64xf32>
      %162 = tpu.matmul %161, %160, %cst_74 {dimension_numbers = #tpu.dot_dimension_numbers<[1], [0], [0], [1], [0, 0, 1, 1], [], []>} : vector<2x16xf32>, vector<16x64xf32>, vector<2x64xf32> -> vector<2x64xf32>
      %c0_75 = arith.constant 0 : index
      %c0_76 = arith.constant 0 : index
      %163 = vector.load %arg20[%c0_75, %c0_76] : memref<1x64xf32, #tpu.memory_space<vmem>>, vector<1x64xf32>
      %c0_77 = arith.constant 0 : index
      %c0_78 = arith.constant 0 : index
      %164 = vector.load %arg21[%c0_77, %c0_78] : memref<1x64xf32, #tpu.memory_space<vmem>>, vector<1x64xf32>
      %cst_79 = arith.constant dense<0.000000e+00> : vector<2xf32>
      %165 = vector.multi_reduction <add>, %162, %cst_79 [1] : vector<2x64xf32> to vector<2xf32>
      %166 = vector.shape_cast %165 : vector<2xf32> to vector<2x1xf32>
      %cst_80 = arith.constant 6.400000e+01 : f32
      %167 = vector.broadcast %cst_80 : f32 to vector<2x1xf32>
      %168 = arith.divf %166, %167 : vector<2x1xf32>
      %169 = vector.broadcast %168 : vector<2x1xf32> to vector<2x64xf32>
      %170 = arith.subf %162, %169 : vector<2x64xf32>
      %171 = arith.mulf %170, %170 : vector<2x64xf32>
      %cst_81 = arith.constant dense<0.000000e+00> : vector<2xf32>
      %172 = vector.multi_reduction <add>, %171, %cst_81 [1] : vector<2x64xf32> to vector<2xf32>
      %173 = vector.shape_cast %172 : vector<2xf32> to vector<2x1xf32>
      %cst_82 = arith.constant 6.400000e+01 : f32
      %174 = vector.broadcast %cst_82 : f32 to vector<2x1xf32>
      %175 = arith.divf %173, %174 : vector<2x1xf32>
      %176 = vector.broadcast %168 : vector<2x1xf32> to vector<2x64xf32>
      %177 = arith.subf %162, %176 : vector<2x64xf32>
      %cst_83 = arith.constant 9.99999974E-6 : f32
      %178 = vector.broadcast %cst_83 : f32 to vector<2x1xf32>
      %179 = arith.addf %175, %178 : vector<2x1xf32>
      %180 = math.rsqrt %179 : vector<2x1xf32>
      %181 = vector.broadcast %180 : vector<2x1xf32> to vector<2x64xf32>
      %182 = arith.mulf %177, %181 : vector<2x64xf32>
      %183 = vector.broadcast %163 : vector<1x64xf32> to vector<2x64xf32>
      %184 = arith.mulf %182, %183 : vector<2x64xf32>
      %185 = vector.broadcast %164 : vector<1x64xf32> to vector<2x64xf32>
      %186 = arith.addf %184, %185 : vector<2x64xf32>
      %c0_84 = arith.constant 0 : index
      %c0_85 = arith.constant 0 : index
      %187 = vector.load %arg22[%c0_84, %c0_85] : memref<64x64xf32, #tpu.memory_space<vmem>>, vector<64x64xf32>
      %cst_86 = arith.constant dense<0.000000e+00> : vector<2x64xf32>
      %188 = tpu.matmul %186, %187, %cst_86 {dimension_numbers = #tpu.dot_dimension_numbers<[1], [0], [0], [1], [0, 0, 1, 1], [], []>} : vector<2x64xf32>, vector<64x64xf32>, vector<2x64xf32> -> vector<2x64xf32>
      %c0_87 = arith.constant 0 : index
      %c0_88 = arith.constant 0 : index
      %189 = vector.load %arg23[%c0_87, %c0_88] : memref<1x64xf32, #tpu.memory_space<vmem>>, vector<1x64xf32>
      %190 = vector.broadcast %189 : vector<1x64xf32> to vector<2x64xf32>
      %191 = arith.addf %188, %190 : vector<2x64xf32>
      %cst_89 = arith.constant 0.000000e+00 : f32
      %192 = vector.broadcast %cst_89 : f32 to vector<2x64xf32>
      %193 = arith.maximumf %191, %192 : vector<2x64xf32>
      %c0_90 = arith.constant 0 : index
      %c0_91 = arith.constant 0 : index
      %194 = vector.load %arg24[%c0_90, %c0_91] : memref<64x128xf32, #tpu.memory_space<vmem>>, vector<64x128xf32>
      %cst_92 = arith.constant dense<0.000000e+00> : vector<2x128xf32>
      %195 = tpu.matmul %193, %194, %cst_92 {dimension_numbers = #tpu.dot_dimension_numbers<[1], [0], [0], [1], [0, 0, 1, 1], [], []>} : vector<2x64xf32>, vector<64x128xf32>, vector<2x128xf32> -> vector<2x128xf32>
      %c0_93 = arith.constant 0 : index
      %c0_94 = arith.constant 0 : index
      %196 = vector.load %arg25[%c0_93, %c0_94] : memref<1x128xf32, #tpu.memory_space<vmem>>, vector<1x128xf32>
      %197 = vector.broadcast %196 : vector<1x128xf32> to vector<2x128xf32>
      %198 = arith.addf %195, %197 : vector<2x128xf32>
      %c0_95 = arith.constant 0 : index
      %c0_96 = arith.constant 0 : index
      %199 = vector.load %arg26[%c0_95, %c0_96] : memref<2x128xf32, #tpu.memory_space<vmem>>, vector<2x128xf32>
      tpu.vector_store %arg26[%c0_95, %c0_96], %198 {strides = array<i32>} : memref<2x128xf32, #tpu.memory_space<vmem>>, vector<2x128xf32>,
    } else {
    }
    return
  }
  func.func @transform_0(%arg0: i32) -> (i32, i32) {
    %c0_i32 = arith.constant 0 : i32
    %c0_i32_0 = arith.constant 0 : i32
    %c0_i32_1 = arith.constant 0 : i32
    return %c0_i32, %c0_i32_0 : i32, i32
  }
  func.func @transform_1(%arg0: i32) -> (i32, i32) {
    %c0_i32 = arith.constant 0 : i32
    %c0_i32_0 = arith.constant 0 : i32
    %c0_i32_1 = arith.constant 0 : i32
    return %c0_i32, %c0_i32_0 : i32, i32
  }
  func.func @transform_2(%arg0: i32) -> (i32, i32) {
    %c0_i32 = arith.constant 0 : i32
    %c0_i32_0 = arith.constant 0 : i32
    %c0_i32_1 = arith.constant 0 : i32
    return %c0_i32, %c0_i32_0 : i32, i32
  }
  func.func @transform_3(%arg0: i32) -> (i32, i32) {
    %c0_i32 = arith.constant 0 : i32
    %c0_i32_0 = arith.constant 0 : i32
    %c0_i32_1 = arith.constant 0 : i32
    return %c0_i32, %c0_i32_0 : i32, i32
  }
  func.func @transform_4(%arg0: i32) -> (i32, i32) {
    %c0_i32 = arith.constant 0 : i32
    %c0_i32_0 = arith.constant 0 : i32
    %c0_i32_1 = arith.constant 0 : i32
    return %c0_i32, %c0_i32_0 : i32, i32
  }
  func.func @transform_5(%arg0: i32) -> (i32, i32) {
    %c0_i32 = arith.constant 0 : i32
    %c0_i32_0 = arith.constant 0 : i32
    %c0_i32_1 = arith.constant 0 : i32
    return %c0_i32, %c0_i32_0 : i32, i32
  }
  func.func @transform_6(%arg0: i32) -> (i32, i32, i32) {
    %c0_i32 = arith.constant 0 : i32
    %c0_i32_0 = arith.constant 0 : i32
    %c0_i32_1 = arith.constant 0 : i32
    %c0_i32_2 = arith.constant 0 : i32
    return %c0_i32, %c0_i32_0, %c0_i32_1 : i32, i32, i32
  }
  func.func @transform_7(%arg0: i32) -> (i32, i32, i32) {
    %c0_i32 = arith.constant 0 : i32
    %c0_i32_0 = arith.constant 0 : i32
    %c0_i32_1 = arith.constant 0 : i32
    return %arg0, %c0_i32, %c0_i32_0 : i32, i32, i32
  }
  func.func @transform_8(%arg0: i32) -> (i32, i32, i32) {
    %c0_i32 = arith.constant 0 : i32
    %c0_i32_0 = arith.constant 0 : i32
    %c0_i32_1 = arith.constant 0 : i32
    return %arg0, %c0_i32, %c0_i32_0 : i32, i32, i32
  }
  func.func @transform_9(%arg0: i32) -> (i32, i32, i32) {
    %c0_i32 = arith.constant 0 : i32
    %c0_i32_0 = arith.constant 0 : i32
    %c0_i32_1 = arith.constant 0 : i32
    return %arg0, %c0_i32, %c0_i32_0 : i32, i32, i32
  }
  func.func @transform_10(%arg0: i32) -> (i32, i32, i32) {
    %c0_i32 = arith.constant 0 : i32
    %c0_i32_0 = arith.constant 0 : i32
    %c0_i32_1 = arith.constant 0 : i32
    return %arg0, %c0_i32, %c0_i32_0 : i32, i32, i32
  }
  func.func @transform_11(%arg0: i32) -> (i32, i32, i32) {
    %c0_i32 = arith.constant 0 : i32
    %c0_i32_0 = arith.constant 0 : i32
    %c0_i32_1 = arith.constant 0 : i32
    return %arg0, %c0_i32, %c0_i32_0 : i32, i32, i32
  }
  func.func @transform_12(%arg0: i32) -> (i32, i32, i32) {
    %c0_i32 = arith.constant 0 : i32
    %c0_i32_0 = arith.constant 0 : i32
    %c0_i32_1 = arith.constant 0 : i32
    return %arg0, %c0_i32, %c0_i32_0 : i32, i32, i32
  }
  func.func @transform_13(%arg0: i32) -> (i32, i32, i32) {
    %c0_i32 = arith.constant 0 : i32
    %c0_i32_0 = arith.constant 0 : i32
    %c0_i32_1 = arith.constant 0 : i32
    return %arg0, %c0_i32, %c0_i32_0 : i32, i32, i32
  }
  func.func @transform_14(%arg0: i32) -> (i32, i32, i32) {
    %c0_i32 = arith.constant 0 : i32
    %c0_i32_0 = arith.constant 0 : i32
    %c0_i32_1 = arith.constant 0 : i32
    return %arg0, %c0_i32, %c0_i32_0 : i32, i32, i32
  }
  func.func @transform_15(%arg0: i32) -> (i32, i32, i32) {
    %c0_i32 = arith.constant 0 : i32
    %c0_i32_0 = arith.constant 0 : i32
    %c0_i32_1 = arith.constant 0 : i32
    return %arg0, %c0_i32, %c0_i32_0 : i32, i32, i32
  }
  func.func @transform_16(%arg0: i32) -> (i32, i32, i32) {
    %c0_i32 = arith.constant 0 : i32
    %c0_i32_0 = arith.constant 0 : i32
    %c0_i32_1 = arith.constant 0 : i32
    return %arg0, %c0_i32, %c0_i32_0 : i32, i32, i32
  }
  func.func @transform_17(%arg0: i32) -> (i32, i32, i32) {
    %c0_i32 = arith.constant 0 : i32
    %c0_i32_0 = arith.constant 0 : i32
    %c0_i32_1 = arith.constant 0 : i32
    return %arg0, %c0_i32, %c0_i32_0 : i32, i32, i32
  }
  func.func @transform_18(%arg0: i32) -> (i32, i32, i32) {
    %c0_i32 = arith.constant 0 : i32
    %c0_i32_0 = arith.constant 0 : i32
    %c0_i32_1 = arith.constant 0 : i32
    return %arg0, %c0_i32, %c0_i32_0 : i32, i32, i32
  }
  func.func @transform_19(%arg0: i32) -> (i32, i32) {
    %c0_i32 = arith.constant 0 : i32
    %c0_i32_0 = arith.constant 0 : i32
    %c0_i32_1 = arith.constant 0 : i32
    return %c0_i32, %c0_i32_0 : i32, i32
  }
  func.func @transform_20(%arg0: i32) -> (i32, i32) {
    %c0_i32 = arith.constant 0 : i32
    %c0_i32_0 = arith.constant 0 : i32
    %c0_i32_1 = arith.constant 0 : i32
    return %c0_i32, %c0_i32_0 : i32, i32
  }
  func.func @transform_21(%arg0: i32) -> (i32, i32) {
    %c0_i32 = arith.constant 0 : i32
    %c0_i32_0 = arith.constant 0 : i32
    %c0_i32_1 = arith.constant 0 : i32
    return %c0_i32, %c0_i32_0 : i32, i32
  }
  func.func @transform_22(%arg0: i32) -> (i32, i32) {
    %c0_i32 = arith.constant 0 : i32
    %c0_i32_0 = arith.constant 0 : i32
    %c0_i32_1 = arith.constant 0 : i32
    return %c0_i32, %c0_i32_0 : i32, i32
  }
  func.func @transform_23(%arg0: i32) -> (i32, i32) {
    %c0_i32 = arith.constant 0 : i32
    %c0_i32_0 = arith.constant 0 : i32
    %c0_i32_1 = arith.constant 0 : i32
    return %c0_i32, %c0_i32_0 : i32, i32
  }
  func.func @transform_24(%arg0: i32) -> (i32, i32) {
    %c0_i32 = arith.constant 0 : i32
    %c0_i32_0 = arith.constant 0 : i32
    %c0_i32_1 = arith.constant 0 : i32
    return %c0_i32, %c0_i32_0 : i32, i32
  }
  func.func @transform_25(%arg0: i32) -> (i32, i32) {
    %c0_i32 = arith.constant 0 : i32
    %c0_i32_0 = arith.constant 0 : i32
    %c0_i32_1 = arith.constant 0 : i32
    return %c0_i32, %c0_i32_0 : i32, i32
  }
}

</mosaic_0001>

<llo_original>
// kernel: album_event_classifier_forward.1
$region0: #{album_event_classifier_forward.1}
  #allocation0 [shape = 'u32[]', space=smem, size = 0x4, offset = 0x4, fixed_abs, tag = 'smem constant byte address 0x4 - core index']
  #allocation1 [shape = 'u32[144,128]{1,0:T(1,128)}', space=vmem, size = 0x12000, scoped, tag = 'internal scratch']
  #allocation2 [shape = 'f32[16,64]{1,0:T(8,128)}', space=vmem, size = 0x2000, scoped, tag = 'scratch operand']
  %s0 = inlined_call_operand.vmem [shape: f32[14,4], index: 0, kind: input, shape index: {}]
  %s1 = inlined_call_operand.vmem [shape: f32[4,64], index: 1, kind: input, shape index: {}]
  %s2 = inlined_call_operand.vmem [shape: f32[1,64], index: 2, kind: input, shape index: {}]
  %s3 = inlined_call_operand.vmem [shape: f32[16,64], index: 3, kind: input, shape index: {}]
  %s4 = inlined_call_operand.vmem [shape: f32[16,14], index: 4, kind: input, shape index: {}]
  %s5 = inlined_call_operand.vmem [shape: f32[2,16], index: 5, kind: input, shape index: {}]
  %s6 = inlined_call_operand.vmem [shape: f32[8,1,64], index: 6, kind: input, shape index: {}]
  %s7 = inlined_call_operand.vmem [shape: bf16[2,64,192], index: 7, kind: input, shape index: {}]
  %s8 = inlined_call_operand.vmem [shape: f32[2,1,192], index: 8, kind: input, shape index: {}]
  %s9 = inlined_call_operand.vmem [shape: bf16[2,64,64], index: 9, kind: input, shape index: {}]
  %s10 = inlined_call_operand.vmem [shape: f32[2,1,64], index: 10, kind: input, shape index: {}]
  %s11 = inlined_call_operand.vmem [shape: bf16[2,64,2048], index: 11, kind: input, shape index: {}]
  %s12 = inlined_call_operand.vmem [shape: f32[2,1,2048], index: 12, kind: input, shape index: {}]
  %s13 = inlined_call_operand.vmem [shape: bf16[2,2048,64], index: 13, kind: input, shape index: {}]
  %s14 = inlined_call_operand.vmem [shape: f32[2,1,64], index: 14, kind: input, shape index: {}]
  %s15 = inlined_call_operand.vmem [shape: f32[2,1,64], index: 15, kind: input, shape index: {}]
  %s16 = inlined_call_operand.vmem [shape: f32[2,1,64], index: 16, kind: input, shape index: {}]
  %s17 = inlined_call_operand.vmem [shape: f32[2,1,64], index: 17, kind: input, shape index: {}]
  %s18 = inlined_call_operand.vmem [shape: f32[2,1,64], index: 18, kind: input, shape index: {}]
  %s19 = inlined_call_operand.vmem [shape: f32[1,64], index: 19, kind: input, shape index: {}]
  %s20 = inlined_call_operand.vmem [shape: f32[1,64], index: 20, kind: input, shape index: {}]
  %s21 = inlined_call_operand.vmem [shape: f32[64,64], index: 21, kind: input, shape index: {}]
  %s22 = inlined_call_operand.vmem [shape: f32[1,64], index: 22, kind: input, shape index: {}]
  %s23 = inlined_call_operand.vmem [shape: f32[64,128], index: 23, kind: input, shape index: {}]
  %s24 = inlined_call_operand.vmem [shape: f32[1,128], index: 24, kind: input, shape index: {}]
  %s25 = inlined_call_operand.hbm [shape: f32[2,128], index: 25, kind: output, shape index: {}]
  %s26 = sld [smem:[#allocation0]]
  $region141: #{album_event_classifier_forward.1} parent=0
    _
  %s28 = ssub.s32 1, %s26
  %s29 = scalar_select 0, %s28, %s26
  $region1: #{album_event_classifier_forward.1} parent=0
    #allocation3 [shape = 'u8[1024]{0}', space=vmem, size = 0x400, scoped, tag = 'output window, operand 0, single buffered']
    #allocation4 [shape = 's32[2]{0}', space=sflag, size = 0x8, scoped, tag = 'scoped memory for album_event_classifier_forward.1']
    %30 = vsyncpa [#allocation4], 0
    loop: start=0, step=1, limit=4
    $region2: #{album_event_classifier_forward.1} parent=1 // loop_pre_header
      _
    $region3: #{album_event_classifier_forward.1} parent=1 // loop_header
      %s32 = sphi 0, %s36
      %p33 = scmp.ge.s32.totalorder %s32, 4
      %s40 = sphi 0, %s40
      %s42 = sphi 0, %s40
      %s43 = sphi 0, %s42
      %s57 = sphi 0, %s43
      %s61 = sphi 0, %s61
      %s63 = sphi 0, %s61
      %s64 = sphi 0, %s63
      %s78 = sphi 0, %s64
      %s82 = sphi 0, %s82
      %s84 = sphi 0, %s82
      %s85 = sphi 0, %s84
      %s99 = sphi 0, %s85
      %s103 = sphi 0, %s103
      %s105 = sphi 0, %s103
      %s106 = sphi 0, %s105
      %s120 = sphi 0, %s106
      %s124 = sphi 0, %s124
      %s126 = sphi 0, %s124
      %s127 = sphi 0, %s126
      %s141 = sphi 0, %s127
      %s145 = sphi 0, %s145
      %s147 = sphi 0, %s145
      %s148 = sphi 0, %s147
      %s162 = sphi 0, %s148
      %s166 = sphi 0, %s166
      %s168 = sphi 0, %s166
      %s169 = sphi 0, %s168
      %s183 = sphi 0, %s169
      %s189 = sphi 0, %s191
      %s192 = sphi 0, %s189
      %s193 = sphi 0, %s192
      %s209 = sphi 0, %s193
      %s215 = sphi 0, %s217
      %s218 = sphi 0, %s215
      %s219 = sphi 0, %s218
      %s235 = sphi 0, %s219
      %s241 = sphi 0, %s243
      %s244 = sphi 0, %s241
      %s245 = sphi 0, %s244
      %s261 = sphi 0, %s245
      %s267 = sphi 0, %s269
      %s270 = sphi 0, %s267
      %s271 = sphi 0, %s270
      %s287 = sphi 0, %s271
      %s293 = sphi 0, %s295
      %s296 = sphi 0, %s293
      %s297 = sphi 0, %s296
      %s313 = sphi 0, %s297
      %s319 = sphi 0, %s321
      %s322 = sphi 0, %s319
      %s323 = sphi 0, %s322
      %s339 = sphi 0, %s323
      %s345 = sphi 0, %s347
      %s348 = sphi 0, %s345
      %s349 = sphi 0, %s348
      %s365 = sphi 0, %s349
      %s371 = sphi 0, %s373
      %s374 = sphi 0, %s371
      %s375 = sphi 0, %s374
      %s391 = sphi 0, %s375
      %s397 = sphi 0, %s399
      %s400 = sphi 0, %s397
      %s401 = sphi 0, %s400
      %s417 = sphi 0, %s401
      %s423 = sphi 0, %s425
      %s426 = sphi 0, %s423
      %s427 = sphi 0, %s426
      %s443 = sphi 0, %s427
      %s449 = sphi 0, %s451
      %s452 = sphi 0, %s449
      %s453 = sphi 0, %s452
      %s469 = sphi 0, %s453
      %s475 = sphi 0, %s477
      %s478 = sphi 0, %s475
      %s479 = sphi 0, %s478
      %s495 = sphi 0, %s479
      %s499 = sphi 0, %s499
      %s501 = sphi 0, %s499
      %s502 = sphi 0, %s501
      %s516 = sphi 0, %s502
      %s520 = sphi 0, %s520
      %s522 = sphi 0, %s520
      %s523 = sphi 0, %s522
      %s537 = sphi 0, %s523
      %s541 = sphi 0, %s541
      %s543 = sphi 0, %s541
      %s544 = sphi 0, %s543
      %s558 = sphi 0, %s544
      %s562 = sphi 0, %s562
      %s564 = sphi 0, %s562
      %s565 = sphi 0, %s564
      %s579 = sphi 0, %s565
      %s583 = sphi 0, %s583
      %s585 = sphi 0, %s583
      %s586 = sphi 0, %s585
      %s600 = sphi 0, %s586
      %s604 = sphi 0, %s604
      %s606 = sphi 0, %s604
      %s607 = sphi 0, %s606
      %s621 = sphi 0, %s607
      %s625 = sphi 0, %s625
      %s627 = sphi 0, %s625
      %s628 = sphi 0, %s627
      %s642 = sphi 0, %s628
    $region4: #{album_event_classifier_forward.1} parent=1 // loop_header_branch
      %35 = sbr.rel (%p33) target = $region8
    $region5: #{album_event_classifier_forward.1} parent=1 // loop_body
      %s37 = ssub.s32 %s32, 1
      %s38 = ssub.s32 %s32, 2
      %s39 = sadd.s32 %s32, 1
      %s41 = sadd.s32 %s40, 1
      %p44 = scmp.eq.s32.totalorder %s32, 1
      %p45 = scmp.ne.s32.totalorder %s40, %s42
      %p46 = scmp.eq.s32.totalorder %s32, 0
      %p47 = por %p45, %p46
      %p48 = scmp.ne.s32.totalorder %s40, %s42
      %p49 = scmp.eq.s32.totalorder %s37, 1
      %p50 = por %p48, %p49
      %p51 = scmp.ne.s32.totalorder %s42, %s43
      %p52 = scmp.eq.s32.totalorder %s37, 0
      %p53 = por %p51, %p52
      %p54 = scmp.ne.s32.totalorder %s42, %s43
      %p55 = scmp.eq.s32.totalorder %s38, 1
      %p56 = por %p54, %p55
      %p58 = scmp.ne.s32.totalorder %s43, %s57
      %p59 = scmp.eq.s32.totalorder %s38, 0
      %p60 = por %p58, %p59
      %s62 = sadd.s32 %s61, 1
      %p65 = scmp.eq.s32.totalorder %s32, 1
      %p66 = scmp.ne.s32.totalorder %s61, %s63
      %p67 = scmp.eq.s32.totalorder %s32, 0
      %p68 = por %p66, %p67
      %p69 = scmp.ne.s32.totalorder %s61, %s63
      %p70 = scmp.eq.s32.totalorder %s37, 1
      %p71 = por %p69, %p70
      %p72 = scmp.ne.s32.totalorder %s63, %s64
      %p73 = scmp.eq.s32.totalorder %s37, 0
      %p74 = por %p72, %p73
      %p75 = scmp.ne.s32.totalorder %s63, %s64
      %p76 = scmp.eq.s32.totalorder %s38, 1
      %p77 = por %p75, %p76
      %p79 = scmp.ne.s32.totalorder %s64, %s78
      %p80 = scmp.eq.s32.totalorder %s38, 0
      %p81 = por %p79, %p80
      %s83 = sadd.s32 %s82, 1
      %p86 = scmp.eq.s32.totalorder %s32, 1
      %p87 = scmp.ne.s32.totalorder %s82, %s84
      %p88 = scmp.eq.s32.totalorder %s32, 0
      %p89 = por %p87, %p88
      %p90 = scmp.ne.s32.totalorder %s82, %s84
      %p91 = scmp.eq.s32.totalorder %s37, 1
      %p92 = por %p90, %p91
      %p93 = scmp.ne.s32.totalorder %s84, %s85
      %p94 = scmp.eq.s32.totalorder %s37, 0
      %p95 = por %p93, %p94
      %p96 = scmp.ne.s32.totalorder %s84, %s85
      %p97 = scmp.eq.s32.totalorder %s38, 1
      %p98 = por %p96, %p97
      %p100 = scmp.ne.s32.totalorder %s85, %s99
      %p101 = scmp.eq.s32.totalorder %s38, 0
      %p102 = por %p100, %p101
      %s104 = sadd.s32 %s103, 1
      %p107 = scmp.eq.s32.totalorder %s32, 1
      %p108 = scmp.ne.s32.totalorder %s103, %s105
      %p109 = scmp.eq.s32.totalorder %s32, 0
      %p110 = por %p108, %p109
      %p111 = scmp.ne.s32.totalorder %s103, %s105
      %p112 = scmp.eq.s32.totalorder %s37, 1
      %p113 = por %p111, %p112
      %p114 = scmp.ne.s32.totalorder %s105, %s106
      %p115 = scmp.eq.s32.totalorder %s37, 0
      %p116 = por %p114, %p115
      %p117 = scmp.ne.s32.totalorder %s105, %s106
      %p118 = scmp.eq.s32.totalorder %s38, 1
      %p119 = por %p117, %p118
      %p121 = scmp.ne.s32.totalorder %s106, %s120
      %p122 = scmp.eq.s32.totalorder %s38, 0
      %p123 = por %p121, %p122
      %s125 = sadd.s32 %s124, 1
      %p128 = scmp.eq.s32.totalorder %s32, 1
      %p129 = scmp.ne.s32.totalorder %s124, %s126
      %p130 = scmp.eq.s32.totalorder %s32, 0
      %p131 = por %p129, %p130
      %p132 = scmp.ne.s32.totalorder %s124, %s126
      %p133 = scmp.eq.s32.totalorder %s37, 1
      %p134 = por %p132, %p133
      %p135 = scmp.ne.s32.totalorder %s126, %s127
      %p136 = scmp.eq.s32.totalorder %s37, 0
      %p137 = por %p135, %p136
      %p138 = scmp.ne.s32.totalorder %s126, %s127
      %p139 = scmp.eq.s32.totalorder %s38, 1
      %p140 = por %p138, %p139
      %p142 = scmp.ne.s32.totalorder %s127, %s141
      %p143 = scmp.eq.s32.totalorder %s38, 0
      %p144 = por %p142, %p143
      %s146 = sadd.s32 %s145, 1
      %p149 = scmp.eq.s32.totalorder %s32, 1
      %p150 = scmp.ne.s32.totalorder %s145, %s147
      %p151 = scmp.eq.s32.totalorder %s32, 0
      %p152 = por %p150, %p151
      %p153 = scmp.ne.s32.totalorder %s145, %s147
      %p154 = scmp.eq.s32.totalorder %s37, 1
      %p155 = por %p153, %p154
      %p156 = scmp.ne.s32.totalorder %s147, %s148
      %p157 = scmp.eq.s32.totalorder %s37, 0
      %p158 = por %p156, %p157
      %p159 = scmp.ne.s32.totalorder %s147, %s148
      %p160 = scmp.eq.s32.totalorder %s38, 1
      %p161 = por %p159, %p160
      %p163 = scmp.ne.s32.totalorder %s148, %s162
      %p164 = scmp.eq.s32.totalorder %s38, 0
      %p165 = por %p163, %p164
      %s167 = sadd.s32 %s166, 1
      %p170 = scmp.eq.s32.totalorder %s32, 1
      %p171 = scmp.ne.s32.totalorder %s166, %s168
      %p172 = scmp.eq.s32.totalorder %s32, 0
      %p173 = por %p171, %p172
      %p174 = scmp.ne.s32.totalorder %s166, %s168
      %p175 = scmp.eq.s32.totalorder %s37, 1
      %p176 = por %p174, %p175
      %p177 = scmp.ne.s32.totalorder %s168, %s169
      %p178 = scmp.eq.s32.totalorder %s37, 0
      %p179 = por %p177, %p178
      %p180 = scmp.ne.s32.totalorder %s168, %s169
      %p181 = scmp.eq.s32.totalorder %s38, 1
      %p182 = por %p180, %p181
      %p184 = scmp.ne.s32.totalorder %s169, %s183
      %p185 = scmp.eq.s32.totalorder %s38, 0
      %p186 = por %p184, %p185
      %s187 = ssub.s32 %s32, %s39
      %p188 = scmp.eq.s32.totalorder %s187, 0
      %s190 = sadd.s32 %s189, 1
      %s191 = scalar_select %p188, %s189, %s190
      %p194 = pneg %p188
      %p195 = scmp.eq.s32.totalorder %s32, 1
      %p196 = por %p194, %p195
      %p197 = scmp.ne.s32.totalorder %s189, %s192
      %p198 = scmp.eq.s32.totalorder %s32, 0
      %p199 = por %p197, %p198
      %p200 = scmp.ne.s32.totalorder %s189, %s192
      %p201 = scmp.eq.s32.totalorder %s37, 1
      %p202 = por %p200, %p201
      %p203 = scmp.ne.s32.totalorder %s192, %s193
      %p204 = scmp.eq.s32.totalorder %s37, 0
      %p205 = por %p203, %p204
      %p206 = scmp.ne.s32.totalorder %s192, %s193
      %p207 = scmp.eq.s32.totalorder %s38, 1
      %p208 = por %p206, %p207
      %p210 = scmp.ne.s32.totalorder %s193, %s209
      %p211 = scmp.eq.s32.totalorder %s38, 0
      %p212 = por %p210, %p211
      %s213 = ssub.s32 %s32, %s39
      %p214 = scmp.eq.s32.totalorder %s213, 0
      %s216 = sadd.s32 %s215, 1
      %s217 = scalar_select %p214, %s215, %s216
      %p220 = pneg %p214
      %p221 = scmp.eq.s32.totalorder %s32, 1
      %p222 = por %p220, %p221
      %p223 = scmp.ne.s32.totalorder %s215, %s218
      %p224 = scmp.eq.s32.totalorder %s32, 0
      %p225 = por %p223, %p224
      %p226 = scmp.ne.s32.totalorder %s215, %s218
      %p227 = scmp.eq.s32.totalorder %s37, 1
      %p228 = por %p226, %p227
      %p229 = scmp.ne.s32.totalorder %s218, %s219
      %p230 = scmp.eq.s32.totalorder %s37, 0
      %p231 = por %p229, %p230
      %p232 = scmp.ne.s32.totalorder %s218, %s219
      %p233 = scmp.eq.s32.totalorder %s38, 1
      %p234 = por %p232, %p233
      %p236 = scmp.ne.s32.totalorder %s219, %s235
      %p237 = scmp.eq.s32.totalorder %s38, 0
      %p238 = por %p236, %p237
      %s239 = ssub.s32 %s32, %s39
      %p240 = scmp.eq.s32.totalorder %s239, 0
      %s242 = sadd.s32 %s241, 1
      %s243 = scalar_select %p240, %s241, %s242
      %p246 = pneg %p240
      %p247 = scmp.eq.s32.totalorder %s32, 1
      %p248 = por %p246, %p247
      %p249 = scmp.ne.s32.totalorder %s241, %s244
      %p250 = scmp.eq.s32.totalorder %s32, 0
      %p251 = por %p249, %p250
      %p252 = scmp.ne.s32.totalorder %s241, %s244
      %p253 = scmp.eq.s32.totalorder %s37, 1
      %p254 = por %p252, %p253
      %p255 = scmp.ne.s32.totalorder %s244, %s245
      %p256 = scmp.eq.s32.totalorder %s37, 0
      %p257 = por %p255, %p256
      %p258 = scmp.ne.s32.totalorder %s244, %s245
      %p259 = scmp.eq.s32.totalorder %s38, 1
      %p260 = por %p258, %p259
      %p262 = scmp.ne.s32.totalorder %s245, %s261
      %p263 = scmp.eq.s32.totalorder %s38, 0
      %p264 = por %p262, %p263
      %s265 = ssub.s32 %s32, %s39
      %p266 = scmp.eq.s32.totalorder %s265, 0
      %s268 = sadd.s32 %s267, 1
      %s269 = scalar_select %p266, %s267, %s268
      %p272 = pneg %p266
      %p273 = scmp.eq.s32.totalorder %s32, 1
      %p274 = por %p272, %p273
      %p275 = scmp.ne.s32.totalorder %s267, %s270
      %p276 = scmp.eq.s32.totalorder %s32, 0
      %p277 = por %p275, %p276
      %p278 = scmp.ne.s32.totalorder %s267, %s270
      %p279 = scmp.eq.s32.totalorder %s37, 1
      %p280 = por %p278, %p279
      %p281 = scmp.ne.s32.totalorder %s270, %s271
      %p282 = scmp.eq.s32.totalorder %s37, 0
      %p283 = por %p281, %p282
      %p284 = scmp.ne.s32.totalorder %s270, %s271
      %p285 = scmp.eq.s32.totalorder %s38, 1
      %p286 = por %p284, %p285
      %p288 = scmp.ne.s32.totalorder %s271, %s287
      %p289 = scmp.eq.s32.totalorder %s38, 0
      %p290 = por %p288, %p289
      %s291 = ssub.s32 %s32, %s39
      %p292 = scmp.eq.s32.totalorder %s291, 0
      %s294 = sadd.s32 %s293, 1
      %s295 = scalar_select %p292, %s293, %s294
      %p298 = pneg %p292
      %p299 = scmp.eq.s32.totalorder %s32, 1
      %p300 = por %p298, %p299
      %p301 = scmp.ne.s32.totalorder %s293, %s296
      %p302 = scmp.eq.s32.totalorder %s32, 0
      %p303 = por %p301, %p302
      %p304 = scmp.ne.s32.totalorder %s293, %s296
      %p305 = scmp.eq.s32.totalorder %s37, 1
      %p306 = por %p304, %p305
      %p307 = scmp.ne.s32.totalorder %s296, %s297
      %p308 = scmp.eq.s32.totalorder %s37, 0
      %p309 = por %p307, %p308
      %p310 = scmp.ne.s32.totalorder %s296, %s297
      %p311 = scmp.eq.s32.totalorder %s38, 1
      %p312 = por %p310, %p311
      %p314 = scmp.ne.s32.totalorder %s297, %s313
      %p315 = scmp.eq.s32.totalorder %s38, 0
      %p316 = por %p314, %p315
      %s317 = ssub.s32 %s32, %s39
      %p318 = scmp.eq.s32.totalorder %s317, 0
      %s320 = sadd.s32 %s319, 1
      %s321 = scalar_select %p318, %s319, %s320
      %p324 = pneg %p318
      %p325 = scmp.eq.s32.totalorder %s32, 1
      %p326 = por %p324, %p325
      %p327 = scmp.ne.s32.totalorder %s319, %s322
      %p328 = scmp.eq.s32.totalorder %s32, 0
      %p329 = por %p327, %p328
      %p330 = scmp.ne.s32.totalorder %s319, %s322
      %p331 = scmp.eq.s32.totalorder %s37, 1
      %p332 = por %p330, %p331
      %p333 = scmp.ne.s32.totalorder %s322, %s323
      %p334 = scmp.eq.s32.totalorder %s37, 0
      %p335 = por %p333, %p334
      %p336 = scmp.ne.s32.totalorder %s322, %s323
      %p337 = scmp.eq.s32.totalorder %s38, 1
      %p338 = por %p336, %p337
      %p340 = scmp.ne.s32.totalorder %s323, %s339
      %p341 = scmp.eq.s32.totalorder %s38, 0
      %p342 = por %p340, %p341
      %s343 = ssub.s32 %s32, %s39
      %p344 = scmp.eq.s32.totalorder %s343, 0
      %s346 = sadd.s32 %s345, 1
      %s347 = scalar_select %p344, %s345, %s346
      %p350 = pneg %p344
      %p351 = scmp.eq.s32.totalorder %s32, 1
      %p352 = por %p350, %p351
      %p353 = scmp.ne.s32.totalorder %s345, %s348
      %p354 = scmp.eq.s32.totalorder %s32, 0
      %p355 = por %p353, %p354
      %p356 = scmp.ne.s32.totalorder %s345, %s348
      %p357 = scmp.eq.s32.totalorder %s37, 1
      %p358 = por %p356, %p357
      %p359 = scmp.ne.s32.totalorder %s348, %s349
      %p360 = scmp.eq.s32.totalorder %s37, 0
      %p361 = por %p359, %p360
      %p362 = scmp.ne.s32.totalorder %s348, %s349
      %p363 = scmp.eq.s32.totalorder %s38, 1
      %p364 = por %p362, %p363
      %p366 = scmp.ne.s32.totalorder %s349, %s365
      %p367 = scmp.eq.s32.totalorder %s38, 0
      %p368 = por %p366, %p367
      %s369 = ssub.s32 %s32, %s39
      %p370 = scmp.eq.s32.totalorder %s369, 0
      %s372 = sadd.s32 %s371, 1
      %s373 = scalar_select %p370, %s371, %s372
      %p376 = pneg %p370
      %p377 = scmp.eq.s32.totalorder %s32, 1
      %p378 = por %p376, %p377
      %p379 = scmp.ne.s32.totalorder %s371, %s374
      %p380 = scmp.eq.s32.totalorder %s32, 0
      %p381 = por %p379, %p380
      %p382 = scmp.ne.s32.totalorder %s371, %s374
      %p383 = scmp.eq.s32.totalorder %s37, 1
      %p384 = por %p382, %p383
      %p385 = scmp.ne.s32.totalorder %s374, %s375
      %p386 = scmp.eq.s32.totalorder %s37, 0
      %p387 = por %p385, %p386
      %p388 = scmp.ne.s32.totalorder %s374, %s375
      %p389 = scmp.eq.s32.totalorder %s38, 1
      %p390 = por %p388, %p389
      %p392 = scmp.ne.s32.totalorder %s375, %s391
      %p393 = scmp.eq.s32.totalorder %s38, 0
      %p394 = por %p392, %p393
      %s395 = ssub.s32 %s32, %s39
      %p396 = scmp.eq.s32.totalorder %s395, 0
      %s398 = sadd.s32 %s397, 1
      %s399 = scalar_select %p396, %s397, %s398
      %p402 = pneg %p396
      %p403 = scmp.eq.s32.totalorder %s32, 1
      %p404 = por %p402, %p403
      %p405 = scmp.ne.s32.totalorder %s397, %s400
      %p406 = scmp.eq.s32.totalorder %s32, 0
      %p407 = por %p405, %p406
      %p408 = scmp.ne.s32.totalorder %s397, %s400
      %p409 = scmp.eq.s32.totalorder %s37, 1
      %p410 = por %p408, %p409
      %p411 = scmp.ne.s32.totalorder %s400, %s401
      %p412 = scmp.eq.s32.totalorder %s37, 0
      %p413 = por %p411, %p412
      %p414 = scmp.ne.s32.totalorder %s400, %s401
      %p415 = scmp.eq.s32.totalorder %s38, 1
      %p416 = por %p414, %p415
      %p418 = scmp.ne.s32.totalorder %s401, %s417
      %p419 = scmp.eq.s32.totalorder %s38, 0
      %p420 = por %p418, %p419
      %s421 = ssub.s32 %s32, %s39
      %p422 = scmp.eq.s32.totalorder %s421, 0
      %s424 = sadd.s32 %s423, 1
      %s425 = scalar_select %p422, %s423, %s424
      %p428 = pneg %p422
      %p429 = scmp.eq.s32.totalorder %s32, 1
      %p430 = por %p428, %p429
      %p431 = scmp.ne.s32.totalorder %s423, %s426
      %p432 = scmp.eq.s32.totalorder %s32, 0
      %p433 = por %p431, %p432
      %p434 = scmp.ne.s32.totalorder %s423, %s426
      %p435 = scmp.eq.s32.totalorder %s37, 1
      %p436 = por %p434, %p435
      %p437 = scmp.ne.s32.totalorder %s426, %s427
      %p438 = scmp.eq.s32.totalorder %s37, 0
      %p439 = por %p437, %p438
      %p440 = scmp.ne.s32.totalorder %s426, %s427
      %p441 = scmp.eq.s32.totalorder %s38, 1
      %p442 = por %p440, %p441
      %p444 = scmp.ne.s32.totalorder %s427, %s443
      %p445 = scmp.eq.s32.totalorder %s38, 0
      %p446 = por %p444, %p445
      %s447 = ssub.s32 %s32, %s39
      %p448 = scmp.eq.s32.totalorder %s447, 0
      %s450 = sadd.s32 %s449, 1
      %s451 = scalar_select %p448, %s449, %s450
      %p454 = pneg %p448
      %p455 = scmp.eq.s32.totalorder %s32, 1
      %p456 = por %p454, %p455
      %p457 = scmp.ne.s32.totalorder %s449, %s452
      %p458 = scmp.eq.s32.totalorder %s32, 0
      %p459 = por %p457, %p458
      %p460 = scmp.ne.s32.totalorder %s449, %s452
      %p461 = scmp.eq.s32.totalorder %s37, 1
      %p462 = por %p460, %p461
      %p463 = scmp.ne.s32.totalorder %s452, %s453
      %p464 = scmp.eq.s32.totalorder %s37, 0
      %p465 = por %p463, %p464
      %p466 = scmp.ne.s32.totalorder %s452, %s453
      %p467 = scmp.eq.s32.totalorder %s38, 1
      %p468 = por %p466, %p467
      %p470 = scmp.ne.s32.totalorder %s453, %s469
      %p471 = scmp.eq.s32.totalorder %s38, 0
      %p472 = por %p470, %p471
      %s473 = ssub.s32 %s32, %s39
      %p474 = scmp.eq.s32.totalorder %s473, 0
      %s476 = sadd.s32 %s475, 1
      %s477 = scalar_select %p474, %s475, %s476
      %p480 = pneg %p474
      %p481 = scmp.eq.s32.totalorder %s32, 1
      %p482 = por %p480, %p481
      %p483 = scmp.ne.s32.totalorder %s475, %s478
      %p484 = scmp.eq.s32.totalorder %s32, 0
      %p485 = por %p483, %p484
      %p486 = scmp.ne.s32.totalorder %s475, %s478
      %p487 = scmp.eq.s32.totalorder %s37, 1
      %p488 = por %p486, %p487
      %p489 = scmp.ne.s32.totalorder %s478, %s479
      %p490 = scmp.eq.s32.totalorder %s37, 0
      %p491 = por %p489, %p490
      %p492 = scmp.ne.s32.totalorder %s478, %s479
      %p493 = scmp.eq.s32.totalorder %s38, 1
      %p494 = por %p492, %p493
      %p496 = scmp.ne.s32.totalorder %s479, %s495
      %p497 = scmp.eq.s32.totalorder %s38, 0
      %p498 = por %p496, %p497
      %s500 = sadd.s32 %s499, 1
      %p503 = scmp.eq.s32.totalorder %s32, 1
      %p504 = scmp.ne.s32.totalorder %s499, %s501
      %p505 = scmp.eq.s32.totalorder %s32, 0
      %p506 = por %p504, %p505
      %p507 = scmp.ne.s32.totalorder %s499, %s501
      %p508 = scmp.eq.s32.totalorder %s37, 1
      %p509 = por %p507, %p508
      %p510 = scmp.ne.s32.totalorder %s501, %s502
      %p511 = scmp.eq.s32.totalorder %s37, 0
      %p512 = por %p510, %p511
      %p513 = scmp.ne.s32.totalorder %s501, %s502
      %p514 = scmp.eq.s32.totalorder %s38, 1
      %p515 = por %p513, %p514
      %p517 = scmp.ne.s32.totalorder %s502, %s516
      %p518 = scmp.eq.s32.totalorder %s38, 0
      %p519 = por %p517, %p518
      %s521 = sadd.s32 %s520, 1
      %p524 = scmp.eq.s32.totalorder %s32, 1
      %p525 = scmp.ne.s32.totalorder %s520, %s522
      %p526 = scmp.eq.s32.totalorder %s32, 0
      %p527 = por %p525, %p526
      %p528 = scmp.ne.s32.totalorder %s520, %s522
      %p529 = scmp.eq.s32.totalorder %s37, 1
      %p530 = por %p528, %p529
      %p531 = scmp.ne.s32.totalorder %s522, %s523
      %p532 = scmp.eq.s32.totalorder %s37, 0
      %p533 = por %p531, %p532
      %p534 = scmp.ne.s32.totalorder %s522, %s523
      %p535 = scmp.eq.s32.totalorder %s38, 1
      %p536 = por %p534, %p535
      %p538 = scmp.ne.s32.totalorder %s523, %s537
      %p539 = scmp.eq.s32.totalorder %s38, 0
      %p540 = por %p538, %p539
      %s542 = sadd.s32 %s541, 1
      %p545 = scmp.eq.s32.totalorder %s32, 1
      %p546 = scmp.ne.s32.totalorder %s541, %s543
      %p547 = scmp.eq.s32.totalorder %s32, 0
      %p548 = por %p546, %p547
      %p549 = scmp.ne.s32.totalorder %s541, %s543
      %p550 = scmp.eq.s32.totalorder %s37, 1
      %p551 = por %p549, %p550
      %p552 = scmp.ne.s32.totalorder %s543, %s544
      %p553 = scmp.eq.s32.totalorder %s37, 0
      %p554 = por %p552, %p553
      %p555 = scmp.ne.s32.totalorder %s543, %s544
      %p556 = scmp.eq.s32.totalorder %s38, 1
      %p557 = por %p555, %p556
      %p559 = scmp.ne.s32.totalorder %s544, %s558
      %p560 = scmp.eq.s32.totalorder %s38, 0
      %p561 = por %p559, %p560
      %s563 = sadd.s32 %s562, 1
      %p566 = scmp.eq.s32.totalorder %s32, 1
      %p567 = scmp.ne.s32.totalorder %s562, %s564
      %p568 = scmp.eq.s32.totalorder %s32, 0
      %p569 = por %p567, %p568
      %p570 = scmp.ne.s32.totalorder %s562, %s564
      %p571 = scmp.eq.s32.totalorder %s37, 1
      %p572 = por %p570, %p571
      %p573 = scmp.ne.s32.totalorder %s564, %s565
      %p574 = scmp.eq.s32.totalorder %s37, 0
      %p575 = por %p573, %p574
      %p576 = scmp.ne.s32.totalorder %s564, %s565
      %p577 = scmp.eq.s32.totalorder %s38, 1
      %p578 = por %p576, %p577
      %p580 = scmp.ne.s32.totalorder %s565, %s579
      %p581 = scmp.eq.s32.totalorder %s38, 0
      %p582 = por %p580, %p581
      %s584 = sadd.s32 %s583, 1
      %p587 = scmp.eq.s32.totalorder %s32, 1
      %p588 = scmp.ne.s32.totalorder %s583, %s585
      %p589 = scmp.eq.s32.totalorder %s32, 0
      %p590 = por %p588, %p589
      %p591 = scmp.ne.s32.totalorder %s583, %s585
      %p592 = scmp.eq.s32.totalorder %s37, 1
      %p593 = por %p591, %p592
      %p594 = scmp.ne.s32.totalorder %s585, %s586
      %p595 = scmp.eq.s32.totalorder %s37, 0
      %p596 = por %p594, %p595
      %p597 = scmp.ne.s32.totalorder %s585, %s586
      %p598 = scmp.eq.s32.totalorder %s38, 1
      %p599 = por %p597, %p598
      %p601 = scmp.ne.s32.totalorder %s586, %s600
      %p602 = scmp.eq.s32.totalorder %s38, 0
      %p603 = por %p601, %p602
      %s605 = sadd.s32 %s604, 1
      %p608 = scmp.eq.s32.totalorder %s32, 1
      %p609 = scmp.ne.s32.totalorder %s604, %s606
      %p610 = scmp.eq.s32.totalorder %s32, 0
      %p611 = por %p609, %p610
      %p612 = scmp.ne.s32.totalorder %s604, %s606
      %p613 = scmp.eq.s32.totalorder %s37, 1
      %p614 = por %p612, %p613
      %p615 = scmp.ne.s32.totalorder %s606, %s607
      %p616 = scmp.eq.s32.totalorder %s37, 0
      %p617 = por %p615, %p616
      %p618 = scmp.ne.s32.totalorder %s606, %s607
      %p619 = scmp.eq.s32.totalorder %s38, 1
      %p620 = por %p618, %p619
      %p622 = scmp.ne.s32.totalorder %s607, %s621
      %p623 = scmp.eq.s32.totalorder %s38, 0
      %p624 = por %p622, %p623
      %s626 = sadd.s32 %s625, 1
      %p629 = scmp.eq.s32.totalorder %s32, 1
      %p630 = scmp.ne.s32.totalorder %s625, %s627
      %p631 = scmp.eq.s32.totalorder %s32, 0
      %p632 = por %p630, %p631
      %p633 = scmp.ne.s32.totalorder %s625, %s627
      %p634 = scmp.eq.s32.totalorder %s37, 1
      %p635 = por %p633, %p634
      %p636 = scmp.ne.s32.totalorder %s627, %s628
      %p637 = scmp.eq.s32.totalorder %s37, 0
      %p638 = por %p636, %p637
      %p639 = scmp.ne.s32.totalorder %s627, %s628
      %p640 = scmp.eq.s32.totalorder %s38, 1
      %p641 = por %p639, %p640
      %p643 = scmp.ne.s32.totalorder %s628, %s642
      %p644 = scmp.eq.s32.totalorder %s38, 0
      %p645 = por %p643, %p644
      %p646 = scmp.le.s32.totalorder 1, %s32
      %p647 = scmp.lt.s32.totalorder %s32, 3
      %p648 = pnand %p646, %p647
      %p649 = pneg %p648
      // Predicated region
      $region9: #{album_event_classifier_forward.1} parent=5 // pred_check
        _
      $region10: #{album_event_classifier_forward.1} parent=5 // pred_check_branch
        %651 = sbr.rel (%p648) target = $region12
      $region11: #{album_event_classifier_forward.1} parent=5 // pred_region
        %s652 = ssub.s32 %s32, 1
        // Predicated region
        $region13: #{album_event_classifier_forward.1} parent=11 // pred_check
          %p653 = pneg %p53
        $region14: #{album_event_classifier_forward.1} parent=11 // pred_check_branch
          %655 = sbr.rel (%p653) target = $region16
        $region15: #{album_event_classifier_forward.1} parent=11 // pred_region
          _
        $region16: #{album_event_classifier_forward.1} parent=11 // pred_fallthru
          _
        // Predicated region
        $region17: #{album_event_classifier_forward.1} parent=11 // pred_check
          %p656 = pneg %p74
        $region18: #{album_event_classifier_forward.1} parent=11 // pred_check_branch
          %658 = sbr.rel (%p656) target = $region20
        $region19: #{album_event_classifier_forward.1} parent=11 // pred_region
          _
        $region20: #{album_event_classifier_forward.1} parent=11 // pred_fallthru
          _
        // Predicated region
        $region21: #{album_event_classifier_forward.1} parent=11 // pred_check
          %p659 = pneg %p95
        $region22: #{album_event_classifier_forward.1} parent=11 // pred_check_branch
          %661 = sbr.rel (%p659) target = $region24
        $region23: #{album_event_classifier_forward.1} parent=11 // pred_region
          _
        $region24: #{album_event_classifier_forward.1} parent=11 // pred_fallthru
          _
        // Predicated region
        $region25: #{album_event_classifier_forward.1} parent=11 // pred_check
          %p662 = pneg %p116
        $region26: #{album_event_classifier_forward.1} parent=11 // pred_check_branch
          %664 = sbr.rel (%p662) target = $region28
        $region27: #{album_event_classifier_forward.1} parent=11 // pred_region
          _
        $region28: #{album_event_classifier_forward.1} parent=11 // pred_fallthru
          _
        // Predicated region
        $region29: #{album_event_classifier_forward.1} parent=11 // pred_check
          %p665 = pneg %p137
        $region30: #{album_event_classifier_forward.1} parent=11 // pred_check_branch
          %667 = sbr.rel (%p665) target = $region32
        $region31: #{album_event_classifier_forward.1} parent=11 // pred_region
          _
        $region32: #{album_event_classifier_forward.1} parent=11 // pred_fallthru
          _
        // Predicated region
        $region33: #{album_event_classifier_forward.1} parent=11 // pred_check
          %p668 = pneg %p158
        $region34: #{album_event_classifier_forward.1} parent=11 // pred_check_branch
          %670 = sbr.rel (%p668) target = $region36
        $region35: #{album_event_classifier_forward.1} parent=11 // pred_region
          _
        $region36: #{album_event_classifier_forward.1} parent=11 // pred_fallthru
          _
        // Predicated region
        $region37: #{album_event_classifier_forward.1} parent=11 // pred_check
          %p671 = pneg %p179
        $region38: #{album_event_classifier_forward.1} parent=11 // pred_check_branch
          %673 = sbr.rel (%p671) target = $region40
        $region39: #{album_event_classifier_forward.1} parent=11 // pred_region
          _
        $region40: #{album_event_classifier_forward.1} parent=11 // pred_fallthru
          _
        // Predicated region
        $region41: #{album_event_classifier_forward.1} parent=11 // pred_check
          %p674 = pneg %p512
        $region42: #{album_event_classifier_forward.1} parent=11 // pred_check_branch
          %676 = sbr.rel (%p674) target = $region44
        $region43: #{album_event_classifier_forward.1} parent=11 // pred_region
          _
        $region44: #{album_event_classifier_forward.1} parent=11 // pred_fallthru
          _
        // Predicated region
        $region45: #{album_event_classifier_forward.1} parent=11 // pred_check
          %p677 = pneg %p533
        $region46: #{album_event_classifier_forward.1} parent=11 // pred_check_branch
          %679 = sbr.rel (%p677) target = $region48
        $region47: #{album_event_classifier_forward.1} parent=11 // pred_region
          _
        $region48: #{album_event_classifier_forward.1} parent=11 // pred_fallthru
          _
        // Predicated region
        $region49: #{album_event_classifier_forward.1} parent=11 // pred_check
          %p680 = pneg %p554
        $region50: #{album_event_classifier_forward.1} parent=11 // pred_check_branch
          %682 = sbr.rel (%p680) target = $region52
        $region51: #{album_event_classifier_forward.1} parent=11 // pred_region
          _
        $region52: #{album_event_classifier_forward.1} parent=11 // pred_fallthru
          _
        // Predicated region
        $region53: #{album_event_classifier_forward.1} parent=11 // pred_check
          %p683 = pneg %p575
        $region54: #{album_event_classifier_forward.1} parent=11 // pred_check_branch
          %685 = sbr.rel (%p683) target = $region56
        $region55: #{album_event_classifier_forward.1} parent=11 // pred_region
          _
        $region56: #{album_event_classifier_forward.1} parent=11 // pred_fallthru
          _
        // Predicated region
        $region57: #{album_event_classifier_forward.1} parent=11 // pred_check
          %p686 = pneg %p596
        $region58: #{album_event_classifier_forward.1} parent=11 // pred_check_branch
          %688 = sbr.rel (%p686) target = $region60
        $region59: #{album_event_classifier_forward.1} parent=11 // pred_region
          _
        $region60: #{album_event_classifier_forward.1} parent=11 // pred_fallthru
          _
        // Predicated region
        $region61: #{album_event_classifier_forward.1} parent=11 // pred_check
          %p689 = pneg %p617
        $region62: #{album_event_classifier_forward.1} parent=11 // pred_check_branch
          %691 = sbr.rel (%p689) target = $region64
        $region63: #{album_event_classifier_forward.1} parent=11 // pred_region
          _
        $region64: #{album_event_classifier_forward.1} parent=11 // pred_fallthru
          _
      $region12: #{album_event_classifier_forward.1} parent=5 // pred_fallthru
        _
      %p692 = scmp.lt.s32.totalorder %s32, 2
      // Predicated region
      $region65: #{album_event_classifier_forward.1} parent=5 // pred_check
        %p693 = pneg %p692
      $region66: #{album_event_classifier_forward.1} parent=5 // pred_check_branch
        %695 = sbr.rel (%p693) target = $region68
      $region67: #{album_event_classifier_forward.1} parent=5 // pred_region
        // Predicated region
        $region69: #{album_event_classifier_forward.1} parent=67 // pred_check
          %p696 = pneg %p199
        $region70: #{album_event_classifier_forward.1} parent=67 // pred_check_branch
          %698 = sbr.rel (%p696) target = $region72
        $region71: #{album_event_classifier_forward.1} parent=67 // pred_region
          %p699 = scmp.lt.s32.totalorder %s32, 1
          %s700 = scalar_select %p699, %s32, 1
          %s701 = smul.addr %s700, 16
          %s702 = smul.addr %s701, 4
          %s703 = scalar_lea.vmem %s7, %s702
        $region72: #{album_event_classifier_forward.1} parent=67 // pred_fallthru
          _
        // Predicated region
        $region73: #{album_event_classifier_forward.1} parent=67 // pred_check
          %p704 = pneg %p225
        $region74: #{album_event_classifier_forward.1} parent=67 // pred_check_branch
          %706 = sbr.rel (%p704) target = $region76
        $region75: #{album_event_classifier_forward.1} parent=67 // pred_region
          %p707 = scmp.lt.s32.totalorder %s32, 1
          %s708 = scalar_select %p707, %s32, 1
          %s709 = smul.addr %s708, 2
          %s710 = scalar_lea.vmem %s8, %s709
        $region76: #{album_event_classifier_forward.1} parent=67 // pred_fallthru
          _
        // Predicated region
        $region77: #{album_event_classifier_forward.1} parent=67 // pred_check
          %p711 = pneg %p251
        $region78: #{album_event_classifier_forward.1} parent=67 // pred_check_branch
          %713 = sbr.rel (%p711) target = $region80
        $region79: #{album_event_classifier_forward.1} parent=67 // pred_region
          %p714 = scmp.lt.s32.totalorder %s32, 1
          %s715 = scalar_select %p714, %s32, 1
          %s716 = smul.addr %s715, 8
          %s717 = smul.addr %s716, 4
          %s718 = scalar_lea.vmem %s9, %s717
        $region80: #{album_event_classifier_forward.1} parent=67 // pred_fallthru
          _
        // Predicated region
        $region81: #{album_event_classifier_forward.1} parent=67 // pred_check
          %p719 = pneg %p277
        $region82: #{album_event_classifier_forward.1} parent=67 // pred_check_branch
          %721 = sbr.rel (%p719) target = $region84
        $region83: #{album_event_classifier_forward.1} parent=67 // pred_region
          %p722 = scmp.lt.s32.totalorder %s32, 1
          %s723 = scalar_select %p722, %s32, 1
          %s724 = scalar_lea.vmem %s10, %s723
        $region84: #{album_event_classifier_forward.1} parent=67 // pred_fallthru
          _
        // Predicated region
        $region85: #{album_event_classifier_forward.1} parent=67 // pred_check
          %p725 = pneg %p303
        $region86: #{album_event_classifier_forward.1} parent=67 // pred_check_branch
          %727 = sbr.rel (%p725) target = $region88
        $region87: #{album_event_classifier_forward.1} parent=67 // pred_region
          %p728 = scmp.lt.s32.totalorder %s32, 1
          %s729 = scalar_select %p728, %s32, 1
          %s730 = smul.addr %s729, 128
          %s731 = smul.addr %s730, 4
          %s732 = scalar_lea.vmem %s11, %s731
        $region88: #{album_event_classifier_forward.1} parent=67 // pred_fallthru
          _
        // Predicated region
        $region89: #{album_event_classifier_forward.1} parent=67 // pred_check
          %p733 = pneg %p329
        $region90: #{album_event_classifier_forward.1} parent=67 // pred_check_branch
          %735 = sbr.rel (%p733) target = $region92
        $region91: #{album_event_classifier_forward.1} parent=67 // pred_region
          %p736 = scmp.lt.s32.totalorder %s32, 1
          %s737 = scalar_select %p736, %s32, 1
          %s738 = smul.addr %s737, 16
          %s739 = scalar_lea.vmem %s12, %s738
        $region92: #{album_event_classifier_forward.1} parent=67 // pred_fallthru
          _
        // Predicated region
        $region93: #{album_event_classifier_forward.1} parent=67 // pred_check
          %p740 = pneg %p355
        $region94: #{album_event_classifier_forward.1} parent=67 // pred_check_branch
          %742 = sbr.rel (%p740) target = $region96
        $region95: #{album_event_classifier_forward.1} parent=67 // pred_region
          %p743 = scmp.lt.s32.totalorder %s32, 1
          %s744 = scalar_select %p743, %s32, 1
          %s745 = smul.addr %s744, 256
          %s746 = smul.addr %s745, 4
          %s747 = scalar_lea.vmem %s13, %s746
        $region96: #{album_event_classifier_forward.1} parent=67 // pred_fallthru
          _
        // Predicated region
        $region97: #{album_event_classifier_forward.1} parent=67 // pred_check
          %p748 = pneg %p381
        $region98: #{album_event_classifier_forward.1} parent=67 // pred_check_branch
          %750 = sbr.rel (%p748) target = $region100
        $region99: #{album_event_classifier_forward.1} parent=67 // pred_region
          %p751 = scmp.lt.s32.totalorder %s32, 1
          %s752 = scalar_select %p751, %s32, 1
          %s753 = scalar_lea.vmem %s14, %s752
        $region100: #{album_event_classifier_forward.1} parent=67 // pred_fallthru
          _
        // Predicated region
        $region101: #{album_event_classifier_forward.1} parent=67 // pred_check
          %p754 = pneg %p407
        $region102: #{album_event_classifier_forward.1} parent=67 // pred_check_branch
          %756 = sbr.rel (%p754) target = $region104
        $region103: #{album_event_classifier_forward.1} parent=67 // pred_region
          %p757 = scmp.lt.s32.totalorder %s32, 1
          %s758 = scalar_select %p757, %s32, 1
          %s759 = scalar_lea.vmem %s15, %s758
        $region104: #{album_event_classifier_forward.1} parent=67 // pred_fallthru
          _
        // Predicated region
        $region105: #{album_event_classifier_forward.1} parent=67 // pred_check
          %p760 = pneg %p433
        $region106: #{album_event_classifier_forward.1} parent=67 // pred_check_branch
          %762 = sbr.rel (%p760) target = $region108
        $region107: #{album_event_classifier_forward.1} parent=67 // pred_region
          %p763 = scmp.lt.s32.totalorder %s32, 1
          %s764 = scalar_select %p763, %s32, 1
          %s765 = scalar_lea.vmem %s16, %s764
        $region108: #{album_event_classifier_forward.1} parent=67 // pred_fallthru
          _
        // Predicated region
        $region109: #{album_event_classifier_forward.1} parent=67 // pred_check
          %p766 = pneg %p459
        $region110: #{album_event_classifier_forward.1} parent=67 // pred_check_branch
          %768 = sbr.rel (%p766) target = $region112
        $region111: #{album_event_classifier_forward.1} parent=67 // pred_region
          %p769 = scmp.lt.s32.totalorder %s32, 1
          %s770 = scalar_select %p769, %s32, 1
          %s771 = scalar_lea.vmem %s17, %s770
        $region112: #{album_event_classifier_forward.1} parent=67 // pred_fallthru
          _
        // Predicated region
        $region113: #{album_event_classifier_forward.1} parent=67 // pred_check
          %p772 = pneg %p485
        $region114: #{album_event_classifier_forward.1} parent=67 // pred_check_branch
          %774 = sbr.rel (%p772) target = $region116
        $region115: #{album_event_classifier_forward.1} parent=67 // pred_region
          %p775 = scmp.lt.s32.totalorder %s32, 1
          %s776 = scalar_select %p775, %s32, 1
          %s777 = scalar_lea.vmem %s18, %s776
        $region116: #{album_event_classifier_forward.1} parent=67 // pred_fallthru
          _
      $region68: #{album_event_classifier_forward.1} parent=5 // pred_fallthru
        _
      %p778 = scmp.le.s32.totalorder 1, %s32
      %p779 = scmp.lt.s32.totalorder %s32, 3
      %p780 = pnand %p778, %p779
      %p781 = pneg %p780
      // Predicated region
      $region117: #{album_event_classifier_forward.1} parent=5 // pred_check
        _
      $region118: #{album_event_classifier_forward.1} parent=5 // pred_check_branch
        %783 = sbr.rel (%p780) target = $region120
      $region119: #{album_event_classifier_forward.1} parent=5 // pred_region
        %s784 = ssub.s32 %s32, 1
        %p785 = pneg %p53
        %p786 = pneg %p50
        %p787 = pneg %p74
        %p788 = pneg %p71
        %p789 = pneg %p95
        %p790 = pneg %p92
        %p791 = pneg %p116
        %p792 = pneg %p113
        %p793 = pneg %p137
        %p794 = pneg %p134
        %p795 = pneg %p158
        %p796 = pneg %p155
        %p797 = pneg %p179
        %p798 = pneg %p176
        %p799 = scmp.lt.s32.totalorder %s37, 1
        %s800 = scalar_select %p799, %s37, 1
        %s801 = smul.addr %s800, 16
        %s802 = smul.addr %s801, 4
        %s803 = scalar_lea.vmem %s7, %s802
        %p804 = pneg %p205
        %p805 = pneg %p202
        %p806 = scmp.lt.s32.totalorder %s37, 1
        %s807 = scalar_select %p806, %s37, 1
        %s808 = smul.addr %s807, 2
        %s809 = scalar_lea.vmem %s8, %s808
        %p810 = pneg %p231
        %p811 = pneg %p228
        %p812 = scmp.lt.s32.totalorder %s37, 1
        %s813 = scalar_select %p812, %s37, 1
        %s814 = smul.addr %s813, 8
        %s815 = smul.addr %s814, 4
        %s816 = scalar_lea.vmem %s9, %s815
        %p817 = pneg %p257
        %p818 = pneg %p254
        %p819 = scmp.lt.s32.totalorder %s37, 1
        %s820 = scalar_select %p819, %s37, 1
        %s821 = scalar_lea.vmem %s10, %s820
        %p822 = pneg %p283
        %p823 = pneg %p280
        %p824 = scmp.lt.s32.totalorder %s37, 1
        %s825 = scalar_select %p824, %s37, 1
        %s826 = smul.addr %s825, 128
        %s827 = smul.addr %s826, 4
        %s828 = scalar_lea.vmem %s11, %s827
        %p829 = pneg %p309
        %p830 = pneg %p306
        %p831 = scmp.lt.s32.totalorder %s37, 1
        %s832 = scalar_select %p831, %s37, 1
        %s833 = smul.addr %s832, 16
        %s834 = scalar_lea.vmem %s12, %s833
        %p835 = pneg %p335
        %p836 = pneg %p332
        %p837 = scmp.lt.s32.totalorder %s37, 1
        %s838 = scalar_select %p837, %s37, 1
        %s839 = smul.addr %s838, 256
        %s840 = smul.addr %s839, 4
        %s841 = scalar_lea.vmem %s13, %s840
        %p842 = pneg %p361
        %p843 = pneg %p358
        %p844 = scmp.lt.s32.totalorder %s37, 1
        %s845 = scalar_select %p844, %s37, 1
        %s846 = scalar_lea.vmem %s14, %s845
        %p847 = pneg %p387
        %p848 = pneg %p384
        %p849 = scmp.lt.s32.totalorder %s37, 1
        %s850 = scalar_select %p849, %s37, 1
        %s851 = scalar_lea.vmem %s15, %s850
        %p852 = pneg %p413
        %p853 = pneg %p410
        %p854 = scmp.lt.s32.totalorder %s37, 1
        %s855 = scalar_select %p854, %s37, 1
        %s856 = scalar_lea.vmem %s16, %s855
        %p857 = pneg %p439
        %p858 = pneg %p436
        %p859 = scmp.lt.s32.totalorder %s37, 1
        %s860 = scalar_select %p859, %s37, 1
        %s861 = scalar_lea.vmem %s17, %s860
        %p862 = pneg %p465
        %p863 = pneg %p462
        %p864 = scmp.lt.s32.totalorder %s37, 1
        %s865 = scalar_select %p864, %s37, 1
        %s866 = scalar_lea.vmem %s18, %s865
        %p867 = pneg %p491
        %p868 = pneg %p488
        %p869 = pneg %p512
        %p870 = pneg %p509
        %p871 = pneg %p533
        %p872 = pneg %p530
        %p873 = pneg %p554
        %p874 = pneg %p551
        %p875 = pneg %p575
        %p876 = pneg %p572
        %p877 = pneg %p596
        %p878 = pneg %p593
        %p879 = pneg %p617
        %p880 = pneg %p614
        %p881 = pneg %p638
        %p882 = pneg %p635
        %p883 = scmp.lt.s32.totalorder %s37, 1
        %s884 = scalar_select %p883, %s37, 1
        %s885 = smul.addr %s884, 16
        %s886 = smul.addr %s885, 4
        %s887 = scalar_lea.vmem %s7, %s886
        %p888 = scmp.lt.s32.totalorder %s37, 1
        %s889 = scalar_select %p888, %s37, 1
        %s890 = smul.addr %s889, 2
        %s891 = scalar_lea.vmem %s8, %s890
        %p892 = scmp.lt.s32.totalorder %s37, 1
        %s893 = scalar_select %p892, %s37, 1
        %s894 = smul.addr %s893, 8
        %s895 = smul.addr %s894, 4
        %s896 = scalar_lea.vmem %s9, %s895
        %p897 = scmp.lt.s32.totalorder %s37, 1
        %s898 = scalar_select %p897, %s37, 1
        %s899 = scalar_lea.vmem %s10, %s898
        %p900 = scmp.lt.s32.totalorder %s37, 1
        %s901 = scalar_select %p900, %s37, 1
        %s902 = smul.addr %s901, 128
        %s903 = smul.addr %s902, 4
        %s904 = scalar_lea.vmem %s11, %s903
        %p905 = scmp.lt.s32.totalorder %s37, 1
        %s906 = scalar_select %p905, %s37, 1
        %s907 = smul.addr %s906, 16
        %s908 = scalar_lea.vmem %s12, %s907
        %p909 = scmp.lt.s32.totalorder %s37, 1
        %s910 = scalar_select %p909, %s37, 1
        %s911 = smul.addr %s910, 256
        %s912 = smul.addr %s911, 4
        %s913 = scalar_lea.vmem %s13, %s912
        %p914 = scmp.lt.s32.totalorder %s37, 1
        %s915 = scalar_select %p914, %s37, 1
        %s916 = scalar_lea.vmem %s14, %s915
        %p917 = scmp.lt.s32.totalorder %s37, 1
        %s918 = scalar_select %p917, %s37, 1
        %s919 = scalar_lea.vmem %s15, %s918
        %p920 = scmp.lt.s32.totalorder %s37, 1
        %s921 = scalar_select %p920, %s37, 1
        %s922 = scalar_lea.vmem %s16, %s921
        %p923 = scmp.lt.s32.totalorder %s37, 1
        %s924 = scalar_select %p923, %s37, 1
        %s925 = scalar_lea.vmem %s17, %s924
        %p926 = scmp.lt.s32.totalorder %s37, 1
        %s927 = scalar_select %p926, %s37, 1
        %s928 = scalar_lea.vmem %s18, %s927
        %p930 = scmp.eq.s32.totalorder %s37, 0
        // Predicated region
        $region121: #{album_event_classifier_forward.1} parent=119 // pred_check
          %p931 = pneg %p930
        $region122: #{album_event_classifier_forward.1} parent=119 // pred_check_branch
          %933 = sbr.rel (%p931) target = $region124
        $region123: #{album_event_classifier_forward.1} parent=119 // pred_region
          %v934 = vld [vmem:[%s0] sm:$0xff]
          %v935 = vld [vmem:[%s0 + $0x8] sm:$0x3f]
          %v936 = vld [vmem:[%s1] sm:$0xf]
          %v937 = vld [vmem:[%s2] sm:$0x1]
          %v939 = vlaneseq
          %v940 = vshrl.u32 %v939, 7
          %v941 = vsub.s32 0, %v940
          %v942 = vrot.slane %v937, %v941
          %vm944 = vcmask 31744
          %v946 = vsel %vm944, %v934, 0
          %v949 = vsel %vm944, %v935, 0
          %vm951 = vcmask 1043456
          %v953 = vsel %vm951, %v936, 0
          %955 = vmatprep.subr.mxu0 0.0
          %956 = vmatpush1.msra.mxu0 %v953
          %957 = vmatprep.subr.mxu0 0.0
          %958 = vmatpush1.msra.mxu0 0.0
          %959 = vmatprep.subr.mxu0 0.0
          %960 = vmatpush1.msra.mxu0 0.0
          %961 = vmatprep.subr.mxu0 0.0
          %962 = vmatpush1.msra.mxu0 0.0
          %963 = vmatprep.subr.mxu0 0.0
          %964 = vmatpush1.msra.mxu0 0.0
          %965 = vmatprep.subr.mxu0 0.0
          %966 = vmatpush1.msra.mxu0 0.0
          %967 = vmatprep.subr.mxu0 0.0
          %968 = vmatpush1.msra.mxu0 0.0
          %969 = vmatprep.subr.mxu0 0.0
          %970 = vmatpush1.msra.mxu0 0.0
          %971 = vmatprep.subr.mxu0 0.0
          %972 = vmatpush1.msra.mxu0 0.0
          %973 = vmatprep.subr.mxu0 0.0
          %974 = vmatpush1.msra.mxu0 0.0
          %975 = vmatprep.subr.mxu0 0.0
          %976 = vmatpush1.msra.mxu0 0.0
          %977 = vmatprep.subr.mxu0 0.0
          %978 = vmatpush1.msra.mxu0 0.0
          %979 = vmatprep.subr.mxu0 0.0
          %980 = vmatpush1.msra.mxu0 0.0
          %981 = vmatprep.subr.mxu0 0.0
          %982 = vmatpush1.msra.mxu0 0.0
          %983 = vmatprep.subr.mxu0 0.0
          %984 = vmatpush1.msra.mxu0 0.0
          %985 = vmatprep.subr.mxu0 0.0
          %986 = vmatpush1.msra.mxu0 0.0
          %987 = vmatprep.subr.mxu0 0.0
          %988 = vmatpush1.msra.mxu0 0.0
          %989 = vmatprep.subr.mxu0 0.0
          %990 = vmatpush1.msra.mxu0 0.0
          %991 = vmatprep.subr.mxu0 0.0
          %992 = vmatpush1.msra.mxu0 0.0
          %993 = vmatprep.subr.mxu0 0.0
          %994 = vmatpush1.msra.mxu0 0.0
          %995 = vmatprep.subr.mxu0 0.0
          %996 = vmatpush1.msra.mxu0 0.0
          %997 = vmatprep.subr.mxu0 0.0
          %998 = vmatpush1.msra.mxu0 0.0
          %999 = vmatprep.subr.mxu0 0.0
          %1000 = vmatpush1.msra.mxu0 0.0
          %1001 = vmatprep.subr.mxu0 0.0
          %1002 = vmatpush1.msra.mxu0 0.0
          %1003 = vmatprep.subr.mxu0 0.0
          %1004 = vmatpush1.msra.mxu0 0.0
          %1005 = vmatprep.subr.mxu0 0.0
          %1006 = vmatpush1.msra.mxu0 0.0
          %1007 = vmatprep.subr.mxu0 0.0
          %1008 = vmatpush1.msra.mxu0 0.0
          %1009 = vmatprep.subr.mxu0 0.0
          %1010 = vmatpush1.msra.mxu0 0.0
          %1011 = vmatprep.subr.mxu0 0.0
          %1012 = vmatpush1.msra.mxu0 0.0
          %1013 = vmatprep.subr.mxu0 0.0
          %1014 = vmatpush1.msra.mxu0 0.0
          %1015 = vmatprep.subr.mxu0 0.0
          %1016 = vmatpush1.msra.mxu0 0.0
          %1017 = vmatprep.subr.mxu0 0.0
          %1018 = vmatpush1.msra.mxu0 0.0
          %1019 = vmatprep.mubr.f32.mxu0 0.0
          %1020 = vmatmul.mubr.f32.gmra.mrb[0].mxu0 %v946
          %v1021 = vpop.f32.mrb[0].mxu0
          %v1022 = vadd.f32 %v942, %v1021
          %v1023 = vpop.f32.mrb[0].mxu0
          %1024 = vmatprep.mubr.f32.mxu0 0.0
          %1025 = vmatmul.mubr.f32.gmra.mrb[0].mxu0 %v949
          %v1026 = vpop.f32.mrb[0].mxu0
          %v1027 = vadd.f32 %v942, %v1026
          %v1028 = vpop.f32.mrb[0].mxu0
          %1029 = vdwg.mxu0
          %v1030 = vld [vmem:[%s3] sm:$0xff]
          %v1031 = vld [vmem:[%s3 + $0x8] sm:$0xff]
          %v1032 = vld [vmem:[%s4] sm:$0xff]
          %v1033 = vld [vmem:[%s4 + $0x8] sm:$0xff]
          %vm1034 = vcmask 113664
          %v1036 = vsel %vm1034, %v1032, 0
          %v1039 = vsel %vm1034, %v1033, 0
          %vm1041 = vcmask 1045504
          %v1043 = vsel %vm1041, %v1027, 0
          %1045 = vmatprep.subr.mxu0 0.0
          %1046 = vmatpush1.msra.mxu0 %v1022
          %1047 = vmatprep.subr.mxu0 0.0
          %1048 = vmatpush1.msra.mxu0 %v1043
          %1049 = vmatprep.subr.mxu0 0.0
          %1050 = vmatpush1.msra.mxu0 0.0
          %1051 = vmatprep.subr.mxu0 0.0
          %1052 = vmatpush1.msra.mxu0 0.0
          %1053 = vmatprep.subr.mxu0 0.0
          %1054 = vmatpush1.msra.mxu0 0.0
          %1055 = vmatprep.subr.mxu0 0.0
          %1056 = vmatpush1.msra.mxu0 0.0
          %1057 = vmatprep.subr.mxu0 0.0
          %1058 = vmatpush1.msra.mxu0 0.0
          %1059 = vmatprep.subr.mxu0 0.0
          %1060 = vmatpush1.msra.mxu0 0.0
          %1061 = vmatprep.subr.mxu0 0.0
          %1062 = vmatpush1.msra.mxu0 0.0
          %1063 = vmatprep.subr.mxu0 0.0
          %1064 = vmatpush1.msra.mxu0 0.0
          %1065 = vmatprep.subr.mxu0 0.0
          %1066 = vmatpush1.msra.mxu0 0.0
          %1067 = vmatprep.subr.mxu0 0.0
          %1068 = vmatpush1.msra.mxu0 0.0
          %1069 = vmatprep.subr.mxu0 0.0
          %1070 = vmatpush1.msra.mxu0 0.0
          %1071 = vmatprep.subr.mxu0 0.0
          %1072 = vmatpush1.msra.mxu0 0.0
          %1073 = vmatprep.subr.mxu0 0.0
          %1074 = vmatpush1.msra.mxu0 0.0
          %1075 = vmatprep.subr.mxu0 0.0
          %1076 = vmatpush1.msra.mxu0 0.0
          %1077 = vmatprep.subr.mxu0 0.0
          %1078 = vmatpush1.msra.mxu0 0.0
          %1079 = vmatprep.subr.mxu0 0.0
          %1080 = vmatpush1.msra.mxu0 0.0
          %1081 = vmatprep.subr.mxu0 0.0
          %1082 = vmatpush1.msra.mxu0 0.0
          %1083 = vmatprep.subr.mxu0 0.0
          %1084 = vmatpush1.msra.mxu0 0.0
          %1085 = vmatprep.subr.mxu0 0.0
          %1086 = vmatpush1.msra.mxu0 0.0
          %1087 = vmatprep.subr.mxu0 0.0
          %1088 = vmatpush1.msra.mxu0 0.0
          %1089 = vmatprep.subr.mxu0 0.0
          %1090 = vmatpush1.msra.mxu0 0.0
          %1091 = vmatprep.subr.mxu0 0.0
          %1092 = vmatpush1.msra.mxu0 0.0
          %1093 = vmatprep.subr.mxu0 0.0
          %1094 = vmatpush1.msra.mxu0 0.0
          %1095 = vmatprep.subr.mxu0 0.0
          %1096 = vmatpush1.msra.mxu0 0.0
          %1097 = vmatprep.subr.mxu0 0.0
          %1098 = vmatpush1.msra.mxu0 0.0
          %1099 = vmatprep.subr.mxu0 0.0
          %1100 = vmatpush1.msra.mxu0 0.0
          %1101 = vmatprep.subr.mxu0 0.0
          %1102 = vmatpush1.msra.mxu0 0.0
          %1103 = vmatprep.subr.mxu0 0.0
          %1104 = vmatpush1.msra.mxu0 0.0
          %1105 = vmatprep.subr.mxu0 0.0
          %1106 = vmatpush1.msra.mxu0 0.0
          %1107 = vmatprep.subr.mxu0 0.0
          %1108 = vmatpush1.msra.mxu0 0.0
          %1109 = vmatprep.mubr.f32.mxu0 0.0
          %1110 = vmatmul.mubr.f32.gmra.mrb[0].mxu0 %v1036
          %v1111 = vpop.f32.mrb[0].mxu0
          %v1112 = vadd.f32 0.0, %v1111
          %v1113 = vpop.f32.mrb[0].mxu0
          %1114 = vmatprep.mubr.f32.mxu0 0.0
          %1115 = vmatmul.mubr.f32.gmra.mrb[0].mxu0 %v1039
          %v1116 = vpop.f32.mrb[0].mxu0
          %v1117 = vadd.f32 0.0, %v1116
          %v1118 = vpop.f32.mrb[0].mxu0
          %1119 = vdwg.mxu0
          %v1120 = vadd.f32 %v1030, %v1112
          %v1121 = vadd.f32 %v1031, %v1117
          %vm1122 = vcmask 523264
          %1123 = vst.msk [vmem:[#allocation2] sm:$0xff] %vm1122, %v1120
          %1124 = vst.msk [vmem:[#allocation2 + $0x8] sm:$0xff] %vm1122, %v1121
        $region124: #{album_event_classifier_forward.1} parent=119 // pred_fallthru
          _
        %v1125 = vld [vmem:[#allocation2] sm:$0xff]
        %v1126 = vld [vmem:[#allocation2 + $0x8] sm:$0xff]
        %v1127 = vld [vmem:[%s6] sm:$0x1]
        %v1128 = vld [vmem:[%s6 + $0x1] sm:$0x1]
        %v1129 = vld [vmem:[%s6 + $0x2] sm:$0x1]
        %v1130 = vld [vmem:[%s6 + $0x3] sm:$0x1]
        %v1131 = vld [vmem:[%s6 + $0x4] sm:$0x1]
        %v1132 = vld [vmem:[%s6 + $0x5] sm:$0x1]
        %v1133 = vld [vmem:[%s6 + $0x6] sm:$0x1]
        %v1134 = vld [vmem:[%s6 + $0x7] sm:$0x1]
        %v1135 = vpack.c.bf16 %v1126, %v1125
        %v1136 = vld [vmem:[%s887] sm:$0xff]
        %v1137 = vld [vmem:[%s887 + $0x8] sm:$0xff]
        %v1138 = vld [vmem:[%s887 + $0x10] sm:$0xff]
        %v1139 = vld [vmem:[%s887 + $0x18] sm:$0xff]
        %v1140 = vld [vmem:[%s887 + $0x20] sm:$0xff]
        %v1141 = vld [vmem:[%s887 + $0x28] sm:$0xff]
        %v1142 = vld [vmem:[%s887 + $0x30] sm:$0xff]
        %v1143 = vld [vmem:[%s887 + $0x38] sm:$0xff]
        %v1144 = vld [vmem:[%s891] sm:$0x3]
        %v1146 = vlaneseq
        %v1147 = vshrl.u32 %v1146, 7
        %v1148 = vsub.s32 0, %v1147
        %v1149 = vrot.slane %v1144, %v1148
        %v1150 = vlaneseq
        %v1151 = vshrl.u32 %v1150, 7
        %v1152 = vsub.s32 1, %v1151
        %v1153 = vrot.slane %v1144, %v1152
        %v1164 = vunpack.c.l.b16 %v1136
        %v1165 = vunpack.c.h.b16 %v1136
        %v1166 = vunpack.c.l.b16 %v1137
        %v1167 = vunpack.c.h.b16 %v1137
        %v1168 = vunpack.c.l.b16 %v1138
        %v1169 = vunpack.c.h.b16 %v1138
        %v1170 = vunpack.c.l.b16 %v1139
        %v1171 = vunpack.c.h.b16 %v1139
        %v1172 = vunpack.c.l.b16 %v1140
        %v1173 = vunpack.c.h.b16 %v1140
        %v1174 = vunpack.c.l.b16 %v1141
        %v1175 = vunpack.c.h.b16 %v1141
        %v1176 = vunpack.c.l.b16 %v1142
        %v1177 = vunpack.c.h.b16 %v1142
        %v1178 = vunpack.c.l.b16 %v1143
        %v1179 = vunpack.c.h.b16 %v1143
        %v1180 = vpack.c.b16 %v1166, %v1164
        %v1181 = vpack.c.b16 %v1167, %v1165
        %v1182 = vpack.c.b16 %v1170, %v1168
        %v1183 = vpack.c.b16 %v1171, %v1169
        %v1184 = vpack.c.b16 %v1174, %v1172
        %v1185 = vpack.c.b16 %v1175, %v1173
        %v1186 = vpack.c.b16 %v1178, %v1176
        %v1187 = vpack.c.b16 %v1179, %v1177
        %vm1196 = vcmask 523264
        %v1198 = vsel %vm1196, %v1135, 0
        %1200 = vmatprep.subr.bf16.mxu0 %v1181
        %1201 = vmatpush1.bf16.msra.mxu0 %v1180
        %1202 = vmatprep.subr.bf16.mxu0 %v1183
        %1203 = vmatpush1.bf16.msra.mxu0 %v1182
        %1204 = vmatprep.subr.bf16.mxu0 %v1185
        %1205 = vmatpush1.bf16.msra.mxu0 %v1184
        %1206 = vmatprep.subr.bf16.mxu0 %v1187
        %1207 = vmatpush1.bf16.msra.mxu0 %v1186
        %1208 = vmatprep.subr.bf16.mxu0 0
        %1209 = vmatpush1.bf16.msra.mxu0 0
        %1210 = vmatprep.subr.bf16.mxu0 0
        %1211 = vmatpush1.bf16.msra.mxu0 0
        %1212 = vmatprep.subr.bf16.mxu0 0
        %1213 = vmatpush1.bf16.msra.mxu0 0
        %1214 = vmatprep.subr.bf16.mxu0 0
        %1215 = vmatpush1.bf16.msra.mxu0 0
        %1216 = vmatprep.subr.bf16.mxu0 0
        %1217 = vmatpush1.bf16.msra.mxu0 0
        %1218 = vmatprep.subr.bf16.mxu0 0
        %1219 = vmatpush1.bf16.msra.mxu0 0
        %1220 = vmatprep.subr.bf16.mxu0 0
        %1221 = vmatpush1.bf16.msra.mxu0 0
        %1222 = vmatprep.subr.bf16.mxu0 0
        %1223 = vmatpush1.bf16.msra.mxu0 0
        %1224 = vmatprep.subr.bf16.mxu0 0
        %1225 = vmatpush1.bf16.msra.mxu0 0
        %1226 = vmatprep.subr.bf16.mxu0 0
        %1227 = vmatpush1.bf16.msra.mxu0 0
        %1228 = vmatprep.subr.bf16.mxu0 0
        %1229 = vmatpush1.bf16.msra.mxu0 0
        %1230 = vmatprep.subr.bf16.mxu0 0
        %1231 = vmatpush1.bf16.msra.mxu0 0
        %1232 = vmatprep.mubr.bf16.mxu0 0
        %1233 = vmatmul.mubr.bf16.gmra.mrb[0].mxu0 %v1198
        %v1234 = vpop.f32.mrb[0].mxu0
        %v1235 = vadd.f32 %v1149, %v1234
        %v1236 = vpop.f32.mrb[0].mxu0
        %v1237 = vadd.f32 %v1153, %v1236
        %v1238 = vpop.f32.mrb[0].mxu0
        %v1239 = vadd.f32 %v1149, %v1238
        %v1240 = vpop.f32.mrb[0].mxu0
        %v1241 = vadd.f32 %v1153, %v1240
        %1242 = vdwg.mxu0
        %v1251 = vlaneseq
        %v1252 = vshrl.u32 %v1251, 7
        %v1253 = vsub.s32 0, %v1252
        %v1254 = vrot.slane %v1127, %v1253
        %v1255 = vlaneseq
        %v1256 = vshrl.u32 %v1255, 7
        %v1257 = vsub.s32 0, %v1256
        %v1258 = vrot.slane %v1128, %v1257
        %v1259 = vlaneseq
        %v1260 = vshrl.u32 %v1259, 7
        %v1261 = vsub.s32 0, %v1260
        %v1262 = vrot.slane %v1129, %v1261
        %v1263 = vlaneseq
        %v1264 = vshrl.u32 %v1263, 7
        %v1265 = vsub.s32 0, %v1264
        %v1266 = vrot.slane %v1130, %v1265
        %v1267 = vlaneseq
        %v1268 = vshrl.u32 %v1267, 7
        %v1269 = vsub.s32 0, %v1268
        %v1270 = vrot.slane %v1131, %v1269
        %v1271 = vlaneseq
        %v1272 = vshrl.u32 %v1271, 7
        %v1273 = vsub.s32 0, %v1272
        %v1274 = vrot.slane %v1132, %v1273
        %v1275 = vlaneseq
        %v1276 = vshrl.u32 %v1275, 7
        %v1277 = vsub.s32 0, %v1276
        %v1278 = vrot.slane %v1133, %v1277
        %v1279 = vlaneseq
        %v1280 = vshrl.u32 %v1279, 7
        %v1281 = vsub.s32 0, %v1280
        %v1282 = vrot.slane %v1134, %v1281
        %v1291 = vmul.f32 %v1235, %v1254
        %v1292 = vmul.f32 %v1235, %v1258
        %v1293 = vmul.f32 %v1235, %v1262
        %v1294 = vmul.f32 %v1235, %v1266
        %v1295 = vmul.f32 %v1235, %v1270
        %v1296 = vmul.f32 %v1235, %v1274
        %v1297 = vmul.f32 %v1235, %v1278
        %v1298 = vmul.f32 %v1235, %v1282
        %1300 = vrot.lane.b32.xlu0 %v1235, 64
        %v1301 = vpop.permute.xlu0 %1300
        %v1303 = vsel %vm1196, %v1291, 0
        %v1306 = vsel %vm1196, %v1292, 0
        %v1309 = vsel %vm1196, %v1293, 0
        %v1312 = vsel %vm1196, %v1294, 0
        %v1315 = vsel %vm1196, %v1295, 0
        %v1318 = vsel %vm1196, %v1296, 0
        %v1321 = vsel %vm1196, %v1297, 0
        %v1324 = vsel %vm1196, %v1298, 0
        %v1326 = vsel %vm1196, %v1301, 0
        %1328 = vmatprep.subr.mxu0 0.0
        %1329 = vmatpush1.xpose.msra.mxu0 %v1326
        %1330 = vmatprep.subr.mxu0 0.0
        %1331 = vmatpush1.xpose.msra.mxu0 0.0
        %1332 = vmatprep.subr.mxu0 0.0
        %1333 = vmatpush1.xpose.msra.mxu0 0.0
        %1334 = vmatprep.subr.mxu0 0.0
        %1335 = vmatpush1.xpose.msra.mxu0 0.0
        %1336 = vmatprep.subr.mxu0 0.0
        %1337 = vmatpush1.xpose.msra.mxu0 0.0
        %1338 = vmatprep.subr.mxu0 0.0
        %1339 = vmatpush1.xpose.msra.mxu0 0.0
        %1340 = vmatprep.subr.mxu0 0.0
        %1341 = vmatpush1.xpose.msra.mxu0 0.0
        %1342 = vmatprep.subr.mxu0 0.0
        %1343 = vmatpush1.xpose.msra.mxu0 0.0
        %1344 = vmatprep.subr.mxu0 0.0
        %1345 = vmatpush1.xpose.msra.mxu0 0.0
        %1346 = vmatprep.subr.mxu0 0.0
        %1347 = vmatpush1.xpose.msra.mxu0 0.0
        %1348 = vmatprep.subr.mxu0 0.0
        %1349 = vmatpush1.xpose.msra.mxu0 0.0
        %1350 = vmatprep.subr.mxu0 0.0
        %1351 = vmatpush1.xpose.msra.mxu0 0.0
        %1352 = vmatprep.subr.mxu0 0.0
        %1353 = vmatpush1.xpose.msra.mxu0 0.0
        %1354 = vmatprep.subr.mxu0 0.0
        %1355 = vmatpush1.xpose.msra.mxu0 0.0
        %1356 = vmatprep.subr.mxu0 0.0
        %1357 = vmatpush1.xpose.msra.mxu0 0.0
        %1358 = vmatprep.subr.mxu0 0.0
        %1359 = vmatpush1.xpose.msra.mxu0 0.0
        %1360 = vmatprep.subr.mxu0 0.0
        %1361 = vmatpush1.xpose.msra.mxu0 0.0
        %1362 = vmatprep.subr.mxu0 0.0
        %1363 = vmatpush1.xpose.msra.mxu0 0.0
        %1364 = vmatprep.subr.mxu0 0.0
        %1365 = vmatpush1.xpose.msra.mxu0 0.0
        %1366 = vmatprep.subr.mxu0 0.0
        %1367 = vmatpush1.xpose.msra.mxu0 0.0
        %1368 = vmatprep.subr.mxu0 0.0
        %1369 = vmatpush1.xpose.msra.mxu0 0.0
        %1370 = vmatprep.subr.mxu0 0.0
        %1371 = vmatpush1.xpose.msra.mxu0 0.0
        %1372 = vmatprep.subr.mxu0 0.0
        %1373 = vmatpush1.xpose.msra.mxu0 0.0
        %1374 = vmatprep.subr.mxu0 0.0
        %1375 = vmatpush1.xpose.msra.mxu0 0.0
        %1376 = vmatprep.subr.mxu0 0.0
        %1377 = vmatpush1.xpose.msra.mxu0 0.0
        %1378 = vmatprep.subr.mxu0 0.0
        %1379 = vmatpush1.xpose.msra.mxu0 0.0
        %1380 = vmatprep.subr.mxu0 0.0
        %1381 = vmatpush1.xpose.msra.mxu0 0.0
        %1382 = vmatprep.subr.mxu0 0.0
        %1383 = vmatpush1.xpose.msra.mxu0 0.0
        %1384 = vmatprep.subr.mxu0 0.0
        %1385 = vmatpush1.xpose.msra.mxu0 0.0
        %1386 = vmatprep.subr.mxu0 0.0
        %1387 = vmatpush1.xpose.msra.mxu0 0.0
        %1388 = vmatprep.subr.mxu0 0.0
        %1389 = vmatpush1.xpose.msra.mxu0 0.0
        %1390 = vmatprep.subr.mxu0 0.0
        %1391 = vmatpush1.xpose.msra.mxu0 0.0
        %1392 = vmatprep.mubr.f32.mxu0 0.0
        %1393 = vmatmul.mubr.f32.gmra.mrb[0].mxu0 %v1303
        %v1394 = vpop.f32.mrb[0].mxu0
        %v1395 = vadd.f32 0.0, %v1394
        %v1396 = vpop.f32.mrb[0].mxu0
        %1397 = vmatprep.mubr.f32.mxu0 0.0
        %1398 = vmatmul.mubr.f32.gmra.mrb[0].mxu0 %v1306
        %v1399 = vpop.f32.mrb[0].mxu0
        %v1400 = vadd.f32 0.0, %v1399
        %v1401 = vpop.f32.mrb[0].mxu0
        %1402 = vmatprep.mubr.f32.mxu0 0.0
        %1403 = vmatmul.mubr.f32.gmra.mrb[0].mxu0 %v1309
        %v1404 = vpop.f32.mrb[0].mxu0
        %v1405 = vadd.f32 0.0, %v1404
        %v1406 = vpop.f32.mrb[0].mxu0
        %1407 = vmatprep.mubr.f32.mxu0 0.0
        %1408 = vmatmul.mubr.f32.gmra.mrb[0].mxu0 %v1312
        %v1409 = vpop.f32.mrb[0].mxu0
        %v1410 = vadd.f32 0.0, %v1409
        %v1411 = vpop.f32.mrb[0].mxu0
        %1412 = vmatprep.mubr.f32.mxu0 0.0
        %1413 = vmatmul.mubr.f32.gmra.mrb[0].mxu0 %v1315
        %v1414 = vpop.f32.mrb[0].mxu0
        %v1415 = vadd.f32 0.0, %v1414
        %v1416 = vpop.f32.mrb[0].mxu0
        %1417 = vmatprep.mubr.f32.mxu0 0.0
        %1418 = vmatmul.mubr.f32.gmra.mrb[0].mxu0 %v1318
        %v1419 = vpop.f32.mrb[0].mxu0
        %v1420 = vadd.f32 0.0, %v1419
        %v1421 = vpop.f32.mrb[0].mxu0
        %1422 = vmatprep.mubr.f32.mxu0 0.0
        %1423 = vmatmul.mubr.f32.gmra.mrb[0].mxu0 %v1321
        %v1424 = vpop.f32.mrb[0].mxu0
        %v1425 = vadd.f32 0.0, %v1424
        %v1426 = vpop.f32.mrb[0].mxu0
        %1427 = vmatprep.mubr.f32.mxu0 0.0
        %1428 = vmatmul.mubr.f32.gmra.mrb[0].mxu0 %v1324
        %v1429 = vpop.f32.mrb[0].mxu0
        %v1430 = vadd.f32 0.0, %v1429
        %v1431 = vpop.f32.mrb[0].mxu0
        %1432 = vdwg.mxu0
        %v1433 = vmul.f32 %v1395, 0.35355338
        %v1434 = vmul.f32 %v1400, 0.35355338
        %v1435 = vmul.f32 %v1405, 0.35355338
        %v1436 = vmul.f32 %v1410, 0.35355338
        %v1437 = vmul.f32 %v1415, 0.35355338
        %v1438 = vmul.f32 %v1420, 0.35355338
        %v1439 = vmul.f32 %v1425, 0.35355338
        %v1440 = vmul.f32 %v1430, 0.35355338
        %vm1441 = vcmask 64512
        %v1442 = vsel %vm1441, %v1433, -inf
        %1443 = vmax.xlane.f32.xlu0 %v1442
        %v1444 = vpop.xlane.xlu0 %1443
        %v1445 = vsel %vm1441, %v1434, -inf
        %1446 = vmax.xlane.f32.xlu0 %v1445
        %v1447 = vpop.xlane.xlu0 %1446
        %v1448 = vsel %vm1441, %v1435, -inf
        %1449 = vmax.xlane.f32.xlu0 %v1448
        %v1450 = vpop.xlane.xlu0 %1449
        %v1451 = vsel %vm1441, %v1436, -inf
        %1452 = vmax.xlane.f32.xlu0 %v1451
        %v1453 = vpop.xlane.xlu0 %1452
        %v1454 = vsel %vm1441, %v1437, -inf
        %1455 = vmax.xlane.f32.xlu0 %v1454
        %v1456 = vpop.xlane.xlu0 %1455
        %v1457 = vsel %vm1441, %v1438, -inf
        %1458 = vmax.xlane.f32.xlu0 %v1457
        %v1459 = vpop.xlane.xlu0 %1458
        %v1460 = vsel %vm1441, %v1439, -inf
        %1461 = vmax.xlane.f32.xlu0 %v1460
        %v1462 = vpop.xlane.xlu0 %1461
        %v1463 = vsel %vm1441, %v1440, -inf
        %1464 = vmax.xlane.f32.xlu0 %v1463
        %v1465 = vpop.xlane.xlu0 %1464
        %v1466 = vsub.f32 %v1433, %v1444
        %v1467 = vsub.f32 %v1434, %v1447
        %v1468 = vsub.f32 %v1435, %v1450
        %v1469 = vsub.f32 %v1436, %v1453
        %v1470 = vsub.f32 %v1437, %v1456
        %v1471 = vsub.f32 %v1438, %v1459
        %v1472 = vsub.f32 %v1439, %v1462
        %v1473 = vsub.f32 %v1440, %v1465
        %v1474 = vmul.f32 %v1466, 1.442695
        %v1475 = vpow.pop %v1474
        %v1476 = vmul.f32 %v1467, 1.442695
        %v1477 = vpow.pop %v1476
        %v1478 = vmul.f32 %v1468, 1.442695
        %v1479 = vpow.pop %v1478
        %v1480 = vmul.f32 %v1469, 1.442695
        %v1481 = vpow.pop %v1480
        %v1482 = vmul.f32 %v1470, 1.442695
        %v1483 = vpow.pop %v1482
        %v1484 = vmul.f32 %v1471, 1.442695
        %v1485 = vpow.pop %v1484
        %v1486 = vmul.f32 %v1472, 1.442695
        %v1487 = vpow.pop %v1486
        %v1488 = vmul.f32 %v1473, 1.442695
        %v1489 = vpow.pop %v1488
        %v1490 = vsel %vm1441, %v1475, 0.0
        %1491 = vadd.xlane.f32.xlu0 %v1490
        %v1492 = vpop.xlane.xlu0 %1491
        %v1493 = vsel %vm1441, %v1477, 0.0
        %1494 = vadd.xlane.f32.xlu0 %v1493
        %v1495 = vpop.xlane.xlu0 %1494
        %v1496 = vsel %vm1441, %v1479, 0.0
        %1497 = vadd.xlane.f32.xlu0 %v1496
        %v1498 = vpop.xlane.xlu0 %1497
        %v1499 = vsel %vm1441, %v1481, 0.0
        %1500 = vadd.xlane.f32.xlu0 %v1499
        %v1501 = vpop.xlane.xlu0 %1500
        %v1502 = vsel %vm1441, %v1483, 0.0
        %1503 = vadd.xlane.f32.xlu0 %v1502
        %v1504 = vpop.xlane.xlu0 %1503
        %v1505 = vsel %vm1441, %v1485, 0.0
        %1506 = vadd.xlane.f32.xlu0 %v1505
        %v1507 = vpop.xlane.xlu0 %1506
        %v1508 = vsel %vm1441, %v1487, 0.0
        %1509 = vadd.xlane.f32.xlu0 %v1508
        %v1510 = vpop.xlane.xlu0 %1509
        %v1511 = vsel %vm1441, %v1489, 0.0
        %1512 = vadd.xlane.f32.xlu0 %v1511
        %v1513 = vpop.xlane.xlu0 %1512
        %v1514 = vrcp.pop %v1492
        %v1515 = vmul.f32 %v1475, %v1514
        %v1516 = vrcp.pop %v1495
        %v1517 = vmul.f32 %v1477, %v1516
        %v1518 = vrcp.pop %v1498
        %v1519 = vmul.f32 %v1479, %v1518
        %v1520 = vrcp.pop %v1501
        %v1521 = vmul.f32 %v1481, %v1520
        %v1522 = vrcp.pop %v1504
        %v1523 = vmul.f32 %v1483, %v1522
        %v1524 = vrcp.pop %v1507
        %v1525 = vmul.f32 %v1485, %v1524
        %v1526 = vrcp.pop %v1510
        %v1527 = vmul.f32 %v1487, %v1526
        %v1528 = vrcp.pop %v1513
        %v1529 = vmul.f32 %v1489, %v1528
        %v1531 = vsel %vm1441, %v1515, 0
        %v1534 = vsel %vm1441, %v1517, 0
        %v1537 = vsel %vm1441, %v1519, 0
        %v1540 = vsel %vm1441, %v1521, 0
        %v1543 = vsel %vm1441, %v1523, 0
        %v1546 = vsel %vm1441, %v1525, 0
        %v1549 = vsel %vm1441, %v1527, 0
        %v1552 = vsel %vm1441, %v1529, 0
        %1554 = vmatprep.subr.mxu0 0.0
        %1555 = vmatpush1.msra.mxu0 %v1237
        %1556 = vmatprep.subr.mxu0 0.0
        %1557 = vmatpush1.msra.mxu0 0.0
        %1558 = vmatprep.subr.mxu0 0.0
        %1559 = vmatpush1.msra.mxu0 0.0
        %1560 = vmatprep.subr.mxu0 0.0
        %1561 = vmatpush1.msra.mxu0 0.0
        %1562 = vmatprep.subr.mxu0 0.0
        %1563 = vmatpush1.msra.mxu0 0.0
        %1564 = vmatprep.subr.mxu0 0.0
        %1565 = vmatpush1.msra.mxu0 0.0
        %1566 = vmatprep.subr.mxu0 0.0
        %1567 = vmatpush1.msra.mxu0 0.0
        %1568 = vmatprep.subr.mxu0 0.0
        %1569 = vmatpush1.msra.mxu0 0.0
        %1570 = vmatprep.subr.mxu0 0.0
        %1571 = vmatpush1.msra.mxu0 0.0
        %1572 = vmatprep.subr.mxu0 0.0
        %1573 = vmatpush1.msra.mxu0 0.0
        %1574 = vmatprep.subr.mxu0 0.0
        %1575 = vmatpush1.msra.mxu0 0.0
        %1576 = vmatprep.subr.mxu0 0.0
        %1577 = vmatpush1.msra.mxu0 0.0
        %1578 = vmatprep.subr.mxu0 0.0
        %1579 = vmatpush1.msra.mxu0 0.0
        %1580 = vmatprep.subr.mxu0 0.0
        %1581 = vmatpush1.msra.mxu0 0.0
        %1582 = vmatprep.subr.mxu0 0.0
        %1583 = vmatpush1.msra.mxu0 0.0
        %1584 = vmatprep.subr.mxu0 0.0
        %1585 = vmatpush1.msra.mxu0 0.0
        %1586 = vmatprep.subr.mxu0 0.0
        %1587 = vmatpush1.msra.mxu0 0.0
        %1588 = vmatprep.subr.mxu0 0.0
        %1589 = vmatpush1.msra.mxu0 0.0
        %1590 = vmatprep.subr.mxu0 0.0
        %1591 = vmatpush1.msra.mxu0 0.0
        %1592 = vmatprep.subr.mxu0 0.0
        %1593 = vmatpush1.msra.mxu0 0.0
        %1594 = vmatprep.subr.mxu0 0.0
        %1595 = vmatpush1.msra.mxu0 0.0
        %1596 = vmatprep.subr.mxu0 0.0
        %1597 = vmatpush1.msra.mxu0 0.0
        %1598 = vmatprep.subr.mxu0 0.0
        %1599 = vmatpush1.msra.mxu0 0.0
        %1600 = vmatprep.subr.mxu0 0.0
        %1601 = vmatpush1.msra.mxu0 0.0
        %1602 = vmatprep.subr.mxu0 0.0
        %1603 = vmatpush1.msra.mxu0 0.0
        %1604 = vmatprep.subr.mxu0 0.0
        %1605 = vmatpush1.msra.mxu0 0.0
        %1606 = vmatprep.subr.mxu0 0.0
        %1607 = vmatpush1.msra.mxu0 0.0
        %1608 = vmatprep.subr.mxu0 0.0
        %1609 = vmatpush1.msra.mxu0 0.0
        %1610 = vmatprep.subr.mxu0 0.0
        %1611 = vmatpush1.msra.mxu0 0.0
        %1612 = vmatprep.subr.mxu0 0.0
        %1613 = vmatpush1.msra.mxu0 0.0
        %1614 = vmatprep.subr.mxu0 0.0
        %1615 = vmatpush1.msra.mxu0 0.0
        %1616 = vmatprep.subr.mxu0 0.0
        %1617 = vmatpush1.msra.mxu0 0.0
        %1618 = vmatprep.mubr.f32.mxu0 0.0
        %1619 = vmatmul.mubr.f32.gmra.mrb[0].mxu0 %v1531
        %v1620 = vpop.f32.mrb[0].mxu0
        %v1621 = vadd.f32 0.0, %v1620
        %v1622 = vpop.f32.mrb[0].mxu0
        %1623 = vmatprep.mubr.f32.mxu0 0.0
        %1624 = vmatmul.mubr.f32.gmra.mrb[0].mxu0 %v1534
        %v1625 = vpop.f32.mrb[0].mxu0
        %v1626 = vadd.f32 0.0, %v1625
        %v1627 = vpop.f32.mrb[0].mxu0
        %1628 = vmatprep.mubr.f32.mxu0 0.0
        %1629 = vmatmul.mubr.f32.gmra.mrb[0].mxu0 %v1537
        %v1630 = vpop.f32.mrb[0].mxu0
        %v1631 = vadd.f32 0.0, %v1630
        %v1632 = vpop.f32.mrb[0].mxu0
        %1633 = vmatprep.mubr.f32.mxu0 0.0
        %1634 = vmatmul.mubr.f32.gmra.mrb[0].mxu0 %v1540
        %v1635 = vpop.f32.mrb[0].mxu0
        %v1636 = vadd.f32 0.0, %v1635
        %v1637 = vpop.f32.mrb[0].mxu0
        %1638 = vmatprep.mubr.f32.mxu0 0.0
        %1639 = vmatmul.mubr.f32.gmra.mrb[0].mxu0 %v1543
        %v1640 = vpop.f32.mrb[0].mxu0
        %v1641 = vadd.f32 0.0, %v1640
        %v1642 = vpop.f32.mrb[0].mxu0
        %1643 = vmatprep.mubr.f32.mxu0 0.0
        %1644 = vmatmul.mubr.f32.gmra.mrb[0].mxu0 %v1546
        %v1645 = vpop.f32.mrb[0].mxu0
        %v1646 = vadd.f32 0.0, %v1645
        %v1647 = vpop.f32.mrb[0].mxu0
        %1648 = vmatprep.mubr.f32.mxu0 0.0
        %1649 = vmatmul.mubr.f32.gmra.mrb[0].mxu0 %v1549
        %v1650 = vpop.f32.mrb[0].mxu0
        %v1651 = vadd.f32 0.0, %v1650
        %v1652 = vpop.f32.mrb[0].mxu0
        %1653 = vmatprep.mubr.f32.mxu0 0.0
        %1654 = vmatmul.mubr.f32.gmra.mrb[0].mxu0 %v1552
        %v1655 = vpop.f32.mrb[0].mxu0
        %v1656 = vadd.f32 0.0, %v1655
        %v1657 = vpop.f32.mrb[0].mxu0
        %1658 = vdwg.mxu0
        %v1659 = vmul.f32 %v1621, %v1254
        %v1660 = vmul.f32 %v1626, %v1258
        %v1661 = vmul.f32 %v1631, %v1262
        %v1662 = vmul.f32 %v1636, %v1266
        %v1663 = vmul.f32 %v1641, %v1270
        %v1664 = vmul.f32 %v1646, %v1274
        %v1665 = vmul.f32 %v1651, %v1278
        %v1666 = vmul.f32 %v1656, %v1282
        %v1667 = vsel %vm1196, %v1659, 0.0
        %v1668 = vsel %vm1196, %v1660, 0.0
        %v1669 = vadd.f32 %v1667, %v1668
        %v1670 = vsel %vm1196, %v1661, 0.0
        %v1671 = vadd.f32 %v1669, %v1670
        %v1672 = vsel %vm1196, %v1662, 0.0
        %v1673 = vadd.f32 %v1671, %v1672
        %v1674 = vsel %vm1196, %v1663, 0.0
        %v1675 = vadd.f32 %v1673, %v1674
        %v1676 = vsel %vm1196, %v1664, 0.0
        %v1677 = vadd.f32 %v1675, %v1676
        %v1678 = vsel %vm1196, %v1665, 0.0
        %v1679 = vadd.f32 %v1677, %v1678
        %v1680 = vsel %vm1196, %v1666, 0.0
        %v1681 = vadd.f32 %v1679, %v1680
        %v1682 = vmul.f32 %v1239, %v1254
        %v1683 = vmul.f32 %v1239, %v1258
        %v1684 = vmul.f32 %v1239, %v1262
        %v1685 = vmul.f32 %v1239, %v1266
        %v1686 = vmul.f32 %v1239, %v1270
        %v1687 = vmul.f32 %v1239, %v1274
        %v1688 = vmul.f32 %v1239, %v1278
        %v1689 = vmul.f32 %v1239, %v1282
        %1691 = vrot.lane.b32.xlu0 %v1239, 64
        %v1692 = vpop.permute.xlu0 %1691
        %v1694 = vsel %vm1196, %v1682, 0
        %v1697 = vsel %vm1196, %v1683, 0
        %v1700 = vsel %vm1196, %v1684, 0
        %v1703 = vsel %vm1196, %v1685, 0
        %v1706 = vsel %vm1196, %v1686, 0
        %v1709 = vsel %vm1196, %v1687, 0
        %v1712 = vsel %vm1196, %v1688, 0
        %v1715 = vsel %vm1196, %v1689, 0
        %v1717 = vsel %vm1196, %v1692, 0
        %1719 = vmatprep.subr.mxu0 0.0
        %1720 = vmatpush1.xpose.msra.mxu0 %v1717
        %1721 = vmatprep.subr.mxu0 0.0
        %1722 = vmatpush1.xpose.msra.mxu0 0.0
        %1723 = vmatprep.subr.mxu0 0.0
        %1724 = vmatpush1.xpose.msra.mxu0 0.0
        %1725 = vmatprep.subr.mxu0 0.0
        %1726 = vmatpush1.xpose.msra.mxu0 0.0
        %1727 = vmatprep.subr.mxu0 0.0
        %1728 = vmatpush1.xpose.msra.mxu0 0.0
        %1729 = vmatprep.subr.mxu0 0.0
        %1730 = vmatpush1.xpose.msra.mxu0 0.0
        %1731 = vmatprep.subr.mxu0 0.0
        %1732 = vmatpush1.xpose.msra.mxu0 0.0
        %1733 = vmatprep.subr.mxu0 0.0
        %1734 = vmatpush1.xpose.msra.mxu0 0.0
        %1735 = vmatprep.subr.mxu0 0.0
        %1736 = vmatpush1.xpose.msra.mxu0 0.0
        %1737 = vmatprep.subr.mxu0 0.0
        %1738 = vmatpush1.xpose.msra.mxu0 0.0
        %1739 = vmatprep.subr.mxu0 0.0
        %1740 = vmatpush1.xpose.msra.mxu0 0.0
        %1741 = vmatprep.subr.mxu0 0.0
        %1742 = vmatpush1.xpose.msra.mxu0 0.0
        %1743 = vmatprep.subr.mxu0 0.0
        %1744 = vmatpush1.xpose.msra.mxu0 0.0
        %1745 = vmatprep.subr.mxu0 0.0
        %1746 = vmatpush1.xpose.msra.mxu0 0.0
        %1747 = vmatprep.subr.mxu0 0.0
        %1748 = vmatpush1.xpose.msra.mxu0 0.0
        %1749 = vmatprep.subr.mxu0 0.0
        %1750 = vmatpush1.xpose.msra.mxu0 0.0
        %1751 = vmatprep.subr.mxu0 0.0
        %1752 = vmatpush1.xpose.msra.mxu0 0.0
        %1753 = vmatprep.subr.mxu0 0.0
        %1754 = vmatpush1.xpose.msra.mxu0 0.0
        %1755 = vmatprep.subr.mxu0 0.0
        %1756 = vmatpush1.xpose.msra.mxu0 0.0
        %1757 = vmatprep.subr.mxu0 0.0
        %1758 = vmatpush1.xpose.msra.mxu0 0.0
        %1759 = vmatprep.subr.mxu0 0.0
        %1760 = vmatpush1.xpose.msra.mxu0 0.0
        %1761 = vmatprep.subr.mxu0 0.0
        %1762 = vmatpush1.xpose.msra.mxu0 0.0
        %1763 = vmatprep.subr.mxu0 0.0
        %1764 = vmatpush1.xpose.msra.mxu0 0.0
        %1765 = vmatprep.subr.mxu0 0.0
        %1766 = vmatpush1.xpose.msra.mxu0 0.0
        %1767 = vmatprep.subr.mxu0 0.0
        %1768 = vmatpush1.xpose.msra.mxu0 0.0
        %1769 = vmatprep.subr.mxu0 0.0
        %1770 = vmatpush1.xpose.msra.mxu0 0.0
        %1771 = vmatprep.subr.mxu0 0.0
        %1772 = vmatpush1.xpose.msra.mxu0 0.0
        %1773 = vmatprep.subr.mxu0 0.0
        %1774 = vmatpush1.xpose.msra.mxu0 0.0
        %1775 = vmatprep.subr.mxu0 0.0
        %1776 = vmatpush1.xpose.msra.mxu0 0.0
        %1777 = vmatprep.subr.mxu0 0.0
        %1778 = vmatpush1.xpose.msra.mxu0 0.0
        %1779 = vmatprep.subr.mxu0 0.0
        %1780 = vmatpush1.xpose.msra.mxu0 0.0
        %1781 = vmatprep.subr.mxu0 0.0
        %1782 = vmatpush1.xpose.msra.mxu0 0.0
        %1783 = vmatprep.mubr.f32.mxu0 0.0
        %1784 = vmatmul.mubr.f32.gmra.mrb[0].mxu0 %v1694
        %v1785 = vpop.f32.mrb[0].mxu0
        %v1786 = vadd.f32 0.0, %v1785
        %v1787 = vpop.f32.mrb[0].mxu0
        %1788 = vmatprep.mubr.f32.mxu0 0.0
        %1789 = vmatmul.mubr.f32.gmra.mrb[0].mxu0 %v1697
        %v1790 = vpop.f32.mrb[0].mxu0
        %v1791 = vadd.f32 0.0, %v1790
        %v1792 = vpop.f32.mrb[0].mxu0
        %1793 = vmatprep.mubr.f32.mxu0 0.0
        %1794 = vmatmul.mubr.f32.gmra.mrb[0].mxu0 %v1700
        %v1795 = vpop.f32.mrb[0].mxu0
        %v1796 = vadd.f32 0.0, %v1795
        %v1797 = vpop.f32.mrb[0].mxu0
        %1798 = vmatprep.mubr.f32.mxu0 0.0
        %1799 = vmatmul.mubr.f32.gmra.mrb[0].mxu0 %v1703
        %v1800 = vpop.f32.mrb[0].mxu0
        %v1801 = vadd.f32 0.0, %v1800
        %v1802 = vpop.f32.mrb[0].mxu0
        %1803 = vmatprep.mubr.f32.mxu0 0.0
        %1804 = vmatmul.mubr.f32.gmra.mrb[0].mxu0 %v1706
        %v1805 = vpop.f32.mrb[0].mxu0
        %v1806 = vadd.f32 0.0, %v1805
        %v1807 = vpop.f32.mrb[0].mxu0
        %1808 = vmatprep.mubr.f32.mxu0 0.0
        %1809 = vmatmul.mubr.f32.gmra.mrb[0].mxu0 %v1709
        %v1810 = vpop.f32.mrb[0].mxu0
        %v1811 = vadd.f32 0.0, %v1810
        %v1812 = vpop.f32.mrb[0].mxu0
        %1813 = vmatprep.mubr.f32.mxu0 0.0
        %1814 = vmatmul.mubr.f32.gmra.mrb[0].mxu0 %v1712
        %v1815 = vpop.f32.mrb[0].mxu0
        %v1816 = vadd.f32 0.0, %v1815
        %v1817 = vpop.f32.mrb[0].mxu0
        %1818 = vmatprep.mubr.f32.mxu0 0.0
        %1819 = vmatmul.mubr.f32.gmra.mrb[0].mxu0 %v1715
        %v1820 = vpop.f32.mrb[0].mxu0
        %v1821 = vadd.f32 0.0, %v1820
        %v1822 = vpop.f32.mrb[0].mxu0
        %1823 = vdwg.mxu0
        %v1824 = vmul.f32 %v1786, 0.35355338
        %v1825 = vmul.f32 %v1791, 0.35355338
        %v1826 = vmul.f32 %v1796, 0.35355338
        %v1827 = vmul.f32 %v1801, 0.35355338
        %v1828 = vmul.f32 %v1806, 0.35355338
        %v1829 = vmul.f32 %v1811, 0.35355338
        %v1830 = vmul.f32 %v1816, 0.35355338
        %v1831 = vmul.f32 %v1821, 0.35355338
        %v1832 = vsel %vm1441, %v1824, -inf
        %1833 = vmax.xlane.f32.xlu0 %v1832
        %v1834 = vpop.xlane.xlu0 %1833
        %v1835 = vsel %vm1441, %v1825, -inf
        %1836 = vmax.xlane.f32.xlu0 %v1835
        %v1837 = vpop.xlane.xlu0 %1836
        %v1838 = vsel %vm1441, %v1826, -inf
        %1839 = vmax.xlane.f32.xlu0 %v1838
        %v1840 = vpop.xlane.xlu0 %1839
        %v1841 = vsel %vm1441, %v1827, -inf
        %1842 = vmax.xlane.f32.xlu0 %v1841
        %v1843 = vpop.xlane.xlu0 %1842
        %v1844 = vsel %vm1441, %v1828, -inf
        %1845 = vmax.xlane.f32.xlu0 %v1844
        %v1846 = vpop.xlane.xlu0 %1845
        %v1847 = vsel %vm1441, %v1829, -inf
        %1848 = vmax.xlane.f32.xlu0 %v1847
        %v1849 = vpop.xlane.xlu0 %1848
        %v1850 = vsel %vm1441, %v1830, -inf
        %1851 = vmax.xlane.f32.xlu0 %v1850
        %v1852 = vpop.xlane.xlu0 %1851
        %v1853 = vsel %vm1441, %v1831, -inf
        %1854 = vmax.xlane.f32.xlu0 %v1853
        %v1855 = vpop.xlane.xlu0 %1854
        %v1856 = vsub.f32 %v1824, %v1834
        %v1857 = vsub.f32 %v1825, %v1837
        %v1858 = vsub.f32 %v1826, %v1840
        %v1859 = vsub.f32 %v1827, %v1843
        %v1860 = vsub.f32 %v1828, %v1846
        %v1861 = vsub.f32 %v1829, %v1849
        %v1862 = vsub.f32 %v1830, %v1852
        %v1863 = vsub.f32 %v1831, %v1855
        %v1864 = vmul.f32 %v1856, 1.442695
        %v1865 = vpow.pop %v1864
        %v1866 = vmul.f32 %v1857, 1.442695
        %v1867 = vpow.pop %v1866
        %v1868 = vmul.f32 %v1858, 1.442695
        %v1869 = vpow.pop %v1868
        %v1870 = vmul.f32 %v1859, 1.442695
        %v1871 = vpow.pop %v1870
        %v1872 = vmul.f32 %v1860, 1.442695
        %v1873 = vpow.pop %v1872
        %v1874 = vmul.f32 %v1861, 1.442695
        %v1875 = vpow.pop %v1874
        %v1876 = vmul.f32 %v1862, 1.442695
        %v1877 = vpow.pop %v1876
        %v1878 = vmul.f32 %v1863, 1.442695
        %v1879 = vpow.pop %v1878
        %v1880 = vsel %vm1441, %v1865, 0.0
        %1881 = vadd.xlane.f32.xlu0 %v1880
        %v1882 = vpop.xlane.xlu0 %1881
        %v1883 = vsel %vm1441, %v1867, 0.0
        %1884 = vadd.xlane.f32.xlu0 %v1883
        %v1885 = vpop.xlane.xlu0 %1884
        %v1886 = vsel %vm1441, %v1869, 0.0
        %1887 = vadd.xlane.f32.xlu0 %v1886
        %v1888 = vpop.xlane.xlu0 %1887
        %v1889 = vsel %vm1441, %v1871, 0.0
        %1890 = vadd.xlane.f32.xlu0 %v1889
        %v1891 = vpop.xlane.xlu0 %1890
        %v1892 = vsel %vm1441, %v1873, 0.0
        %1893 = vadd.xlane.f32.xlu0 %v1892
        %v1894 = vpop.xlane.xlu0 %1893
        %v1895 = vsel %vm1441, %v1875, 0.0
        %1896 = vadd.xlane.f32.xlu0 %v1895
        %v1897 = vpop.xlane.xlu0 %1896
        %v1898 = vsel %vm1441, %v1877, 0.0
        %1899 = vadd.xlane.f32.xlu0 %v1898
        %v1900 = vpop.xlane.xlu0 %1899
        %v1901 = vsel %vm1441, %v1879, 0.0
        %1902 = vadd.xlane.f32.xlu0 %v1901
        %v1903 = vpop.xlane.xlu0 %1902
        %v1904 = vrcp.pop %v1882
        %v1905 = vmul.f32 %v1865, %v1904
        %v1906 = vrcp.pop %v1885
        %v1907 = vmul.f32 %v1867, %v1906
        %v1908 = vrcp.pop %v1888
        %v1909 = vmul.f32 %v1869, %v1908
        %v1910 = vrcp.pop %v1891
        %v1911 = vmul.f32 %v1871, %v1910
        %v1912 = vrcp.pop %v1894
        %v1913 = vmul.f32 %v1873, %v1912
        %v1914 = vrcp.pop %v1897
        %v1915 = vmul.f32 %v1875, %v1914
        %v1916 = vrcp.pop %v1900
        %v1917 = vmul.f32 %v1877, %v1916
        %v1918 = vrcp.pop %v1903
        %v1919 = vmul.f32 %v1879, %v1918
        %v1921 = vsel %vm1441, %v1905, 0
        %v1924 = vsel %vm1441, %v1907, 0
        %v1927 = vsel %vm1441, %v1909, 0
        %v1930 = vsel %vm1441, %v1911, 0
        %v1933 = vsel %vm1441, %v1913, 0
        %v1936 = vsel %vm1441, %v1915, 0
        %v1939 = vsel %vm1441, %v1917, 0
        %v1942 = vsel %vm1441, %v1919, 0
        %1944 = vmatprep.subr.mxu0 0.0
        %1945 = vmatpush1.msra.mxu0 %v1241
        %1946 = vmatprep.subr.mxu0 0.0
        %1947 = vmatpush1.msra.mxu0 0.0
        %1948 = vmatprep.subr.mxu0 0.0
        %1949 = vmatpush1.msra.mxu0 0.0
        %1950 = vmatprep.subr.mxu0 0.0
        %1951 = vmatpush1.msra.mxu0 0.0
        %1952 = vmatprep.subr.mxu0 0.0
        %1953 = vmatpush1.msra.mxu0 0.0
        %1954 = vmatprep.subr.mxu0 0.0
        %1955 = vmatpush1.msra.mxu0 0.0
        %1956 = vmatprep.subr.mxu0 0.0
        %1957 = vmatpush1.msra.mxu0 0.0
        %1958 = vmatprep.subr.mxu0 0.0
        %1959 = vmatpush1.msra.mxu0 0.0
        %1960 = vmatprep.subr.mxu0 0.0
        %1961 = vmatpush1.msra.mxu0 0.0
        %1962 = vmatprep.subr.mxu0 0.0
        %1963 = vmatpush1.msra.mxu0 0.0
        %1964 = vmatprep.subr.mxu0 0.0
        %1965 = vmatpush1.msra.mxu0 0.0
        %1966 = vmatprep.subr.mxu0 0.0
        %1967 = vmatpush1.msra.mxu0 0.0
        %1968 = vmatprep.subr.mxu0 0.0
        %1969 = vmatpush1.msra.mxu0 0.0
        %1970 = vmatprep.subr.mxu0 0.0
        %1971 = vmatpush1.msra.mxu0 0.0
        %1972 = vmatprep.subr.mxu0 0.0
        %1973 = vmatpush1.msra.mxu0 0.0
        %1974 = vmatprep.subr.mxu0 0.0
        %1975 = vmatpush1.msra.mxu0 0.0
        %1976 = vmatprep.subr.mxu0 0.0
        %1977 = vmatpush1.msra.mxu0 0.0
        %1978 = vmatprep.subr.mxu0 0.0
        %1979 = vmatpush1.msra.mxu0 0.0
        %1980 = vmatprep.subr.mxu0 0.0
        %1981 = vmatpush1.msra.mxu0 0.0
        %1982 = vmatprep.subr.mxu0 0.0
        %1983 = vmatpush1.msra.mxu0 0.0
        %1984 = vmatprep.subr.mxu0 0.0
        %1985 = vmatpush1.msra.mxu0 0.0
        %1986 = vmatprep.subr.mxu0 0.0
        %1987 = vmatpush1.msra.mxu0 0.0
        %1988 = vmatprep.subr.mxu0 0.0
        %1989 = vmatpush1.msra.mxu0 0.0
        %1990 = vmatprep.subr.mxu0 0.0
        %1991 = vmatpush1.msra.mxu0 0.0
        %1992 = vmatprep.subr.mxu0 0.0
        %1993 = vmatpush1.msra.mxu0 0.0
        %1994 = vmatprep.subr.mxu0 0.0
        %1995 = vmatpush1.msra.mxu0 0.0
        %1996 = vmatprep.subr.mxu0 0.0
        %1997 = vmatpush1.msra.mxu0 0.0
        %1998 = vmatprep.subr.mxu0 0.0
        %1999 = vmatpush1.msra.mxu0 0.0
        %2000 = vmatprep.subr.mxu0 0.0
        %2001 = vmatpush1.msra.mxu0 0.0
        %2002 = vmatprep.subr.mxu0 0.0
        %2003 = vmatpush1.msra.mxu0 0.0
        %2004 = vmatprep.subr.mxu0 0.0
        %2005 = vmatpush1.msra.mxu0 0.0
        %2006 = vmatprep.subr.mxu0 0.0
        %2007 = vmatpush1.msra.mxu0 0.0
        %2008 = vmatprep.mubr.f32.mxu0 0.0
        %2009 = vmatmul.mubr.f32.gmra.mrb[0].mxu0 %v1921
        %v2010 = vpop.f32.mrb[0].mxu0
        %v2011 = vadd.f32 0.0, %v2010
        %v2012 = vpop.f32.mrb[0].mxu0
        %2013 = vmatprep.mubr.f32.mxu0 0.0
        %2014 = vmatmul.mubr.f32.gmra.mrb[0].mxu0 %v1924
        %v2015 = vpop.f32.mrb[0].mxu0
        %v2016 = vadd.f32 0.0, %v2015
        %v2017 = vpop.f32.mrb[0].mxu0
        %2018 = vmatprep.mubr.f32.mxu0 0.0
        %2019 = vmatmul.mubr.f32.gmra.mrb[0].mxu0 %v1927
        %v2020 = vpop.f32.mrb[0].mxu0
        %v2021 = vadd.f32 0.0, %v2020
        %v2022 = vpop.f32.mrb[0].mxu0
        %2023 = vmatprep.mubr.f32.mxu0 0.0
        %2024 = vmatmul.mubr.f32.gmra.mrb[0].mxu0 %v1930
        %v2025 = vpop.f32.mrb[0].mxu0
        %v2026 = vadd.f32 0.0, %v2025
        %v2027 = vpop.f32.mrb[0].mxu0
        %2028 = vmatprep.mubr.f32.mxu0 0.0
        %2029 = vmatmul.mubr.f32.gmra.mrb[0].mxu0 %v1933
        %v2030 = vpop.f32.mrb[0].mxu0
        %v2031 = vadd.f32 0.0, %v2030
        %v2032 = vpop.f32.mrb[0].mxu0
        %2033 = vmatprep.mubr.f32.mxu0 0.0
        %2034 = vmatmul.mubr.f32.gmra.mrb[0].mxu0 %v1936
        %v2035 = vpop.f32.mrb[0].mxu0
        %v2036 = vadd.f32 0.0, %v2035
        %v2037 = vpop.f32.mrb[0].mxu0
        %2038 = vmatprep.mubr.f32.mxu0 0.0
        %2039 = vmatmul.mubr.f32.gmra.mrb[0].mxu0 %v1939
        %v2040 = vpop.f32.mrb[0].mxu0
        %v2041 = vadd.f32 0.0, %v2040
        %v2042 = vpop.f32.mrb[0].mxu0
        %2043 = vmatprep.mubr.f32.mxu0 0.0
        %2044 = vmatmul.mubr.f32.gmra.mrb[0].mxu0 %v1942
        %v2045 = vpop.f32.mrb[0].mxu0
        %v2046 = vadd.f32 0.0, %v2045
        %v2047 = vpop.f32.mrb[0].mxu0
        %2048 = vdwg.mxu0
        %v2049 = vmul.f32 %v2011, %v1254
        %v2050 = vmul.f32 %v2016, %v1258
        %v2051 = vmul.f32 %v2021, %v1262
        %v2052 = vmul.f32 %v2026, %v1266
        %v2053 = vmul.f32 %v2031, %v1270
        %v2054 = vmul.f32 %v2036, %v1274
        %v2055 = vmul.f32 %v2041, %v1278
        %v2056 = vmul.f32 %v2046, %v1282
        %v2057 = vsel %vm1196, %v2049, 0.0
        %v2058 = vsel %vm1196, %v2050, 0.0
        %v2059 = vadd.f32 %v2057, %v2058
        %v2060 = vsel %vm1196, %v2051, 0.0
        %v2061 = vadd.f32 %v2059, %v2060
        %v2062 = vsel %vm1196, %v2052, 0.0
        %v2063 = vadd.f32 %v2061, %v2062
        %v2064 = vsel %vm1196, %v2053, 0.0
        %v2065 = vadd.f32 %v2063, %v2064
        %v2066 = vsel %vm1196, %v2054, 0.0
        %v2067 = vadd.f32 %v2065, %v2066
        %v2068 = vsel %vm1196, %v2055, 0.0
        %v2069 = vadd.f32 %v2067, %v2068
        %v2070 = vsel %vm1196, %v2056, 0.0
        %v2071 = vadd.f32 %v2069, %v2070
        %v2072 = vpack.c.bf16 %v2071, %v1681
        %v2073 = vld [vmem:[%s896] sm:$0xf]
        %v2074 = vld [vmem:[%s896 + $0x4] sm:$0xf]
        %v2075 = vld [vmem:[%s896 + $0x8] sm:$0xf]
        %v2076 = vld [vmem:[%s896 + $0xc] sm:$0xf]
        %v2077 = vld [vmem:[%s896 + $0x10] sm:$0xf]
        %v2078 = vld [vmem:[%s896 + $0x14] sm:$0xf]
        %v2079 = vld [vmem:[%s896 + $0x18] sm:$0xf]
        %v2080 = vld [vmem:[%s896 + $0x1c] sm:$0xf]
        %v2081 = vld [vmem:[%s899] sm:$0x1]
        %v2083 = vlaneseq
        %v2084 = vshrl.u32 %v2083, 7
        %v2085 = vsub.s32 0, %v2084
        %v2086 = vrot.slane %v2081, %v2085
        %v2096 = vunpack.c.l.b16 %v2073
        %v2097 = vunpack.c.l.b16 %v2074
        %v2098 = vunpack.c.l.b16 %v2075
        %v2099 = vunpack.c.l.b16 %v2076
        %v2100 = vunpack.c.l.b16 %v2077
        %v2101 = vunpack.c.l.b16 %v2078
        %v2102 = vunpack.c.l.b16 %v2079
        %v2103 = vunpack.c.l.b16 %v2080
        %v2104 = vpack.c.b16 %v2097, %v2096
        %v2105 = vpack.c.b16 %v2099, %v2098
        %v2106 = vpack.c.b16 %v2101, %v2100
        %v2107 = vpack.c.b16 %v2103, %v2102
        %v2113 = vsel %vm1196, %v2072, 0
        %2115 = vmatprep.subr.bf16.mxu0 0
        %2116 = vmatpush1.bf16.msra.mxu0 %v2104
        %2117 = vmatprep.subr.bf16.mxu0 0
        %2118 = vmatpush1.bf16.msra.mxu0 %v2105
        %2119 = vmatprep.subr.bf16.mxu0 0
        %2120 = vmatpush1.bf16.msra.mxu0 %v2106
        %2121 = vmatprep.subr.bf16.mxu0 0
        %2122 = vmatpush1.bf16.msra.mxu0 %v2107
        %2123 = vmatprep.subr.bf16.mxu0 0
        %2124 = vmatpush1.bf16.msra.mxu0 0
        %2125 = vmatprep.subr.bf16.mxu0 0
        %2126 = vmatpush1.bf16.msra.mxu0 0
        %2127 = vmatprep.subr.bf16.mxu0 0
        %2128 = vmatpush1.bf16.msra.mxu0 0
        %2129 = vmatprep.subr.bf16.mxu0 0
        %2130 = vmatpush1.bf16.msra.mxu0 0
        %2131 = vmatprep.subr.bf16.mxu0 0
        %2132 = vmatpush1.bf16.msra.mxu0 0
        %2133 = vmatprep.subr.bf16.mxu0 0
        %2134 = vmatpush1.bf16.msra.mxu0 0
        %2135 = vmatprep.subr.bf16.mxu0 0
        %2136 = vmatpush1.bf16.msra.mxu0 0
        %2137 = vmatprep.subr.bf16.mxu0 0
        %2138 = vmatpush1.bf16.msra.mxu0 0
        %2139 = vmatprep.subr.bf16.mxu0 0
        %2140 = vmatpush1.bf16.msra.mxu0 0
        %2141 = vmatprep.subr.bf16.mxu0 0
        %2142 = vmatpush1.bf16.msra.mxu0 0
        %2143 = vmatprep.subr.bf16.mxu0 0
        %2144 = vmatpush1.bf16.msra.mxu0 0
        %2145 = vmatprep.subr.bf16.mxu0 0
        %2146 = vmatpush1.bf16.msra.mxu0 0
        %2147 = vmatprep.mubr.bf16.mxu0 0
        %2148 = vmatmul.mubr.bf16.gmra.mrb[0].mxu0 %v2113
        %v2149 = vpop.f32.mrb[0].mxu0
        %v2150 = vadd.f32 %v2086, %v2149
        %v2151 = vpop.f32.mrb[0].mxu0
        %v2152 = vpop.f32.mrb[0].mxu0
        %v2153 = vadd.f32 %v2086, %v2152
        %v2154 = vpop.f32.mrb[0].mxu0
        %2155 = vdwg.mxu0
        %v2156 = vadd.f32 %v1125, %v2150
        %v2157 = vadd.f32 %v1126, %v2153
        %v2158 = vld [vmem:[%s919] sm:$0x1]
        %v2159 = vld [vmem:[%s922] sm:$0x1]
        %v2160 = vsel %vm1196, %v2156, 0.0
        %2161 = vadd.xlane.f32.xlu0 %v2160
        %v2162 = vpop.xlane.xlu0 %2161
        %v2163 = vsel %vm1196, %v2157, 0.0
        %2164 = vadd.xlane.f32.xlu0 %v2163
        %v2165 = vpop.xlane.xlu0 %2164
        %v2166 = vrcp.pop 64.0
        %v2167 = vmul.f32 %v2162, %v2166
        %v2168 = vmul.f32 %v2165, %v2166
        %v2169 = vsub.f32 %v2156, %v2167
        %v2170 = vsub.f32 %v2157, %v2168
        %v2171 = vmul.f32 %v2169, %v2169
        %v2172 = vmul.f32 %v2170, %v2170
        %v2173 = vsel %vm1196, %v2171, 0.0
        %2174 = vadd.xlane.f32.xlu0 %v2173
        %v2175 = vpop.xlane.xlu0 %2174
        %v2176 = vsel %vm1196, %v2172, 0.0
        %2177 = vadd.xlane.f32.xlu0 %v2176
        %v2178 = vpop.xlane.xlu0 %2177
        %v2179 = vmul.f32 %v2175, %v2166
        %v2180 = vmul.f32 %v2178, %v2166
        %v2181 = vadd.f32 %v2179, 1e-05
        %v2182 = vadd.f32 %v2180, 1e-05
        %v2183 = vrsqrt.pop %v2181
        %v2184 = vrsqrt.pop %v2182
        %v2185 = vmul.f32 %v2169, %v2183
        %v2186 = vmul.f32 %v2170, %v2184
        %v2188 = vlaneseq
        %v2189 = vshrl.u32 %v2188, 7
        %v2190 = vsub.s32 0, %v2189
        %v2191 = vrot.slane %v2158, %v2190
        %v2193 = vmul.f32 %v2185, %v2191
        %v2194 = vmul.f32 %v2186, %v2191
        %v2196 = vlaneseq
        %v2197 = vshrl.u32 %v2196, 7
        %v2198 = vsub.s32 0, %v2197
        %v2199 = vrot.slane %v2159, %v2198
        %v2201 = vadd.f32 %v2193, %v2199
        %v2202 = vadd.f32 %v2194, %v2199
        %v2203 = vpack.c.bf16 %v2202, %v2201
        %v2204 = vld [vmem:[%s904] sm:$0xff]
        %v2205 = vld [vmem:[%s904 + $0x8] sm:$0xff]
        %v2206 = vld [vmem:[%s904 + $0x10] sm:$0xff]
        %v2207 = vld [vmem:[%s904 + $0x18] sm:$0xff]
        %v2208 = vld [vmem:[%s904 + $0x20] sm:$0xff]
        %v2209 = vld [vmem:[%s904 + $0x28] sm:$0xff]
        %v2210 = vld [vmem:[%s904 + $0x30] sm:$0xff]
        %v2211 = vld [vmem:[%s904 + $0x38] sm:$0xff]
        %v2212 = vld [vmem:[%s904 + $0x40] sm:$0xff]
        %v2213 = vld [vmem:[%s904 + $0x48] sm:$0xff]
        %v2214 = vld [vmem:[%s904 + $0x50] sm:$0xff]
        %v2215 = vld [vmem:[%s904 + $0x58] sm:$0xff]
        %v2216 = vld [vmem:[%s904 + $0x60] sm:$0xff]
        %v2217 = vld [vmem:[%s904 + $0x68] sm:$0xff]
        %v2218 = vld [vmem:[%s904 + $0x70] sm:$0xff]
        %v2219 = vld [vmem:[%s904 + $0x78] sm:$0xff]
        %v2220 = vld [vmem:[%s904 + $0x80] sm:$0xff]
        %v2221 = vld [vmem:[%s904 + $0x88] sm:$0xff]
        %v2222 = vld [vmem:[%s904 + $0x90] sm:$0xff]
        %v2223 = vld [vmem:[%s904 + $0x98] sm:$0xff]
        %v2224 = vld [vmem:[%s904 + $0xa0] sm:$0xff]
        %v2225 = vld [vmem:[%s904 + $0xa8] sm:$0xff]
        %v2226 = vld [vmem:[%s904 + $0xb0] sm:$0xff]
        %v2227 = vld [vmem:[%s904 + $0xb8] sm:$0xff]
        %v2228 = vld [vmem:[%s904 + $0xc0] sm:$0xff]
        %v2229 = vld [vmem:[%s904 + $0xc8] sm:$0xff]
        %v2230 = vld [vmem:[%s904 + $0xd0] sm:$0xff]
        %v2231 = vld [vmem:[%s904 + $0xd8] sm:$0xff]
        %v2232 = vld [vmem:[%s904 + $0xe0] sm:$0xff]
        %v2233 = vld [vmem:[%s904 + $0xe8] sm:$0xff]
        %v2234 = vld [vmem:[%s904 + $0xf0] sm:$0xff]
        %v2235 = vld [vmem:[%s904 + $0xf8] sm:$0xff]
        %v2236 = vld [vmem:[%s904 + $0x100] sm:$0xff]
        %v2237 = vld [vmem:[%s904 + $0x108] sm:$0xff]
        %v2238 = vld [vmem:[%s904 + $0x110] sm:$0xff]
        %v2239 = vld [vmem:[%s904 + $0x118] sm:$0xff]
        %v2240 = vld [vmem:[%s904 + $0x120] sm:$0xff]
        %v2241 = vld [vmem:[%s904 + $0x128] sm:$0xff]
        %v2242 = vld [vmem:[%s904 + $0x130] sm:$0xff]
        %v2243 = vld [vmem:[%s904 + $0x138] sm:$0xff]
        %v2244 = vld [vmem:[%s904 + $0x140] sm:$0xff]
        %v2245 = vld [vmem:[%s904 + $0x148] sm:$0xff]
        %v2246 = vld [vmem:[%s904 + $0x150] sm:$0xff]
        %v2247 = vld [vmem:[%s904 + $0x158] sm:$0xff]
        %v2248 = vld [vmem:[%s904 + $0x160] sm:$0xff]
        %v2249 = vld [vmem:[%s904 + $0x168] sm:$0xff]
        %v2250 = vld [vmem:[%s904 + $0x170] sm:$0xff]
        %v2251 = vld [vmem:[%s904 + $0x178] sm:$0xff]
        %v2252 = vld [vmem:[%s904 + $0x180] sm:$0xff]
        %v2253 = vld [vmem:[%s904 + $0x188] sm:$0xff]
        %v2254 = vld [vmem:[%s904 + $0x190] sm:$0xff]
        %v2255 = vld [vmem:[%s904 + $0x198] sm:$0xff]
        %v2256 = vld [vmem:[%s904 + $0x1a0] sm:$0xff]
        %v2257 = vld [vmem:[%s904 + $0x1a8] sm:$0xff]
        %v2258 = vld [vmem:[%s904 + $0x1b0] sm:$0xff]
        %v2259 = vld [vmem:[%s904 + $0x1b8] sm:$0xff]
        %v2260 = vld [vmem:[%s904 + $0x1c0] sm:$0xff]
        %v2261 = vld [vmem:[%s904 + $0x1c8] sm:$0xff]
        %v2262 = vld [vmem:[%s904 + $0x1d0] sm:$0xff]
        %v2263 = vld [vmem:[%s904 + $0x1d8] sm:$0xff]
        %v2264 = vld [vmem:[%s904 + $0x1e0] sm:$0xff]
        %v2265 = vld [vmem:[%s904 + $0x1e8] sm:$0xff]
        %v2266 = vld [vmem:[%s904 + $0x1f0] sm:$0xff]
        %v2267 = vld [vmem:[%s904 + $0x1f8] sm:$0xff]
        %v2268 = vld [vmem:[%s908] sm:$0xff]
        %v2269 = vld [vmem:[%s908 + $0x8] sm:$0xff]
        %v2272 = vlaneseq
        %v2273 = vshrl.u32 %v2272, 7
        %v2274 = vsub.s32 0, %v2273
        %v2275 = vrot.slane %v2268, %v2274
        %v2276 = vlaneseq
        %v2277 = vshrl.u32 %v2276, 7
        %v2278 = vsub.s32 1, %v2277
        %v2279 = vrot.slane %v2268, %v2278
        %v2280 = vlaneseq
        %v2281 = vshrl.u32 %v2280, 7
        %v2282 = vsub.s32 2, %v2281
        %v2283 = vrot.slane %v2268, %v2282
        %v2284 = vlaneseq
        %v2285 = vshrl.u32 %v2284, 7
        %v2286 = vsub.s32 3, %v2285
        %v2287 = vrot.slane %v2268, %v2286
        %v2288 = vlaneseq
        %v2289 = vshrl.u32 %v2288, 7
        %v2290 = vsub.s32 4, %v2289
        %v2291 = vrot.slane %v2268, %v2290
        %v2292 = vlaneseq
        %v2293 = vshrl.u32 %v2292, 7
        %v2294 = vsub.s32 5, %v2293
        %v2295 = vrot.slane %v2268, %v2294
        %v2296 = vlaneseq
        %v2297 = vshrl.u32 %v2296, 7
        %v2298 = vsub.s32 6, %v2297
        %v2299 = vrot.slane %v2268, %v2298
        %v2300 = vlaneseq
        %v2301 = vshrl.u32 %v2300, 7
        %v2302 = vsub.s32 7, %v2301
        %v2303 = vrot.slane %v2268, %v2302
        %v2304 = vlaneseq
        %v2305 = vshrl.u32 %v2304, 7
        %v2306 = vsub.s32 0, %v2305
        %v2307 = vrot.slane %v2269, %v2306
        %v2308 = vlaneseq
        %v2309 = vshrl.u32 %v2308, 7
        %v2310 = vsub.s32 1, %v2309
        %v2311 = vrot.slane %v2269, %v2310
        %v2312 = vlaneseq
        %v2313 = vshrl.u32 %v2312, 7
        %v2314 = vsub.s32 2, %v2313
        %v2315 = vrot.slane %v2269, %v2314
        %v2316 = vlaneseq
        %v2317 = vshrl.u32 %v2316, 7
        %v2318 = vsub.s32 3, %v2317
        %v2319 = vrot.slane %v2269, %v2318
        %v2320 = vlaneseq
        %v2321 = vshrl.u32 %v2320, 7
        %v2322 = vsub.s32 4, %v2321
        %v2323 = vrot.slane %v2269, %v2322
        %v2324 = vlaneseq
        %v2325 = vshrl.u32 %v2324, 7
        %v2326 = vsub.s32 5, %v2325
        %v2327 = vrot.slane %v2269, %v2326
        %v2328 = vlaneseq
        %v2329 = vshrl.u32 %v2328, 7
        %v2330 = vsub.s32 6, %v2329
        %v2331 = vrot.slane %v2269, %v2330
        %v2332 = vlaneseq
        %v2333 = vshrl.u32 %v2332, 7
        %v2334 = vsub.s32 7, %v2333
        %v2335 = vrot.slane %v2269, %v2334
        %v2416 = vunpack.c.l.b16 %v2204
        %v2417 = vunpack.c.h.b16 %v2204
        %v2418 = vunpack.c.l.b16 %v2205
        %v2419 = vunpack.c.h.b16 %v2205
        %v2420 = vunpack.c.l.b16 %v2206
        %v2421 = vunpack.c.h.b16 %v2206
        %v2422 = vunpack.c.l.b16 %v2207
        %v2423 = vunpack.c.h.b16 %v2207
        %v2424 = vunpack.c.l.b16 %v2208
        %v2425 = vunpack.c.h.b16 %v2208
        %v2426 = vunpack.c.l.b16 %v2209
        %v2427 = vunpack.c.h.b16 %v2209
        %v2428 = vunpack.c.l.b16 %v2210
        %v2429 = vunpack.c.h.b16 %v2210
        %v2430 = vunpack.c.l.b16 %v2211
        %v2431 = vunpack.c.h.b16 %v2211
        %v2432 = vunpack.c.l.b16 %v2212
        %v2433 = vunpack.c.h.b16 %v2212
        %v2434 = vunpack.c.l.b16 %v2213
        %v2435 = vunpack.c.h.b16 %v2213
        %v2436 = vunpack.c.l.b16 %v2214
        %v2437 = vunpack.c.h.b16 %v2214
        %v2438 = vunpack.c.l.b16 %v2215
        %v2439 = vunpack.c.h.b16 %v2215
        %v2440 = vunpack.c.l.b16 %v2216
        %v2441 = vunpack.c.h.b16 %v2216
        %v2442 = vunpack.c.l.b16 %v2217
        %v2443 = vunpack.c.h.b16 %v2217
        %v2444 = vunpack.c.l.b16 %v2218
        %v2445 = vunpack.c.h.b16 %v2218
        %v2446 = vunpack.c.l.b16 %v2219
        %v2447 = vunpack.c.h.b16 %v2219
        %v2448 = vunpack.c.l.b16 %v2220
        %v2449 = vunpack.c.h.b16 %v2220
        %v2450 = vunpack.c.l.b16 %v2221
        %v2451 = vunpack.c.h.b16 %v2221
        %v2452 = vunpack.c.l.b16 %v2222
        %v2453 = vunpack.c.h.b16 %v2222
        %v2454 = vunpack.c.l.b16 %v2223
        %v2455 = vunpack.c.h.b16 %v2223
        %v2456 = vunpack.c.l.b16 %v2224
        %v2457 = vunpack.c.h.b16 %v2224
        %v2458 = vunpack.c.l.b16 %v2225
        %v2459 = vunpack.c.h.b16 %v2225
        %v2460 = vunpack.c.l.b16 %v2226
        %v2461 = vunpack.c.h.b16 %v2226
        %v2462 = vunpack.c.l.b16 %v2227
        %v2463 = vunpack.c.h.b16 %v2227
        %v2464 = vunpack.c.l.b16 %v2228
        %v2465 = vunpack.c.h.b16 %v2228
        %v2466 = vunpack.c.l.b16 %v2229
        %v2467 = vunpack.c.h.b16 %v2229
        %v2468 = vunpack.c.l.b16 %v2230
        %v2469 = vunpack.c.h.b16 %v2230
        %v2470 = vunpack.c.l.b16 %v2231
        %v2471 = vunpack.c.h.b16 %v2231
        %v2472 = vunpack.c.l.b16 %v2232
        %v2473 = vunpack.c.h.b16 %v2232
        %v2474 = vunpack.c.l.b16 %v2233
        %v2475 = vunpack.c.h.b16 %v2233
        %v2476 = vunpack.c.l.b16 %v2234
        %v2477 = vunpack.c.h.b16 %v2234
        %v2478 = vunpack.c.l.b16 %v2235
        %v2479 = vunpack.c.h.b16 %v2235
        %v2480 = vunpack.c.l.b16 %v2236
        %v2481 = vunpack.c.h.b16 %v2236
        %v2482 = vunpack.c.l.b16 %v2237
        %v2483 = vunpack.c.h.b16 %v2237
        %v2484 = vunpack.c.l.b16 %v2238
        %v2485 = vunpack.c.h.b16 %v2238
        %v2486 = vunpack.c.l.b16 %v2239
        %v2487 = vunpack.c.h.b16 %v2239
        %v2488 = vunpack.c.l.b16 %v2240
        %v2489 = vunpack.c.h.b16 %v2240
        %v2490 = vunpack.c.l.b16 %v2241
        %v2491 = vunpack.c.h.b16 %v2241
        %v2492 = vunpack.c.l.b16 %v2242
        %v2493 = vunpack.c.h.b16 %v2242
        %v2494 = vunpack.c.l.b16 %v2243
        %v2495 = vunpack.c.h.b16 %v2243
        %v2496 = vunpack.c.l.b16 %v2244
        %v2497 = vunpack.c.h.b16 %v2244
        %v2498 = vunpack.c.l.b16 %v2245
        %v2499 = vunpack.c.h.b16 %v2245
        %v2500 = vunpack.c.l.b16 %v2246
        %v2501 = vunpack.c.h.b16 %v2246
        %v2502 = vunpack.c.l.b16 %v2247
        %v2503 = vunpack.c.h.b16 %v2247
        %v2504 = vunpack.c.l.b16 %v2248
        %v2505 = vunpack.c.h.b16 %v2248
        %v2506 = vunpack.c.l.b16 %v2249
        %v2507 = vunpack.c.h.b16 %v2249
        %v2508 = vunpack.c.l.b16 %v2250
        %v2509 = vunpack.c.h.b16 %v2250
        %v2510 = vunpack.c.l.b16 %v2251
        %v2511 = vunpack.c.h.b16 %v2251
        %v2512 = vunpack.c.l.b16 %v2252
        %v2513 = vunpack.c.h.b16 %v2252
        %v2514 = vunpack.c.l.b16 %v2253
        %v2515 = vunpack.c.h.b16 %v2253
        %v2516 = vunpack.c.l.b16 %v2254
        %v2517 = vunpack.c.h.b16 %v2254
        %v2518 = vunpack.c.l.b16 %v2255
        %v2519 = vunpack.c.h.b16 %v2255
        %v2520 = vunpack.c.l.b16 %v2256
        %v2521 = vunpack.c.h.b16 %v2256
        %v2522 = vunpack.c.l.b16 %v2257
        %v2523 = vunpack.c.h.b16 %v2257
        %v2524 = vunpack.c.l.b16 %v2258
        %v2525 = vunpack.c.h.b16 %v2258
        %v2526 = vunpack.c.l.b16 %v2259
        %v2527 = vunpack.c.h.b16 %v2259
        %v2528 = vunpack.c.l.b16 %v2260
        %v2529 = vunpack.c.h.b16 %v2260
        %v2530 = vunpack.c.l.b16 %v2261
        %v2531 = vunpack.c.h.b16 %v2261
        %v2532 = vunpack.c.l.b16 %v2262
        %v2533 = vunpack.c.h.b16 %v2262
        %v2534 = vunpack.c.l.b16 %v2263
        %v2535 = vunpack.c.h.b16 %v2263
        %v2536 = vunpack.c.l.b16 %v2264
        %v2537 = vunpack.c.h.b16 %v2264
        %v2538 = vunpack.c.l.b16 %v2265
        %v2539 = vunpack.c.h.b16 %v2265
        %v2540 = vunpack.c.l.b16 %v2266
        %v2541 = vunpack.c.h.b16 %v2266
        %v2542 = vunpack.c.l.b16 %v2267
        %v2543 = vunpack.c.h.b16 %v2267
        %v2544 = vpack.c.b16 %v2432, %v2416
        %v2545 = vpack.c.b16 %v2433, %v2417
        %v2546 = vpack.c.b16 %v2434, %v2418
        %v2547 = vpack.c.b16 %v2435, %v2419
        %v2548 = vpack.c.b16 %v2436, %v2420
        %v2549 = vpack.c.b16 %v2437, %v2421
        %v2550 = vpack.c.b16 %v2438, %v2422
        %v2551 = vpack.c.b16 %v2439, %v2423
        %v2552 = vpack.c.b16 %v2440, %v2424
        %v2553 = vpack.c.b16 %v2441, %v2425
        %v2554 = vpack.c.b16 %v2442, %v2426
        %v2555 = vpack.c.b16 %v2443, %v2427
        %v2556 = vpack.c.b16 %v2444, %v2428
        %v2557 = vpack.c.b16 %v2445, %v2429
        %v2558 = vpack.c.b16 %v2446, %v2430
        %v2559 = vpack.c.b16 %v2447, %v2431
        %v2560 = vpack.c.b16 %v2464, %v2448
        %v2561 = vpack.c.b16 %v2465, %v2449
        %v2562 = vpack.c.b16 %v2466, %v2450
        %v2563 = vpack.c.b16 %v2467, %v2451
        %v2564 = vpack.c.b16 %v2468, %v2452
        %v2565 = vpack.c.b16 %v2469, %v2453
        %v2566 = vpack.c.b16 %v2470, %v2454
        %v2567 = vpack.c.b16 %v2471, %v2455
        %v2568 = vpack.c.b16 %v2472, %v2456
        %v2569 = vpack.c.b16 %v2473, %v2457
        %v2570 = vpack.c.b16 %v2474, %v2458
        %v2571 = vpack.c.b16 %v2475, %v2459
        %v2572 = vpack.c.b16 %v2476, %v2460
        %v2573 = vpack.c.b16 %v2477, %v2461
        %v2574 = vpack.c.b16 %v2478, %v2462
        %v2575 = vpack.c.b16 %v2479, %v2463
        %v2576 = vpack.c.b16 %v2496, %v2480
        %v2577 = vpack.c.b16 %v2497, %v2481
        %v2578 = vpack.c.b16 %v2498, %v2482
        %v2579 = vpack.c.b16 %v2499, %v2483
        %v2580 = vpack.c.b16 %v2500, %v2484
        %v2581 = vpack.c.b16 %v2501, %v2485
        %v2582 = vpack.c.b16 %v2502, %v2486
        %v2583 = vpack.c.b16 %v2503, %v2487
        %v2584 = vpack.c.b16 %v2504, %v2488
        %v2585 = vpack.c.b16 %v2505, %v2489
        %v2586 = vpack.c.b16 %v2506, %v2490
        %v2587 = vpack.c.b16 %v2507, %v2491
        %v2588 = vpack.c.b16 %v2508, %v2492
        %v2589 = vpack.c.b16 %v2509, %v2493
        %v2590 = vpack.c.b16 %v2510, %v2494
        %v2591 = vpack.c.b16 %v2511, %v2495
        %v2592 = vpack.c.b16 %v2528, %v2512
        %v2593 = vpack.c.b16 %v2529, %v2513
        %v2594 = vpack.c.b16 %v2530, %v2514
        %v2595 = vpack.c.b16 %v2531, %v2515
        %v2596 = vpack.c.b16 %v2532, %v2516
        %v2597 = vpack.c.b16 %v2533, %v2517
        %v2598 = vpack.c.b16 %v2534, %v2518
        %v2599 = vpack.c.b16 %v2535, %v2519
        %v2600 = vpack.c.b16 %v2536, %v2520
        %v2601 = vpack.c.b16 %v2537, %v2521
        %v2602 = vpack.c.b16 %v2538, %v2522
        %v2603 = vpack.c.b16 %v2539, %v2523
        %v2604 = vpack.c.b16 %v2540, %v2524
        %v2605 = vpack.c.b16 %v2541, %v2525
        %v2606 = vpack.c.b16 %v2542, %v2526
        %v2607 = vpack.c.b16 %v2543, %v2527
        %v2673 = vsel %vm1196, %v2203, 0
        %2675 = vmatprep.subr.bf16.mxu0 %v2545
        %2676 = vmatpush1.bf16.msra.mxu0 %v2544
        %2677 = vmatprep.subr.bf16.mxu0 %v2561
        %2678 = vmatpush1.bf16.msra.mxu0 %v2560
        %2679 = vmatprep.subr.bf16.mxu0 %v2577
        %2680 = vmatpush1.bf16.msra.mxu0 %v2576
        %2681 = vmatprep.subr.bf16.mxu0 %v2593
        %2682 = vmatpush1.bf16.msra.mxu0 %v2592
        %2683 = vmatprep.subr.bf16.mxu0 0
        %2684 = vmatpush1.bf16.msra.mxu0 0
        %2685 = vmatprep.subr.bf16.mxu0 0
        %2686 = vmatpush1.bf16.msra.mxu0 0
        %2687 = vmatprep.subr.bf16.mxu0 0
        %2688 = vmatpush1.bf16.msra.mxu0 0
        %2689 = vmatprep.subr.bf16.mxu0 0
        %2690 = vmatpush1.bf16.msra.mxu0 0
        %2691 = vmatprep.subr.bf16.mxu0 0
        %2692 = vmatpush1.bf16.msra.mxu0 0
        %2693 = vmatprep.subr.bf16.mxu0 0
        %2694 = vmatpush1.bf16.msra.mxu0 0
        %2695 = vmatprep.subr.bf16.mxu0 0
        %2696 = vmatpush1.bf16.msra.mxu0 0
        %2697 = vmatprep.subr.bf16.mxu0 0
        %2698 = vmatpush1.bf16.msra.mxu0 0
        %2699 = vmatprep.subr.bf16.mxu0 0
        %2700 = vmatpush1.bf16.msra.mxu0 0
        %2701 = vmatprep.subr.bf16.mxu0 0
        %2702 = vmatpush1.bf16.msra.mxu0 0
        %2703 = vmatprep.subr.bf16.mxu0 0
        %2704 = vmatpush1.bf16.msra.mxu0 0
        %2705 = vmatprep.subr.bf16.mxu0 0
        %2706 = vmatpush1.bf16.msra.mxu0 0
        %2707 = vmatprep.mubr.bf16.mxu0 0
        %2708 = vmatmul.mubr.bf16.gmra.mrb[0].mxu0 %v2673
        %v2709 = vpop.f32.mrb[0].mxu0
        %v2710 = vadd.f32 %v2275, %v2709
        %v2711 = vpop.f32.mrb[0].mxu0
        %v2712 = vadd.f32 %v2279, %v2711
        %v2713 = vpop.f32.mrb[0].mxu0
        %v2714 = vadd.f32 %v2275, %v2713
        %v2715 = vpop.f32.mrb[0].mxu0
        %v2716 = vadd.f32 %v2279, %v2715
        %2717 = vdwg.mxu0
        %2718 = vmatprep.subr.bf16.mxu0 %v2547
        %2719 = vmatpush1.bf16.msra.mxu0 %v2546
        %2720 = vmatprep.subr.bf16.mxu0 %v2563
        %2721 = vmatpush1.bf16.msra.mxu0 %v2562
        %2722 = vmatprep.subr.bf16.mxu0 %v2579
        %2723 = vmatpush1.bf16.msra.mxu0 %v2578
        %2724 = vmatprep.subr.bf16.mxu0 %v2595
        %2725 = vmatpush1.bf16.msra.mxu0 %v2594
        %2726 = vmatprep.subr.bf16.mxu0 0
        %2727 = vmatpush1.bf16.msra.mxu0 0
        %2728 = vmatprep.subr.bf16.mxu0 0
        %2729 = vmatpush1.bf16.msra.mxu0 0
        %2730 = vmatprep.subr.bf16.mxu0 0
        %2731 = vmatpush1.bf16.msra.mxu0 0
        %2732 = vmatprep.subr.bf16.mxu0 0
        %2733 = vmatpush1.bf16.msra.mxu0 0
        %2734 = vmatprep.subr.bf16.mxu0 0
        %2735 = vmatpush1.bf16.msra.mxu0 0
        %2736 = vmatprep.subr.bf16.mxu0 0
        %2737 = vmatpush1.bf16.msra.mxu0 0
        %2738 = vmatprep.subr.bf16.mxu0 0
        %2739 = vmatpush1.bf16.msra.mxu0 0
        %2740 = vmatprep.subr.bf16.mxu0 0
        %2741 = vmatpush1.bf16.msra.mxu0 0
        %2742 = vmatprep.subr.bf16.mxu0 0
        %2743 = vmatpush1.bf16.msra.mxu0 0
        %2744 = vmatprep.subr.bf16.mxu0 0
        %2745 = vmatpush1.bf16.msra.mxu0 0
        %2746 = vmatprep.subr.bf16.mxu0 0
        %2747 = vmatpush1.bf16.msra.mxu0 0
        %2748 = vmatprep.subr.bf16.mxu0 0
        %2749 = vmatpush1.bf16.msra.mxu0 0
        %2750 = vmatprep.mubr.bf16.mxu0 0
        %2751 = vmatmul.mubr.bf16.gmra.mrb[0].mxu0 %v2673
        %v2752 = vpop.f32.mrb[0].mxu0
        %v2753 = vadd.f32 %v2283, %v2752
        %v2754 = vpop.f32.mrb[0].mxu0
        %v2755 = vadd.f32 %v2287, %v2754
        %v2756 = vpop.f32.mrb[0].mxu0
        %v2757 = vadd.f32 %v2283, %v2756
        %v2758 = vpop.f32.mrb[0].mxu0
        %v2759 = vadd.f32 %v2287, %v2758
        %2760 = vdwg.mxu0
        %2761 = vmatprep.subr.bf16.mxu0 %v2549
        %2762 = vmatpush1.bf16.msra.mxu0 %v2548
        %2763 = vmatprep.subr.bf16.mxu0 %v2565
        %2764 = vmatpush1.bf16.msra.mxu0 %v2564
        %2765 = vmatprep.subr.bf16.mxu0 %v2581
        %2766 = vmatpush1.bf16.msra.mxu0 %v2580
        %2767 = vmatprep.subr.bf16.mxu0 %v2597
        %2768 = vmatpush1.bf16.msra.mxu0 %v2596
        %2769 = vmatprep.subr.bf16.mxu0 0
        %2770 = vmatpush1.bf16.msra.mxu0 0
        %2771 = vmatprep.subr.bf16.mxu0 0
        %2772 = vmatpush1.bf16.msra.mxu0 0
        %2773 = vmatprep.subr.bf16.mxu0 0
        %2774 = vmatpush1.bf16.msra.mxu0 0
        %2775 = vmatprep.subr.bf16.mxu0 0
        %2776 = vmatpush1.bf16.msra.mxu0 0
        %2777 = vmatprep.subr.bf16.mxu0 0
        %2778 = vmatpush1.bf16.msra.mxu0 0
        %2779 = vmatprep.subr.bf16.mxu0 0
        %2780 = vmatpush1.bf16.msra.mxu0 0
        %2781 = vmatprep.subr.bf16.mxu0 0
        %2782 = vmatpush1.bf16.msra.mxu0 0
        %2783 = vmatprep.subr.bf16.mxu0 0
        %2784 = vmatpush1.bf16.msra.mxu0 0
        %2785 = vmatprep.subr.bf16.mxu0 0
        %2786 = vmatpush1.bf16.msra.mxu0 0
        %2787 = vmatprep.subr.bf16.mxu0 0
        %2788 = vmatpush1.bf16.msra.mxu0 0
        %2789 = vmatprep.subr.bf16.mxu0 0
        %2790 = vmatpush1.bf16.msra.mxu0 0
        %2791 = vmatprep.subr.bf16.mxu0 0
        %2792 = vmatpush1.bf16.msra.mxu0 0
        %2793 = vmatprep.mubr.bf16.mxu0 0
        %2794 = vmatmul.mubr.bf16.gmra.mrb[0].mxu0 %v2673
        %v2795 = vpop.f32.mrb[0].mxu0
        %v2796 = vadd.f32 %v2291, %v2795
        %v2797 = vpop.f32.mrb[0].mxu0
        %v2798 = vadd.f32 %v2295, %v2797
        %v2799 = vpop.f32.mrb[0].mxu0
        %v2800 = vadd.f32 %v2291, %v2799
        %v2801 = vpop.f32.mrb[0].mxu0
        %v2802 = vadd.f32 %v2295, %v2801
        %2803 = vdwg.mxu0
        %2804 = vmatprep.subr.bf16.mxu0 %v2551
        %2805 = vmatpush1.bf16.msra.mxu0 %v2550
        %2806 = vmatprep.subr.bf16.mxu0 %v2567
        %2807 = vmatpush1.bf16.msra.mxu0 %v2566
        %2808 = vmatprep.subr.bf16.mxu0 %v2583
        %2809 = vmatpush1.bf16.msra.mxu0 %v2582
        %2810 = vmatprep.subr.bf16.mxu0 %v2599
        %2811 = vmatpush1.bf16.msra.mxu0 %v2598
        %2812 = vmatprep.subr.bf16.mxu0 0
        %2813 = vmatpush1.bf16.msra.mxu0 0
        %2814 = vmatprep.subr.bf16.mxu0 0
        %2815 = vmatpush1.bf16.msra.mxu0 0
        %2816 = vmatprep.subr.bf16.mxu0 0
        %2817 = vmatpush1.bf16.msra.mxu0 0
        %2818 = vmatprep.subr.bf16.mxu0 0
        %2819 = vmatpush1.bf16.msra.mxu0 0
        %2820 = vmatprep.subr.bf16.mxu0 0
        %2821 = vmatpush1.bf16.msra.mxu0 0
        %2822 = vmatprep.subr.bf16.mxu0 0
        %2823 = vmatpush1.bf16.msra.mxu0 0
        %2824 = vmatprep.subr.bf16.mxu0 0
        %2825 = vmatpush1.bf16.msra.mxu0 0
        %2826 = vmatprep.subr.bf16.mxu0 0
        %2827 = vmatpush1.bf16.msra.mxu0 0
        %2828 = vmatprep.subr.bf16.mxu0 0
        %2829 = vmatpush1.bf16.msra.mxu0 0
        %2830 = vmatprep.subr.bf16.mxu0 0
        %2831 = vmatpush1.bf16.msra.mxu0 0
        %2832 = vmatprep.subr.bf16.mxu0 0
        %2833 = vmatpush1.bf16.msra.mxu0 0
        %2834 = vmatprep.subr.bf16.mxu0 0
        %2835 = vmatpush1.bf16.msra.mxu0 0
        %2836 = vmatprep.mubr.bf16.mxu0 0
        %2837 = vmatmul.mubr.bf16.gmra.mrb[0].mxu0 %v2673
        %v2838 = vpop.f32.mrb[0].mxu0
        %v2839 = vadd.f32 %v2299, %v2838
        %v2840 = vpop.f32.mrb[0].mxu0
        %v2841 = vadd.f32 %v2303, %v2840
        %v2842 = vpop.f32.mrb[0].mxu0
        %v2843 = vadd.f32 %v2299, %v2842
        %v2844 = vpop.f32.mrb[0].mxu0
        %v2845 = vadd.f32 %v2303, %v2844
        %2846 = vdwg.mxu0
        %2847 = vmatprep.subr.bf16.mxu0 %v2553
        %2848 = vmatpush1.bf16.msra.mxu0 %v2552
        %2849 = vmatprep.subr.bf16.mxu0 %v2569
        %2850 = vmatpush1.bf16.msra.mxu0 %v2568
        %2851 = vmatprep.subr.bf16.mxu0 %v2585
        %2852 = vmatpush1.bf16.msra.mxu0 %v2584
        %2853 = vmatprep.subr.bf16.mxu0 %v2601
        %2854 = vmatpush1.bf16.msra.mxu0 %v2600
        %2855 = vmatprep.subr.bf16.mxu0 0
        %2856 = vmatpush1.bf16.msra.mxu0 0
        %2857 = vmatprep.subr.bf16.mxu0 0
        %2858 = vmatpush1.bf16.msra.mxu0 0
        %2859 = vmatprep.subr.bf16.mxu0 0
        %2860 = vmatpush1.bf16.msra.mxu0 0
        %2861 = vmatprep.subr.bf16.mxu0 0
        %2862 = vmatpush1.bf16.msra.mxu0 0
        %2863 = vmatprep.subr.bf16.mxu0 0
        %2864 = vmatpush1.bf16.msra.mxu0 0
        %2865 = vmatprep.subr.bf16.mxu0 0
        %2866 = vmatpush1.bf16.msra.mxu0 0
        %2867 = vmatprep.subr.bf16.mxu0 0
        %2868 = vmatpush1.bf16.msra.mxu0 0
        %2869 = vmatprep.subr.bf16.mxu0 0
        %2870 = vmatpush1.bf16.msra.mxu0 0
        %2871 = vmatprep.subr.bf16.mxu0 0
        %2872 = vmatpush1.bf16.msra.mxu0 0
        %2873 = vmatprep.subr.bf16.mxu0 0
        %2874 = vmatpush1.bf16.msra.mxu0 0
        %2875 = vmatprep.subr.bf16.mxu0 0
        %2876 = vmatpush1.bf16.msra.mxu0 0
        %2877 = vmatprep.subr.bf16.mxu0 0
        %2878 = vmatpush1.bf16.msra.mxu0 0
        %2879 = vmatprep.mubr.bf16.mxu0 0
        %2880 = vmatmul.mubr.bf16.gmra.mrb[0].mxu0 %v2673
        %v2881 = vpop.f32.mrb[0].mxu0
        %v2882 = vadd.f32 %v2307, %v2881
        %v2883 = vpop.f32.mrb[0].mxu0
        %v2884 = vadd.f32 %v2311, %v2883
        %v2885 = vpop.f32.mrb[0].mxu0
        %v2886 = vadd.f32 %v2307, %v2885
        %v2887 = vpop.f32.mrb[0].mxu0
        %v2888 = vadd.f32 %v2311, %v2887
        %2889 = vdwg.mxu0
        %2890 = vmatprep.subr.bf16.mxu0 %v2555
        %2891 = vmatpush1.bf16.msra.mxu0 %v2554
        %2892 = vmatprep.subr.bf16.mxu0 %v2571
        %2893 = vmatpush1.bf16.msra.mxu0 %v2570
        %2894 = vmatprep.subr.bf16.mxu0 %v2587
        %2895 = vmatpush1.bf16.msra.mxu0 %v2586
        %2896 = vmatprep.subr.bf16.mxu0 %v2603
        %2897 = vmatpush1.bf16.msra.mxu0 %v2602
        %2898 = vmatprep.subr.bf16.mxu0 0
        %2899 = vmatpush1.bf16.msra.mxu0 0
        %2900 = vmatprep.subr.bf16.mxu0 0
        %2901 = vmatpush1.bf16.msra.mxu0 0
        %2902 = vmatprep.subr.bf16.mxu0 0
        %2903 = vmatpush1.bf16.msra.mxu0 0
        %2904 = vmatprep.subr.bf16.mxu0 0
        %2905 = vmatpush1.bf16.msra.mxu0 0
        %2906 = vmatprep.subr.bf16.mxu0 0
        %2907 = vmatpush1.bf16.msra.mxu0 0
        %2908 = vmatprep.subr.bf16.mxu0 0
        %2909 = vmatpush1.bf16.msra.mxu0 0
        %2910 = vmatprep.subr.bf16.mxu0 0
        %2911 = vmatpush1.bf16.msra.mxu0 0
        %2912 = vmatprep.subr.bf16.mxu0 0
        %2913 = vmatpush1.bf16.msra.mxu0 0
        %2914 = vmatprep.subr.bf16.mxu0 0
        %2915 = vmatpush1.bf16.msra.mxu0 0
        %2916 = vmatprep.subr.bf16.mxu0 0
        %2917 = vmatpush1.bf16.msra.mxu0 0
        %2918 = vmatprep.subr.bf16.mxu0 0
        %2919 = vmatpush1.bf16.msra.mxu0 0
        %2920 = vmatprep.subr.bf16.mxu0 0
        %2921 = vmatpush1.bf16.msra.mxu0 0
        %2922 = vmatprep.mubr.bf16.mxu0 0
        %2923 = vmatmul.mubr.bf16.gmra.mrb[0].mxu0 %v2673
        %v2924 = vpop.f32.mrb[0].mxu0
        %v2925 = vadd.f32 %v2315, %v2924
        %v2926 = vpop.f32.mrb[0].mxu0
        %v2927 = vadd.f32 %v2319, %v2926
        %v2928 = vpop.f32.mrb[0].mxu0
        %v2929 = vadd.f32 %v2315, %v2928
        %v2930 = vpop.f32.mrb[0].mxu0
        %v2931 = vadd.f32 %v2319, %v2930
        %2932 = vdwg.mxu0
        %2933 = vmatprep.subr.bf16.mxu0 %v2557
        %2934 = vmatpush1.bf16.msra.mxu0 %v2556
        %2935 = vmatprep.subr.bf16.mxu0 %v2573
        %2936 = vmatpush1.bf16.msra.mxu0 %v2572
        %2937 = vmatprep.subr.bf16.mxu0 %v2589
        %2938 = vmatpush1.bf16.msra.mxu0 %v2588
        %2939 = vmatprep.subr.bf16.mxu0 %v2605
        %2940 = vmatpush1.bf16.msra.mxu0 %v2604
        %2941 = vmatprep.subr.bf16.mxu0 0
        %2942 = vmatpush1.bf16.msra.mxu0 0
        %2943 = vmatprep.subr.bf16.mxu0 0
        %2944 = vmatpush1.bf16.msra.mxu0 0
        %2945 = vmatprep.subr.bf16.mxu0 0
        %2946 = vmatpush1.bf16.msra.mxu0 0
        %2947 = vmatprep.subr.bf16.mxu0 0
        %2948 = vmatpush1.bf16.msra.mxu0 0
        %2949 = vmatprep.subr.bf16.mxu0 0
        %2950 = vmatpush1.bf16.msra.mxu0 0
        %2951 = vmatprep.subr.bf16.mxu0 0
        %2952 = vmatpush1.bf16.msra.mxu0 0
        %2953 = vmatprep.subr.bf16.mxu0 0
        %2954 = vmatpush1.bf16.msra.mxu0 0
        %2955 = vmatprep.subr.bf16.mxu0 0
        %2956 = vmatpush1.bf16.msra.mxu0 0
        %2957 = vmatprep.subr.bf16.mxu0 0
        %2958 = vmatpush1.bf16.msra.mxu0 0
        %2959 = vmatprep.subr.bf16.mxu0 0
        %2960 = vmatpush1.bf16.msra.mxu0 0
        %2961 = vmatprep.subr.bf16.mxu0 0
        %2962 = vmatpush1.bf16.msra.mxu0 0
        %2963 = vmatprep.subr.bf16.mxu0 0
        %2964 = vmatpush1.bf16.msra.mxu0 0
        %2965 = vmatprep.mubr.bf16.mxu0 0
        %2966 = vmatmul.mubr.bf16.gmra.mrb[0].mxu0 %v2673
        %v2967 = vpop.f32.mrb[0].mxu0
        %v2968 = vadd.f32 %v2323, %v2967
        %v2969 = vpop.f32.mrb[0].mxu0
        %v2970 = vadd.f32 %v2327, %v2969
        %v2971 = vpop.f32.mrb[0].mxu0
        %v2972 = vadd.f32 %v2323, %v2971
        %v2973 = vpop.f32.mrb[0].mxu0
        %v2974 = vadd.f32 %v2327, %v2973
        %2975 = vdwg.mxu0
        %2976 = vmatprep.subr.bf16.mxu0 %v2559
        %2977 = vmatpush1.bf16.msra.mxu0 %v2558
        %2978 = vmatprep.subr.bf16.mxu0 %v2575
        %2979 = vmatpush1.bf16.msra.mxu0 %v2574
        %2980 = vmatprep.subr.bf16.mxu0 %v2591
        %2981 = vmatpush1.bf16.msra.mxu0 %v2590
        %2982 = vmatprep.subr.bf16.mxu0 %v2607
        %2983 = vmatpush1.bf16.msra.mxu0 %v2606
        %2984 = vmatprep.subr.bf16.mxu0 0
        %2985 = vmatpush1.bf16.msra.mxu0 0
        %2986 = vmatprep.subr.bf16.mxu0 0
        %2987 = vmatpush1.bf16.msra.mxu0 0
        %2988 = vmatprep.subr.bf16.mxu0 0
        %2989 = vmatpush1.bf16.msra.mxu0 0
        %2990 = vmatprep.subr.bf16.mxu0 0
        %2991 = vmatpush1.bf16.msra.mxu0 0
        %2992 = vmatprep.subr.bf16.mxu0 0
        %2993 = vmatpush1.bf16.msra.mxu0 0
        %2994 = vmatprep.subr.bf16.mxu0 0
        %2995 = vmatpush1.bf16.msra.mxu0 0
        %2996 = vmatprep.subr.bf16.mxu0 0
        %2997 = vmatpush1.bf16.msra.mxu0 0
        %2998 = vmatprep.subr.bf16.mxu0 0
        %2999 = vmatpush1.bf16.msra.mxu0 0
        %3000 = vmatprep.subr.bf16.mxu0 0
        %3001 = vmatpush1.bf16.msra.mxu0 0
        %3002 = vmatprep.subr.bf16.mxu0 0
        %3003 = vmatpush1.bf16.msra.mxu0 0
        %3004 = vmatprep.subr.bf16.mxu0 0
        %3005 = vmatpush1.bf16.msra.mxu0 0
        %3006 = vmatprep.subr.bf16.mxu0 0
        %3007 = vmatpush1.bf16.msra.mxu0 0
        %3008 = vmatprep.mubr.bf16.mxu0 0
        %3009 = vmatmul.mubr.bf16.gmra.mrb[0].mxu0 %v2673
        %v3010 = vpop.f32.mrb[0].mxu0
        %v3011 = vadd.f32 %v2331, %v3010
        %v3012 = vpop.f32.mrb[0].mxu0
        %v3013 = vadd.f32 %v2335, %v3012
        %v3014 = vpop.f32.mrb[0].mxu0
        %v3015 = vadd.f32 %v2331, %v3014
        %v3016 = vpop.f32.mrb[0].mxu0
        %v3017 = vadd.f32 %v2335, %v3016
        %3018 = vdwg.mxu0
        %v3019 = vmax.f32 %v2710, 0.0
        %v3020 = vmax.f32 %v2712, 0.0
        %v3021 = vmax.f32 %v2753, 0.0
        %v3022 = vmax.f32 %v2755, 0.0
        %v3023 = vmax.f32 %v2796, 0.0
        %v3024 = vmax.f32 %v2798, 0.0
        %v3025 = vmax.f32 %v2839, 0.0
        %v3026 = vmax.f32 %v2841, 0.0
        %v3027 = vmax.f32 %v2882, 0.0
        %v3028 = vmax.f32 %v2884, 0.0
        %v3029 = vmax.f32 %v2925, 0.0
        %v3030 = vmax.f32 %v2927, 0.0
        %v3031 = vmax.f32 %v2968, 0.0
        %v3032 = vmax.f32 %v2970, 0.0
        %v3033 = vmax.f32 %v3011, 0.0
        %v3034 = vmax.f32 %v3013, 0.0
        %v3035 = vmax.f32 %v2714, 0.0
        %v3036 = vmax.f32 %v2716, 0.0
        %v3037 = vmax.f32 %v2757, 0.0
        %v3038 = vmax.f32 %v2759, 0.0
        %v3039 = vmax.f32 %v2800, 0.0
        %v3040 = vmax.f32 %v2802, 0.0
        %v3041 = vmax.f32 %v2843, 0.0
        %v3042 = vmax.f32 %v2845, 0.0
        %v3043 = vmax.f32 %v2886, 0.0
        %v3044 = vmax.f32 %v2888, 0.0
        %v3045 = vmax.f32 %v2929, 0.0
        %v3046 = vmax.f32 %v2931, 0.0
        %v3047 = vmax.f32 %v2972, 0.0
        %v3048 = vmax.f32 %v2974, 0.0
        %v3049 = vmax.f32 %v3015, 0.0
        %v3050 = vmax.f32 %v3017, 0.0
        %v3051 = vpack.c.bf16 %v3035, %v3019
        %v3052 = vpack.c.bf16 %v3036, %v3020
        %v3053 = vpack.c.bf16 %v3037, %v3021
        %v3054 = vpack.c.bf16 %v3038, %v3022
        %v3055 = vpack.c.bf16 %v3039, %v3023
        %v3056 = vpack.c.bf16 %v3040, %v3024
        %v3057 = vpack.c.bf16 %v3041, %v3025
        %v3058 = vpack.c.bf16 %v3042, %v3026
        %v3059 = vpack.c.bf16 %v3043, %v3027
        %v3060 = vpack.c.bf16 %v3044, %v3028
        %v3061 = vpack.c.bf16 %v3045, %v3029
        %v3062 = vpack.c.bf16 %v3046, %v3030
        %v3063 = vpack.c.bf16 %v3047, %v3031
        %v3064 = vpack.c.bf16 %v3048, %v3032
        %v3065 = vpack.c.bf16 %v3049, %v3033
        %v3066 = vpack.c.bf16 %v3050, %v3034
        %v3067 = vld [vmem:[%s913] sm:$0xf]
        %v3068 = vld [vmem:[%s913 + $0x4] sm:$0xf]
        %v3069 = vld [vmem:[%s913 + $0x8] sm:$0xf]
        %v3070 = vld [vmem:[%s913 + $0xc] sm:$0xf]
        %v3071 = vld [vmem:[%s913 + $0x10] sm:$0xf]
        %v3072 = vld [vmem:[%s913 + $0x14] sm:$0xf]
        %v3073 = vld [vmem:[%s913 + $0x18] sm:$0xf]
        %v3074 = vld [vmem:[%s913 + $0x1c] sm:$0xf]
        %v3075 = vld [vmem:[%s913 + $0x20] sm:$0xf]
        %v3076 = vld [vmem:[%s913 + $0x24] sm:$0xf]
        %v3077 = vld [vmem:[%s913 + $0x28] sm:$0xf]
        %v3078 = vld [vmem:[%s913 + $0x2c] sm:$0xf]
        %v3079 = vld [vmem:[%s913 + $0x30] sm:$0xf]
        %v3080 = vld [vmem:[%s913 + $0x34] sm:$0xf]
        %v3081 = vld [vmem:[%s913 + $0x38] sm:$0xf]
        %v3082 = vld [vmem:[%s913 + $0x3c] sm:$0xf]
        %v3083 = vld [vmem:[%s913 + $0x40] sm:$0xf]
        %v3084 = vld [vmem:[%s913 + $0x44] sm:$0xf]
        %v3085 = vld [vmem:[%s913 + $0x48] sm:$0xf]
        %v3086 = vld [vmem:[%s913 + $0x4c] sm:$0xf]
        %v3087 = vld [vmem:[%s913 + $0x50] sm:$0xf]
        %v3088 = vld [vmem:[%s913 + $0x54] sm:$0xf]
        %v3089 = vld [vmem:[%s913 + $0x58] sm:$0xf]
        %v3090 = vld [vmem:[%s913 + $0x5c] sm:$0xf]
        %v3091 = vld [vmem:[%s913 + $0x60] sm:$0xf]
        %v3092 = vld [vmem:[%s913 + $0x64] sm:$0xf]
        %v3093 = vld [vmem:[%s913 + $0x68] sm:$0xf]
        %v3094 = vld [vmem:[%s913 + $0x6c] sm:$0xf]
        %v3095 = vld [vmem:[%s913 + $0x70] sm:$0xf]
        %v3096 = vld [vmem:[%s913 + $0x74] sm:$0xf]
        %v3097 = vld [vmem:[%s913 + $0x78] sm:$0xf]
        %v3098 = vld [vmem:[%s913 + $0x7c] sm:$0xf]
        %v3099 = vld [vmem:[%s913 + $0x80] sm:$0xf]
        %v3100 = vld [vmem:[%s913 + $0x84] sm:$0xf]
        %v3101 = vld [vmem:[%s913 + $0x88] sm:$0xf]
        %v3102 = vld [vmem:[%s913 + $0x8c] sm:$0xf]
        %v3103 = vld [vmem:[%s913 + $0x90] sm:$0xf]
        %v3104 = vld [vmem:[%s913 + $0x94] sm:$0xf]
        %v3105 = vld [vmem:[%s913 + $0x98] sm:$0xf]
        %v3106 = vld [vmem:[%s913 + $0x9c] sm:$0xf]
        %v3107 = vld [vmem:[%s913 + $0xa0] sm:$0xf]
        %v3108 = vld [vmem:[%s913 + $0xa4] sm:$0xf]
        %v3109 = vld [vmem:[%s913 + $0xa8] sm:$0xf]
        %v3110 = vld [vmem:[%s913 + $0xac] sm:$0xf]
        %v3111 = vld [vmem:[%s913 + $0xb0] sm:$0xf]
        %v3112 = vld [vmem:[%s913 + $0xb4] sm:$0xf]
        %v3113 = vld [vmem:[%s913 + $0xb8] sm:$0xf]
        %v3114 = vld [vmem:[%s913 + $0xbc] sm:$0xf]
        %v3115 = vld [vmem:[%s913 + $0xc0] sm:$0xf]
        %v3116 = vld [vmem:[%s913 + $0xc4] sm:$0xf]
        %v3117 = vld [vmem:[%s913 + $0xc8] sm:$0xf]
        %v3118 = vld [vmem:[%s913 + $0xcc] sm:$0xf]
        %v3119 = vld [vmem:[%s913 + $0xd0] sm:$0xf]
        %v3120 = vld [vmem:[%s913 + $0xd4] sm:$0xf]
        %v3121 = vld [vmem:[%s913 + $0xd8] sm:$0xf]
        %v3122 = vld [vmem:[%s913 + $0xdc] sm:$0xf]
        %v3123 = vld [vmem:[%s913 + $0xe0] sm:$0xf]
        %v3124 = vld [vmem:[%s913 + $0xe4] sm:$0xf]
        %v3125 = vld [vmem:[%s913 + $0xe8] sm:$0xf]
        %v3126 = vld [vmem:[%s913 + $0xec] sm:$0xf]
        %v3127 = vld [vmem:[%s913 + $0xf0] sm:$0xf]
        %v3128 = vld [vmem:[%s913 + $0xf4] sm:$0xf]
        %v3129 = vld [vmem:[%s913 + $0xf8] sm:$0xf]
        %v3130 = vld [vmem:[%s913 + $0xfc] sm:$0xf]
        %v3131 = vld [vmem:[%s913 + $0x100] sm:$0xf]
        %v3132 = vld [vmem:[%s913 + $0x104] sm:$0xf]
        %v3133 = vld [vmem:[%s913 + $0x108] sm:$0xf]
        %v3134 = vld [vmem:[%s913 + $0x10c] sm:$0xf]
        %v3135 = vld [vmem:[%s913 + $0x110] sm:$0xf]
        %v3136 = vld [vmem:[%s913 + $0x114] sm:$0xf]
        %v3137 = vld [vmem:[%s913 + $0x118] sm:$0xf]
        %v3138 = vld [vmem:[%s913 + $0x11c] sm:$0xf]
        %v3139 = vld [vmem:[%s913 + $0x120] sm:$0xf]
        %v3140 = vld [vmem:[%s913 + $0x124] sm:$0xf]
        %v3141 = vld [vmem:[%s913 + $0x128] sm:$0xf]
        %v3142 = vld [vmem:[%s913 + $0x12c] sm:$0xf]
        %v3143 = vld [vmem:[%s913 + $0x130] sm:$0xf]
        %v3144 = vld [vmem:[%s913 + $0x134] sm:$0xf]
        %v3145 = vld [vmem:[%s913 + $0x138] sm:$0xf]
        %v3146 = vld [vmem:[%s913 + $0x13c] sm:$0xf]
        %v3147 = vld [vmem:[%s913 + $0x140] sm:$0xf]
        %v3148 = vld [vmem:[%s913 + $0x144] sm:$0xf]
        %v3149 = vld [vmem:[%s913 + $0x148] sm:$0xf]
        %v3150 = vld [vmem:[%s913 + $0x14c] sm:$0xf]
        %v3151 = vld [vmem:[%s913 + $0x150] sm:$0xf]
        %v3152 = vld [vmem:[%s913 + $0x154] sm:$0xf]
        %v3153 = vld [vmem:[%s913 + $0x158] sm:$0xf]
        %v3154 = vld [vmem:[%s913 + $0x15c] sm:$0xf]
        %v3155 = vld [vmem:[%s913 + $0x160] sm:$0xf]
        %v3156 = vld [vmem:[%s913 + $0x164] sm:$0xf]
        %v3157 = vld [vmem:[%s913 + $0x168] sm:$0xf]
        %v3158 = vld [vmem:[%s913 + $0x16c] sm:$0xf]
        %v3159 = vld [vmem:[%s913 + $0x170] sm:$0xf]
        %v3160 = vld [vmem:[%s913 + $0x174] sm:$0xf]
        %v3161 = vld [vmem:[%s913 + $0x178] sm:$0xf]
        %v3162 = vld [vmem:[%s913 + $0x17c] sm:$0xf]
        %v3163 = vld [vmem:[%s913 + $0x180] sm:$0xf]
        %v3164 = vld [vmem:[%s913 + $0x184] sm:$0xf]
        %v3165 = vld [vmem:[%s913 + $0x188] sm:$0xf]
        %v3166 = vld [vmem:[%s913 + $0x18c] sm:$0xf]
        %v3167 = vld [vmem:[%s913 + $0x190] sm:$0xf]
        %v3168 = vld [vmem:[%s913 + $0x194] sm:$0xf]
        %v3169 = vld [vmem:[%s913 + $0x198] sm:$0xf]
        %v3170 = vld [vmem:[%s913 + $0x19c] sm:$0xf]
        %v3171 = vld [vmem:[%s913 + $0x1a0] sm:$0xf]
        %v3172 = vld [vmem:[%s913 + $0x1a4] sm:$0xf]
        %v3173 = vld [vmem:[%s913 + $0x1a8] sm:$0xf]
        %v3174 = vld [vmem:[%s913 + $0x1ac] sm:$0xf]
        %v3175 = vld [vmem:[%s913 + $0x1b0] sm:$0xf]
        %v3176 = vld [vmem:[%s913 + $0x1b4] sm:$0xf]
        %v3177 = vld [vmem:[%s913 + $0x1b8] sm:$0xf]
        %v3178 = vld [vmem:[%s913 + $0x1bc] sm:$0xf]
        %v3179 = vld [vmem:[%s913 + $0x1c0] sm:$0xf]
        %v3180 = vld [vmem:[%s913 + $0x1c4] sm:$0xf]
        %v3181 = vld [vmem:[%s913 + $0x1c8] sm:$0xf]
        %v3182 = vld [vmem:[%s913 + $0x1cc] sm:$0xf]
        %v3183 = vld [vmem:[%s913 + $0x1d0] sm:$0xf]
        %v3184 = vld [vmem:[%s913 + $0x1d4] sm:$0xf]
        %v3185 = vld [vmem:[%s913 + $0x1d8] sm:$0xf]
        %v3186 = vld [vmem:[%s913 + $0x1dc] sm:$0xf]
        %v3187 = vld [vmem:[%s913 + $0x1e0] sm:$0xf]
        %v3188 = vld [vmem:[%s913 + $0x1e4] sm:$0xf]
        %v3189 = vld [vmem:[%s913 + $0x1e8] sm:$0xf]
        %v3190 = vld [vmem:[%s913 + $0x1ec] sm:$0xf]
        %v3191 = vld [vmem:[%s913 + $0x1f0] sm:$0xf]
        %v3192 = vld [vmem:[%s913 + $0x1f4] sm:$0xf]
        %v3193 = vld [vmem:[%s913 + $0x1f8] sm:$0xf]
        %v3194 = vld [vmem:[%s913 + $0x1fc] sm:$0xf]
        %v3195 = vld [vmem:[%s913 + $0x200] sm:$0xf]
        %v3196 = vld [vmem:[%s913 + $0x204] sm:$0xf]
        %v3197 = vld [vmem:[%s913 + $0x208] sm:$0xf]
        %v3198 = vld [vmem:[%s913 + $0x20c] sm:$0xf]
        %v3199 = vld [vmem:[%s913 + $0x210] sm:$0xf]
        %v3200 = vld [vmem:[%s913 + $0x214] sm:$0xf]
        %v3201 = vld [vmem:[%s913 + $0x218] sm:$0xf]
        %v3202 = vld [vmem:[%s913 + $0x21c] sm:$0xf]
        %v3203 = vld [vmem:[%s913 + $0x220] sm:$0xf]
        %v3204 = vld [vmem:[%s913 + $0x224] sm:$0xf]
        %v3205 = vld [vmem:[%s913 + $0x228] sm:$0xf]
        %v3206 = vld [vmem:[%s913 + $0x22c] sm:$0xf]
        %v3207 = vld [vmem:[%s913 + $0x230] sm:$0xf]
        %v3208 = vld [vmem:[%s913 + $0x234] sm:$0xf]
        %v3209 = vld [vmem:[%s913 + $0x238] sm:$0xf]
        %v3210 = vld [vmem:[%s913 + $0x23c] sm:$0xf]
        %v3211 = vld [vmem:[%s913 + $0x240] sm:$0xf]
        %v3212 = vld [vmem:[%s913 + $0x244] sm:$0xf]
        %v3213 = vld [vmem:[%s913 + $0x248] sm:$0xf]
        %v3214 = vld [vmem:[%s913 + $0x24c] sm:$0xf]
        %v3215 = vld [vmem:[%s913 + $0x250] sm:$0xf]
        %v3216 = vld [vmem:[%s913 + $0x254] sm:$0xf]
        %v3217 = vld [vmem:[%s913 + $0x258] sm:$0xf]
        %v3218 = vld [vmem:[%s913 + $0x25c] sm:$0xf]
        %v3219 = vld [vmem:[%s913 + $0x260] sm:$0xf]
        %v3220 = vld [vmem:[%s913 + $0x264] sm:$0xf]
        %v3221 = vld [vmem:[%s913 + $0x268] sm:$0xf]
        %v3222 = vld [vmem:[%s913 + $0x26c] sm:$0xf]
        %v3223 = vld [vmem:[%s913 + $0x270] sm:$0xf]
        %v3224 = vld [vmem:[%s913 + $0x274] sm:$0xf]
        %v3225 = vld [vmem:[%s913 + $0x278] sm:$0xf]
        %v3226 = vld [vmem:[%s913 + $0x27c] sm:$0xf]
        %v3227 = vld [vmem:[%s913 + $0x280] sm:$0xf]
        %v3228 = vld [vmem:[%s913 + $0x284] sm:$0xf]
        %v3229 = vld [vmem:[%s913 + $0x288] sm:$0xf]
        %v3230 = vld [vmem:[%s913 + $0x28c] sm:$0xf]
        %v3231 = vld [vmem:[%s913 + $0x290] sm:$0xf]
        %v3232 = vld [vmem:[%s913 + $0x294] sm:$0xf]
        %v3233 = vld [vmem:[%s913 + $0x298] sm:$0xf]
        %v3234 = vld [vmem:[%s913 + $0x29c] sm:$0xf]
        %v3235 = vld [vmem:[%s913 + $0x2a0] sm:$0xf]
        %v3236 = vld [vmem:[%s913 + $0x2a4] sm:$0xf]
        %v3237 = vld [vmem:[%s913 + $0x2a8] sm:$0xf]
        %v3238 = vld [vmem:[%s913 + $0x2ac] sm:$0xf]
        %v3239 = vld [vmem:[%s913 + $0x2b0] sm:$0xf]
        %v3240 = vld [vmem:[%s913 + $0x2b4] sm:$0xf]
        %v3241 = vld [vmem:[%s913 + $0x2b8] sm:$0xf]
        %v3242 = vld [vmem:[%s913 + $0x2bc] sm:$0xf]
        %v3243 = vld [vmem:[%s913 + $0x2c0] sm:$0xf]
        %v3244 = vld [vmem:[%s913 + $0x2c4] sm:$0xf]
        %v3245 = vld [vmem:[%s913 + $0x2c8] sm:$0xf]
        %v3246 = vld [vmem:[%s913 + $0x2cc] sm:$0xf]
        %v3247 = vld [vmem:[%s913 + $0x2d0] sm:$0xf]
        %v3248 = vld [vmem:[%s913 + $0x2d4] sm:$0xf]
        %v3249 = vld [vmem:[%s913 + $0x2d8] sm:$0xf]
        %v3250 = vld [vmem:[%s913 + $0x2dc] sm:$0xf]
        %v3251 = vld [vmem:[%s913 + $0x2e0] sm:$0xf]
        %v3252 = vld [vmem:[%s913 + $0x2e4] sm:$0xf]
        %v3253 = vld [vmem:[%s913 + $0x2e8] sm:$0xf]
        %v3254 = vld [vmem:[%s913 + $0x2ec] sm:$0xf]
        %v3255 = vld [vmem:[%s913 + $0x2f0] sm:$0xf]
        %v3256 = vld [vmem:[%s913 + $0x2f4] sm:$0xf]
        %v3257 = vld [vmem:[%s913 + $0x2f8] sm:$0xf]
        %v3258 = vld [vmem:[%s913 + $0x2fc] sm:$0xf]
        %v3259 = vld [vmem:[%s913 + $0x300] sm:$0xf]
        %v3260 = vld [vmem:[%s913 + $0x304] sm:$0xf]
        %v3261 = vld [vmem:[%s913 + $0x308] sm:$0xf]
        %v3262 = vld [vmem:[%s913 + $0x30c] sm:$0xf]
        %v3263 = vld [vmem:[%s913 + $0x310] sm:$0xf]
        %v3264 = vld [vmem:[%s913 + $0x314] sm:$0xf]
        %v3265 = vld [vmem:[%s913 + $0x318] sm:$0xf]
        %v3266 = vld [vmem:[%s913 + $0x31c] sm:$0xf]
        %v3267 = vld [vmem:[%s913 + $0x320] sm:$0xf]
        %v3268 = vld [vmem:[%s913 + $0x324] sm:$0xf]
        %v3269 = vld [vmem:[%s913 + $0x328] sm:$0xf]
        %v3270 = vld [vmem:[%s913 + $0x32c] sm:$0xf]
        %v3271 = vld [vmem:[%s913 + $0x330] sm:$0xf]
        %v3272 = vld [vmem:[%s913 + $0x334] sm:$0xf]
        %v3273 = vld [vmem:[%s913 + $0x338] sm:$0xf]
        %v3274 = vld [vmem:[%s913 + $0x33c] sm:$0xf]
        %v3275 = vld [vmem:[%s913 + $0x340] sm:$0xf]
        %v3276 = vld [vmem:[%s913 + $0x344] sm:$0xf]
        %v3277 = vld [vmem:[%s913 + $0x348] sm:$0xf]
        %v3278 = vld [vmem:[%s913 + $0x34c] sm:$0xf]
        %v3279 = vld [vmem:[%s913 + $0x350] sm:$0xf]
        %v3280 = vld [vmem:[%s913 + $0x354] sm:$0xf]
        %v3281 = vld [vmem:[%s913 + $0x358] sm:$0xf]
        %v3282 = vld [vmem:[%s913 + $0x35c] sm:$0xf]
        %v3283 = vld [vmem:[%s913 + $0x360] sm:$0xf]
        %v3284 = vld [vmem:[%s913 + $0x364] sm:$0xf]
        %v3285 = vld [vmem:[%s913 + $0x368] sm:$0xf]
        %v3286 = vld [vmem:[%s913 + $0x36c] sm:$0xf]
        %v3287 = vld [vmem:[%s913 + $0x370] sm:$0xf]
        %v3288 = vld [vmem:[%s913 + $0x374] sm:$0xf]
        %v3289 = vld [vmem:[%s913 + $0x378] sm:$0xf]
        %v3290 = vld [vmem:[%s913 + $0x37c] sm:$0xf]
        %v3291 = vld [vmem:[%s913 + $0x380] sm:$0xf]
        %v3292 = vld [vmem:[%s913 + $0x384] sm:$0xf]
        %v3293 = vld [vmem:[%s913 + $0x388] sm:$0xf]
        %v3294 = vld [vmem:[%s913 + $0x38c] sm:$0xf]
        %v3295 = vld [vmem:[%s913 + $0x390] sm:$0xf]
        %v3296 = vld [vmem:[%s913 + $0x394] sm:$0xf]
        %v3297 = vld [vmem:[%s913 + $0x398] sm:$0xf]
        %v3298 = vld [vmem:[%s913 + $0x39c] sm:$0xf]
        %v3299 = vld [vmem:[%s913 + $0x3a0] sm:$0xf]
        %v3300 = vld [vmem:[%s913 + $0x3a4] sm:$0xf]
        %v3301 = vld [vmem:[%s913 + $0x3a8] sm:$0xf]
        %v3302 = vld [vmem:[%s913 + $0x3ac] sm:$0xf]
        %v3303 = vld [vmem:[%s913 + $0x3b0] sm:$0xf]
        %v3304 = vld [vmem:[%s913 + $0x3b4] sm:$0xf]
        %v3305 = vld [vmem:[%s913 + $0x3b8] sm:$0xf]
        %v3306 = vld [vmem:[%s913 + $0x3bc] sm:$0xf]
        %v3307 = vld [vmem:[%s913 + $0x3c0] sm:$0xf]
        %v3308 = vld [vmem:[%s913 + $0x3c4] sm:$0xf]
        %v3309 = vld [vmem:[%s913 + $0x3c8] sm:$0xf]
        %v3310 = vld [vmem:[%s913 + $0x3cc] sm:$0xf]
        %v3311 = vld [vmem:[%s913 + $0x3d0] sm:$0xf]
        %v3312 = vld [vmem:[%s913 + $0x3d4] sm:$0xf]
        %v3313 = vld [vmem:[%s913 + $0x3d8] sm:$0xf]
        %v3314 = vld [vmem:[%s913 + $0x3dc] sm:$0xf]
        %v3315 = vld [vmem:[%s913 + $0x3e0] sm:$0xf]
        %v3316 = vld [vmem:[%s913 + $0x3e4] sm:$0xf]
        %v3317 = vld [vmem:[%s913 + $0x3e8] sm:$0xf]
        %v3318 = vld [vmem:[%s913 + $0x3ec] sm:$0xf]
        %v3319 = vld [vmem:[%s913 + $0x3f0] sm:$0xf]
        %v3320 = vld [vmem:[%s913 + $0x3f4] sm:$0xf]
        %v3321 = vld [vmem:[%s913 + $0x3f8] sm:$0xf]
        %v3322 = vld [vmem:[%s913 + $0x3fc] sm:$0xf]
        %v3323 = vld [vmem:[%s916] sm:$0x1]
        %v3325 = vlaneseq
        %v3326 = vshrl.u32 %v3325, 7
        %v3327 = vsub.s32 0, %v3326
        %v3328 = vrot.slane %v3323, %v3327
        %v3586 = vunpack.c.l.b16 %v3067
        %v3587 = vunpack.c.l.b16 %v3068
        %v3588 = vunpack.c.l.b16 %v3069
        %v3589 = vunpack.c.l.b16 %v3070
        %v3590 = vunpack.c.l.b16 %v3071
        %v3591 = vunpack.c.l.b16 %v3072
        %v3592 = vunpack.c.l.b16 %v3073
        %v3593 = vunpack.c.l.b16 %v3074
        %v3594 = vunpack.c.l.b16 %v3075
        %v3595 = vunpack.c.l.b16 %v3076
        %v3596 = vunpack.c.l.b16 %v3077
        %v3597 = vunpack.c.l.b16 %v3078
        %v3598 = vunpack.c.l.b16 %v3079
        %v3599 = vunpack.c.l.b16 %v3080
        %v3600 = vunpack.c.l.b16 %v3081
        %v3601 = vunpack.c.l.b16 %v3082
        %v3602 = vunpack.c.l.b16 %v3083
        %v3603 = vunpack.c.l.b16 %v3084
        %v3604 = vunpack.c.l.b16 %v3085
        %v3605 = vunpack.c.l.b16 %v3086
        %v3606 = vunpack.c.l.b16 %v3087
        %v3607 = vunpack.c.l.b16 %v3088
        %v3608 = vunpack.c.l.b16 %v3089
        %v3609 = vunpack.c.l.b16 %v3090
        %v3610 = vunpack.c.l.b16 %v3091
        %v3611 = vunpack.c.l.b16 %v3092
        %v3612 = vunpack.c.l.b16 %v3093
        %v3613 = vunpack.c.l.b16 %v3094
        %v3614 = vunpack.c.l.b16 %v3095
        %v3615 = vunpack.c.l.b16 %v3096
        %v3616 = vunpack.c.l.b16 %v3097
        %v3617 = vunpack.c.l.b16 %v3098
        %v3618 = vunpack.c.l.b16 %v3099
        %v3619 = vunpack.c.l.b16 %v3100
        %v3620 = vunpack.c.l.b16 %v3101
        %v3621 = vunpack.c.l.b16 %v3102
        %v3622 = vunpack.c.l.b16 %v3103
        %v3623 = vunpack.c.l.b16 %v3104
        %v3624 = vunpack.c.l.b16 %v3105
        %v3625 = vunpack.c.l.b16 %v3106
        %v3626 = vunpack.c.l.b16 %v3107
        %v3627 = vunpack.c.l.b16 %v3108
        %v3628 = vunpack.c.l.b16 %v3109
        %v3629 = vunpack.c.l.b16 %v3110
        %v3630 = vunpack.c.l.b16 %v3111
        %v3631 = vunpack.c.l.b16 %v3112
        %v3632 = vunpack.c.l.b16 %v3113
        %v3633 = vunpack.c.l.b16 %v3114
        %v3634 = vunpack.c.l.b16 %v3115
        %v3635 = vunpack.c.l.b16 %v3116
        %v3636 = vunpack.c.l.b16 %v3117
        %v3637 = vunpack.c.l.b16 %v3118
        %v3638 = vunpack.c.l.b16 %v3119
        %v3639 = vunpack.c.l.b16 %v3120
        %v3640 = vunpack.c.l.b16 %v3121
        %v3641 = vunpack.c.l.b16 %v3122
        %v3642 = vunpack.c.l.b16 %v3123
        %v3643 = vunpack.c.l.b16 %v3124
        %v3644 = vunpack.c.l.b16 %v3125
        %v3645 = vunpack.c.l.b16 %v3126
        %v3646 = vunpack.c.l.b16 %v3127
        %v3647 = vunpack.c.l.b16 %v3128
        %v3648 = vunpack.c.l.b16 %v3129
        %v3649 = vunpack.c.l.b16 %v3130
        %v3650 = vunpack.c.l.b16 %v3131
        %v3651 = vunpack.c.l.b16 %v3132
        %v3652 = vunpack.c.l.b16 %v3133
        %v3653 = vunpack.c.l.b16 %v3134
        %v3654 = vunpack.c.l.b16 %v3135
        %v3655 = vunpack.c.l.b16 %v3136
        %v3656 = vunpack.c.l.b16 %v3137
        %v3657 = vunpack.c.l.b16 %v3138
        %v3658 = vunpack.c.l.b16 %v3139
        %v3659 = vunpack.c.l.b16 %v3140
        %v3660 = vunpack.c.l.b16 %v3141
        %v3661 = vunpack.c.l.b16 %v3142
        %v3662 = vunpack.c.l.b16 %v3143
        %v3663 = vunpack.c.l.b16 %v3144
        %v3664 = vunpack.c.l.b16 %v3145
        %v3665 = vunpack.c.l.b16 %v3146
        %v3666 = vunpack.c.l.b16 %v3147
        %v3667 = vunpack.c.l.b16 %v3148
        %v3668 = vunpack.c.l.b16 %v3149
        %v3669 = vunpack.c.l.b16 %v3150
        %v3670 = vunpack.c.l.b16 %v3151
        %v3671 = vunpack.c.l.b16 %v3152
        %v3672 = vunpack.c.l.b16 %v3153
        %v3673 = vunpack.c.l.b16 %v3154
        %v3674 = vunpack.c.l.b16 %v3155
        %v3675 = vunpack.c.l.b16 %v3156
        %v3676 = vunpack.c.l.b16 %v3157
        %v3677 = vunpack.c.l.b16 %v3158
        %v3678 = vunpack.c.l.b16 %v3159
        %v3679 = vunpack.c.l.b16 %v3160
        %v3680 = vunpack.c.l.b16 %v3161
        %v3681 = vunpack.c.l.b16 %v3162
        %v3682 = vunpack.c.l.b16 %v3163
        %v3683 = vunpack.c.l.b16 %v3164
        %v3684 = vunpack.c.l.b16 %v3165
        %v3685 = vunpack.c.l.b16 %v3166
        %v3686 = vunpack.c.l.b16 %v3167
        %v3687 = vunpack.c.l.b16 %v3168
        %v3688 = vunpack.c.l.b16 %v3169
        %v3689 = vunpack.c.l.b16 %v3170
        %v3690 = vunpack.c.l.b16 %v3171
        %v3691 = vunpack.c.l.b16 %v3172
        %v3692 = vunpack.c.l.b16 %v3173
        %v3693 = vunpack.c.l.b16 %v3174
        %v3694 = vunpack.c.l.b16 %v3175
        %v3695 = vunpack.c.l.b16 %v3176
        %v3696 = vunpack.c.l.b16 %v3177
        %v3697 = vunpack.c.l.b16 %v3178
        %v3698 = vunpack.c.l.b16 %v3179
        %v3699 = vunpack.c.l.b16 %v3180
        %v3700 = vunpack.c.l.b16 %v3181
        %v3701 = vunpack.c.l.b16 %v3182
        %v3702 = vunpack.c.l.b16 %v3183
        %v3703 = vunpack.c.l.b16 %v3184
        %v3704 = vunpack.c.l.b16 %v3185
        %v3705 = vunpack.c.l.b16 %v3186
        %v3706 = vunpack.c.l.b16 %v3187
        %v3707 = vunpack.c.l.b16 %v3188
        %v3708 = vunpack.c.l.b16 %v3189
        %v3709 = vunpack.c.l.b16 %v3190
        %v3710 = vunpack.c.l.b16 %v3191
        %v3711 = vunpack.c.l.b16 %v3192
        %v3712 = vunpack.c.l.b16 %v3193
        %v3713 = vunpack.c.l.b16 %v3194
        %v3714 = vunpack.c.l.b16 %v3195
        %v3715 = vunpack.c.l.b16 %v3196
        %v3716 = vunpack.c.l.b16 %v3197
        %v3717 = vunpack.c.l.b16 %v3198
        %v3718 = vunpack.c.l.b16 %v3199
        %v3719 = vunpack.c.l.b16 %v3200
        %v3720 = vunpack.c.l.b16 %v3201
        %v3721 = vunpack.c.l.b16 %v3202
        %v3722 = vunpack.c.l.b16 %v3203
        %v3723 = vunpack.c.l.b16 %v3204
        %v3724 = vunpack.c.l.b16 %v3205
        %v3725 = vunpack.c.l.b16 %v3206
        %v3726 = vunpack.c.l.b16 %v3207
        %v3727 = vunpack.c.l.b16 %v3208
        %v3728 = vunpack.c.l.b16 %v3209
        %v3729 = vunpack.c.l.b16 %v3210
        %v3730 = vunpack.c.l.b16 %v3211
        %v3731 = vunpack.c.l.b16 %v3212
        %v3732 = vunpack.c.l.b16 %v3213
        %v3733 = vunpack.c.l.b16 %v3214
        %v3734 = vunpack.c.l.b16 %v3215
        %v3735 = vunpack.c.l.b16 %v3216
        %v3736 = vunpack.c.l.b16 %v3217
        %v3737 = vunpack.c.l.b16 %v3218
        %v3738 = vunpack.c.l.b16 %v3219
        %v3739 = vunpack.c.l.b16 %v3220
        %v3740 = vunpack.c.l.b16 %v3221
        %v3741 = vunpack.c.l.b16 %v3222
        %v3742 = vunpack.c.l.b16 %v3223
        %v3743 = vunpack.c.l.b16 %v3224
        %v3744 = vunpack.c.l.b16 %v3225
        %v3745 = vunpack.c.l.b16 %v3226
        %v3746 = vunpack.c.l.b16 %v3227
        %v3747 = vunpack.c.l.b16 %v3228
        %v3748 = vunpack.c.l.b16 %v3229
        %v3749 = vunpack.c.l.b16 %v3230
        %v3750 = vunpack.c.l.b16 %v3231
        %v3751 = vunpack.c.l.b16 %v3232
        %v3752 = vunpack.c.l.b16 %v3233
        %v3753 = vunpack.c.l.b16 %v3234
        %v3754 = vunpack.c.l.b16 %v3235
        %v3755 = vunpack.c.l.b16 %v3236
        %v3756 = vunpack.c.l.b16 %v3237
        %v3757 = vunpack.c.l.b16 %v3238
        %v3758 = vunpack.c.l.b16 %v3239
        %v3759 = vunpack.c.l.b16 %v3240
        %v3760 = vunpack.c.l.b16 %v3241
        %v3761 = vunpack.c.l.b16 %v3242
        %v3762 = vunpack.c.l.b16 %v3243
        %v3763 = vunpack.c.l.b16 %v3244
        %v3764 = vunpack.c.l.b16 %v3245
        %v3765 = vunpack.c.l.b16 %v3246
        %v3766 = vunpack.c.l.b16 %v3247
        %v3767 = vunpack.c.l.b16 %v3248
        %v3768 = vunpack.c.l.b16 %v3249
        %v3769 = vunpack.c.l.b16 %v3250
        %v3770 = vunpack.c.l.b16 %v3251
        %v3771 = vunpack.c.l.b16 %v3252
        %v3772 = vunpack.c.l.b16 %v3253
        %v3773 = vunpack.c.l.b16 %v3254
        %v3774 = vunpack.c.l.b16 %v3255
        %v3775 = vunpack.c.l.b16 %v3256
        %v3776 = vunpack.c.l.b16 %v3257
        %v3777 = vunpack.c.l.b16 %v3258
        %v3778 = vunpack.c.l.b16 %v3259
        %v3779 = vunpack.c.l.b16 %v3260
        %v3780 = vunpack.c.l.b16 %v3261
        %v3781 = vunpack.c.l.b16 %v3262
        %v3782 = vunpack.c.l.b16 %v3263
        %v3783 = vunpack.c.l.b16 %v3264
        %v3784 = vunpack.c.l.b16 %v3265
        %v3785 = vunpack.c.l.b16 %v3266
        %v3786 = vunpack.c.l.b16 %v3267
        %v3787 = vunpack.c.l.b16 %v3268
        %v3788 = vunpack.c.l.b16 %v3269
        %v3789 = vunpack.c.l.b16 %v3270
        %v3790 = vunpack.c.l.b16 %v3271
        %v3791 = vunpack.c.l.b16 %v3272
        %v3792 = vunpack.c.l.b16 %v3273
        %v3793 = vunpack.c.l.b16 %v3274
        %v3794 = vunpack.c.l.b16 %v3275
        %v3795 = vunpack.c.l.b16 %v3276
        %v3796 = vunpack.c.l.b16 %v3277
        %v3797 = vunpack.c.l.b16 %v3278
        %v3798 = vunpack.c.l.b16 %v3279
        %v3799 = vunpack.c.l.b16 %v3280
        %v3800 = vunpack.c.l.b16 %v3281
        %v3801 = vunpack.c.l.b16 %v3282
        %v3802 = vunpack.c.l.b16 %v3283
        %v3803 = vunpack.c.l.b16 %v3284
        %v3804 = vunpack.c.l.b16 %v3285
        %v3805 = vunpack.c.l.b16 %v3286
        %v3806 = vunpack.c.l.b16 %v3287
        %v3807 = vunpack.c.l.b16 %v3288
        %v3808 = vunpack.c.l.b16 %v3289
        %v3809 = vunpack.c.l.b16 %v3290
        %v3810 = vunpack.c.l.b16 %v3291
        %v3811 = vunpack.c.l.b16 %v3292
        %v3812 = vunpack.c.l.b16 %v3293
        %v3813 = vunpack.c.l.b16 %v3294
        %v3814 = vunpack.c.l.b16 %v3295
        %v3815 = vunpack.c.l.b16 %v3296
        %v3816 = vunpack.c.l.b16 %v3297
        %v3817 = vunpack.c.l.b16 %v3298
        %v3818 = vunpack.c.l.b16 %v3299
        %v3819 = vunpack.c.l.b16 %v3300
        %v3820 = vunpack.c.l.b16 %v3301
        %v3821 = vunpack.c.l.b16 %v3302
        %v3822 = vunpack.c.l.b16 %v3303
        %v3823 = vunpack.c.l.b16 %v3304
        %v3824 = vunpack.c.l.b16 %v3305
        %v3825 = vunpack.c.l.b16 %v3306
        %v3826 = vunpack.c.l.b16 %v3307
        %v3827 = vunpack.c.l.b16 %v3308
        %v3828 = vunpack.c.l.b16 %v3309
        %v3829 = vunpack.c.l.b16 %v3310
        %v3830 = vunpack.c.l.b16 %v3311
        %v3831 = vunpack.c.l.b16 %v3312
        %v3832 = vunpack.c.l.b16 %v3313
        %v3833 = vunpack.c.l.b16 %v3314
        %v3834 = vunpack.c.l.b16 %v3315
        %v3835 = vunpack.c.l.b16 %v3316
        %v3836 = vunpack.c.l.b16 %v3317
        %v3837 = vunpack.c.l.b16 %v3318
        %v3838 = vunpack.c.l.b16 %v3319
        %v3839 = vunpack.c.l.b16 %v3320
        %v3840 = vunpack.c.l.b16 %v3321
        %v3841 = vunpack.c.l.b16 %v3322
        %v3842 = vpack.c.b16 %v3587, %v3586
        %v3843 = vpack.c.b16 %v3589, %v3588
        %v3844 = vpack.c.b16 %v3591, %v3590
        %v3845 = vpack.c.b16 %v3593, %v3592
        %v3846 = vpack.c.b16 %v3595, %v3594
        %v3847 = vpack.c.b16 %v3597, %v3596
        %v3848 = vpack.c.b16 %v3599, %v3598
        %v3849 = vpack.c.b16 %v3601, %v3600
        %v3850 = vpack.c.b16 %v3603, %v3602
        %v3851 = vpack.c.b16 %v3605, %v3604
        %v3852 = vpack.c.b16 %v3607, %v3606
        %v3853 = vpack.c.b16 %v3609, %v3608
        %v3854 = vpack.c.b16 %v3611, %v3610
        %v3855 = vpack.c.b16 %v3613, %v3612
        %v3856 = vpack.c.b16 %v3615, %v3614
        %v3857 = vpack.c.b16 %v3617, %v3616
        %v3858 = vpack.c.b16 %v3619, %v3618
        %v3859 = vpack.c.b16 %v3621, %v3620
        %v3860 = vpack.c.b16 %v3623, %v3622
        %v3861 = vpack.c.b16 %v3625, %v3624
        %v3862 = vpack.c.b16 %v3627, %v3626
        %v3863 = vpack.c.b16 %v3629, %v3628
        %v3864 = vpack.c.b16 %v3631, %v3630
        %v3865 = vpack.c.b16 %v3633, %v3632
        %v3866 = vpack.c.b16 %v3635, %v3634
        %v3867 = vpack.c.b16 %v3637, %v3636
        %v3868 = vpack.c.b16 %v3639, %v3638
        %v3869 = vpack.c.b16 %v3641, %v3640
        %v3870 = vpack.c.b16 %v3643, %v3642
        %v3871 = vpack.c.b16 %v3645, %v3644
        %v3872 = vpack.c.b16 %v3647, %v3646
        %v3873 = vpack.c.b16 %v3649, %v3648
        %v3874 = vpack.c.b16 %v3651, %v3650
        %v3875 = vpack.c.b16 %v3653, %v3652
        %v3876 = vpack.c.b16 %v3655, %v3654
        %v3877 = vpack.c.b16 %v3657, %v3656
        %v3878 = vpack.c.b16 %v3659, %v3658
        %v3879 = vpack.c.b16 %v3661, %v3660
        %v3880 = vpack.c.b16 %v3663, %v3662
        %v3881 = vpack.c.b16 %v3665, %v3664
        %v3882 = vpack.c.b16 %v3667, %v3666
        %v3883 = vpack.c.b16 %v3669, %v3668
        %v3884 = vpack.c.b16 %v3671, %v3670
        %v3885 = vpack.c.b16 %v3673, %v3672
        %v3886 = vpack.c.b16 %v3675, %v3674
        %v3887 = vpack.c.b16 %v3677, %v3676
        %v3888 = vpack.c.b16 %v3679, %v3678
        %v3889 = vpack.c.b16 %v3681, %v3680
        %v3890 = vpack.c.b16 %v3683, %v3682
        %v3891 = vpack.c.b16 %v3685, %v3684
        %v3892 = vpack.c.b16 %v3687, %v3686
        %v3893 = vpack.c.b16 %v3689, %v3688
        %v3894 = vpack.c.b16 %v3691, %v3690
        %v3895 = vpack.c.b16 %v3693, %v3692
        %v3896 = vpack.c.b16 %v3695, %v3694
        %v3897 = vpack.c.b16 %v3697, %v3696
        %v3898 = vpack.c.b16 %v3699, %v3698
        %v3899 = vpack.c.b16 %v3701, %v3700
        %v3900 = vpack.c.b16 %v3703, %v3702
        %v3901 = vpack.c.b16 %v3705, %v3704
        %v3902 = vpack.c.b16 %v3707, %v3706
        %v3903 = vpack.c.b16 %v3709, %v3708
        %v3904 = vpack.c.b16 %v3711, %v3710
        %v3905 = vpack.c.b16 %v3713, %v3712
        %v3906 = vpack.c.b16 %v3715, %v3714
        %v3907 = vpack.c.b16 %v3717, %v3716
        %v3908 = vpack.c.b16 %v3719, %v3718
        %v3909 = vpack.c.b16 %v3721, %v3720
        %v3910 = vpack.c.b16 %v3723, %v3722
        %v3911 = vpack.c.b16 %v3725, %v3724
        %v3912 = vpack.c.b16 %v3727, %v3726
        %v3913 = vpack.c.b16 %v3729, %v3728
        %v3914 = vpack.c.b16 %v3731, %v3730
        %v3915 = vpack.c.b16 %v3733, %v3732
        %v3916 = vpack.c.b16 %v3735, %v3734
        %v3917 = vpack.c.b16 %v3737, %v3736
        %v3918 = vpack.c.b16 %v3739, %v3738
        %v3919 = vpack.c.b16 %v3741, %v3740
        %v3920 = vpack.c.b16 %v3743, %v3742
        %v3921 = vpack.c.b16 %v3745, %v3744
        %v3922 = vpack.c.b16 %v3747, %v3746
        %v3923 = vpack.c.b16 %v3749, %v3748
        %v3924 = vpack.c.b16 %v3751, %v3750
        %v3925 = vpack.c.b16 %v3753, %v3752
        %v3926 = vpack.c.b16 %v3755, %v3754
        %v3927 = vpack.c.b16 %v3757, %v3756
        %v3928 = vpack.c.b16 %v3759, %v3758
        %v3929 = vpack.c.b16 %v3761, %v3760
        %v3930 = vpack.c.b16 %v3763, %v3762
        %v3931 = vpack.c.b16 %v3765, %v3764
        %v3932 = vpack.c.b16 %v3767, %v3766
        %v3933 = vpack.c.b16 %v3769, %v3768
        %v3934 = vpack.c.b16 %v3771, %v3770
        %v3935 = vpack.c.b16 %v3773, %v3772
        %v3936 = vpack.c.b16 %v3775, %v3774
        %v3937 = vpack.c.b16 %v3777, %v3776
        %v3938 = vpack.c.b16 %v3779, %v3778
        %v3939 = vpack.c.b16 %v3781, %v3780
        %v3940 = vpack.c.b16 %v3783, %v3782
        %v3941 = vpack.c.b16 %v3785, %v3784
        %v3942 = vpack.c.b16 %v3787, %v3786
        %v3943 = vpack.c.b16 %v3789, %v3788
        %v3944 = vpack.c.b16 %v3791, %v3790
        %v3945 = vpack.c.b16 %v3793, %v3792
        %v3946 = vpack.c.b16 %v3795, %v3794
        %v3947 = vpack.c.b16 %v3797, %v3796
        %v3948 = vpack.c.b16 %v3799, %v3798
        %v3949 = vpack.c.b16 %v3801, %v3800
        %v3950 = vpack.c.b16 %v3803, %v3802
        %v3951 = vpack.c.b16 %v3805, %v3804
        %v3952 = vpack.c.b16 %v3807, %v3806
        %v3953 = vpack.c.b16 %v3809, %v3808
        %v3954 = vpack.c.b16 %v3811, %v3810
        %v3955 = vpack.c.b16 %v3813, %v3812
        %v3956 = vpack.c.b16 %v3815, %v3814
        %v3957 = vpack.c.b16 %v3817, %v3816
        %v3958 = vpack.c.b16 %v3819, %v3818
        %v3959 = vpack.c.b16 %v3821, %v3820
        %v3960 = vpack.c.b16 %v3823, %v3822
        %v3961 = vpack.c.b16 %v3825, %v3824
        %v3962 = vpack.c.b16 %v3827, %v3826
        %v3963 = vpack.c.b16 %v3829, %v3828
        %v3964 = vpack.c.b16 %v3831, %v3830
        %v3965 = vpack.c.b16 %v3833, %v3832
        %v3966 = vpack.c.b16 %v3835, %v3834
        %v3967 = vpack.c.b16 %v3837, %v3836
        %v3968 = vpack.c.b16 %v3839, %v3838
        %v3969 = vpack.c.b16 %v3841, %v3840
        %4098 = vmatprep.subr.bf16.mxu0 0
        %4099 = vmatpush1.bf16.msra.mxu0 %v3842
        %4100 = vmatprep.subr.bf16.mxu0 0
        %4101 = vmatpush1.bf16.msra.mxu0 %v3843
        %4102 = vmatprep.subr.bf16.mxu0 0
        %4103 = vmatpush1.bf16.msra.mxu0 %v3844
        %4104 = vmatprep.subr.bf16.mxu0 0
        %4105 = vmatpush1.bf16.msra.mxu0 %v3845
        %4106 = vmatprep.subr.bf16.mxu0 0
        %4107 = vmatpush1.bf16.msra.mxu0 %v3846
        %4108 = vmatprep.subr.bf16.mxu0 0
        %4109 = vmatpush1.bf16.msra.mxu0 %v3847
        %4110 = vmatprep.subr.bf16.mxu0 0
        %4111 = vmatpush1.bf16.msra.mxu0 %v3848
        %4112 = vmatprep.subr.bf16.mxu0 0
        %4113 = vmatpush1.bf16.msra.mxu0 %v3849
        %4114 = vmatprep.subr.bf16.mxu0 0
        %4115 = vmatpush1.bf16.msra.mxu0 %v3850
        %4116 = vmatprep.subr.bf16.mxu0 0
        %4117 = vmatpush1.bf16.msra.mxu0 %v3851
        %4118 = vmatprep.subr.bf16.mxu0 0
        %4119 = vmatpush1.bf16.msra.mxu0 %v3852
        %4120 = vmatprep.subr.bf16.mxu0 0
        %4121 = vmatpush1.bf16.msra.mxu0 %v3853
        %4122 = vmatprep.subr.bf16.mxu0 0
        %4123 = vmatpush1.bf16.msra.mxu0 %v3854
        %4124 = vmatprep.subr.bf16.mxu0 0
        %4125 = vmatpush1.bf16.msra.mxu0 %v3855
        %4126 = vmatprep.subr.bf16.mxu0 0
        %4127 = vmatpush1.bf16.msra.mxu0 %v3856
        %4128 = vmatprep.subr.bf16.mxu0 0
        %4129 = vmatpush1.bf16.msra.mxu0 %v3857
        %4130 = vmatprep.mubr.bf16.mxu0 %v3052
        %4131 = vmatmul.mubr.bf16.gmra.mrb[0].mxu0 %v3051
        %v4132 = vpop.f32.mrb[0].mxu0
        %v4133 = vadd.f32 %v3328, %v4132
        %v4134 = vpop.f32.mrb[0].mxu0
        %v4135 = vpop.f32.mrb[0].mxu0
        %v4136 = vadd.f32 %v3328, %v4135
        %v4137 = vpop.f32.mrb[0].mxu0
        %4138 = vdwg.mxu0
        %4139 = vmatprep.subr.bf16.mxu0 0
        %4140 = vmatpush1.bf16.msra.mxu0 %v3858
        %4141 = vmatprep.subr.bf16.mxu0 0
        %4142 = vmatpush1.bf16.msra.mxu0 %v3859
        %4143 = vmatprep.subr.bf16.mxu0 0
        %4144 = vmatpush1.bf16.msra.mxu0 %v3860
        %4145 = vmatprep.subr.bf16.mxu0 0
        %4146 = vmatpush1.bf16.msra.mxu0 %v3861
        %4147 = vmatprep.subr.bf16.mxu0 0
        %4148 = vmatpush1.bf16.msra.mxu0 %v3862
        %4149 = vmatprep.subr.bf16.mxu0 0
        %4150 = vmatpush1.bf16.msra.mxu0 %v3863
        %4151 = vmatprep.subr.bf16.mxu0 0
        %4152 = vmatpush1.bf16.msra.mxu0 %v3864
        %4153 = vmatprep.subr.bf16.mxu0 0
        %4154 = vmatpush1.bf16.msra.mxu0 %v3865
        %4155 = vmatprep.subr.bf16.mxu0 0
        %4156 = vmatpush1.bf16.msra.mxu0 %v3866
        %4157 = vmatprep.subr.bf16.mxu0 0
        %4158 = vmatpush1.bf16.msra.mxu0 %v3867
        %4159 = vmatprep.subr.bf16.mxu0 0
        %4160 = vmatpush1.bf16.msra.mxu0 %v3868
        %4161 = vmatprep.subr.bf16.mxu0 0
        %4162 = vmatpush1.bf16.msra.mxu0 %v3869
        %4163 = vmatprep.subr.bf16.mxu0 0
        %4164 = vmatpush1.bf16.msra.mxu0 %v3870
        %4165 = vmatprep.subr.bf16.mxu0 0
        %4166 = vmatpush1.bf16.msra.mxu0 %v3871
        %4167 = vmatprep.subr.bf16.mxu0 0
        %4168 = vmatpush1.bf16.msra.mxu0 %v3872
        %4169 = vmatprep.subr.bf16.mxu0 0
        %4170 = vmatpush1.bf16.msra.mxu0 %v3873
        %4171 = vmatprep.mubr.bf16.mxu0 %v3054
        %4172 = vmatmul.mubr.bf16.gmra.mrb[0].mxu0 %v3053
        %v4173 = vpop.f32.mrb[0].mxu0
        %v4174 = vadd.f32 %v4133, %v4173
        %v4175 = vpop.f32.mrb[0].mxu0
        %v4176 = vpop.f32.mrb[0].mxu0
        %v4177 = vadd.f32 %v4136, %v4176
        %v4178 = vpop.f32.mrb[0].mxu0
        %4179 = vdwg.mxu0
        %4180 = vmatprep.subr.bf16.mxu0 0
        %4181 = vmatpush1.bf16.msra.mxu0 %v3874
        %4182 = vmatprep.subr.bf16.mxu0 0
        %4183 = vmatpush1.bf16.msra.mxu0 %v3875
        %4184 = vmatprep.subr.bf16.mxu0 0
        %4185 = vmatpush1.bf16.msra.mxu0 %v3876
        %4186 = vmatprep.subr.bf16.mxu0 0
        %4187 = vmatpush1.bf16.msra.mxu0 %v3877
        %4188 = vmatprep.subr.bf16.mxu0 0
        %4189 = vmatpush1.bf16.msra.mxu0 %v3878
        %4190 = vmatprep.subr.bf16.mxu0 0
        %4191 = vmatpush1.bf16.msra.mxu0 %v3879
        %4192 = vmatprep.subr.bf16.mxu0 0
        %4193 = vmatpush1.bf16.msra.mxu0 %v3880
        %4194 = vmatprep.subr.bf16.mxu0 0
        %4195 = vmatpush1.bf16.msra.mxu0 %v3881
        %4196 = vmatprep.subr.bf16.mxu0 0
        %4197 = vmatpush1.bf16.msra.mxu0 %v3882
        %4198 = vmatprep.subr.bf16.mxu0 0
        %4199 = vmatpush1.bf16.msra.mxu0 %v3883
        %4200 = vmatprep.subr.bf16.mxu0 0
        %4201 = vmatpush1.bf16.msra.mxu0 %v3884
        %4202 = vmatprep.subr.bf16.mxu0 0
        %4203 = vmatpush1.bf16.msra.mxu0 %v3885
        %4204 = vmatprep.subr.bf16.mxu0 0
        %4205 = vmatpush1.bf16.msra.mxu0 %v3886
        %4206 = vmatprep.subr.bf16.mxu0 0
        %4207 = vmatpush1.bf16.msra.mxu0 %v3887
        %4208 = vmatprep.subr.bf16.mxu0 0
        %4209 = vmatpush1.bf16.msra.mxu0 %v3888
        %4210 = vmatprep.subr.bf16.mxu0 0
        %4211 = vmatpush1.bf16.msra.mxu0 %v3889
        %4212 = vmatprep.mubr.bf16.mxu0 %v3056
        %4213 = vmatmul.mubr.bf16.gmra.mrb[0].mxu0 %v3055
        %v4214 = vpop.f32.mrb[0].mxu0
        %v4215 = vadd.f32 %v4174, %v4214
        %v4216 = vpop.f32.mrb[0].mxu0
        %v4217 = vpop.f32.mrb[0].mxu0
        %v4218 = vadd.f32 %v4177, %v4217
        %v4219 = vpop.f32.mrb[0].mxu0
        %4220 = vdwg.mxu0
        %4221 = vmatprep.subr.bf16.mxu0 0
        %4222 = vmatpush1.bf16.msra.mxu0 %v3890
        %4223 = vmatprep.subr.bf16.mxu0 0
        %4224 = vmatpush1.bf16.msra.mxu0 %v3891
        %4225 = vmatprep.subr.bf16.mxu0 0
        %4226 = vmatpush1.bf16.msra.mxu0 %v3892
        %4227 = vmatprep.subr.bf16.mxu0 0
        %4228 = vmatpush1.bf16.msra.mxu0 %v3893
        %4229 = vmatprep.subr.bf16.mxu0 0
        %4230 = vmatpush1.bf16.msra.mxu0 %v3894
        %4231 = vmatprep.subr.bf16.mxu0 0
        %4232 = vmatpush1.bf16.msra.mxu0 %v3895
        %4233 = vmatprep.subr.bf16.mxu0 0
        %4234 = vmatpush1.bf16.msra.mxu0 %v3896
        %4235 = vmatprep.subr.bf16.mxu0 0
        %4236 = vmatpush1.bf16.msra.mxu0 %v3897
        %4237 = vmatprep.subr.bf16.mxu0 0
        %4238 = vmatpush1.bf16.msra.mxu0 %v3898
        %4239 = vmatprep.subr.bf16.mxu0 0
        %4240 = vmatpush1.bf16.msra.mxu0 %v3899
        %4241 = vmatprep.subr.bf16.mxu0 0
        %4242 = vmatpush1.bf16.msra.mxu0 %v3900
        %4243 = vmatprep.subr.bf16.mxu0 0
        %4244 = vmatpush1.bf16.msra.mxu0 %v3901
        %4245 = vmatprep.subr.bf16.mxu0 0
        %4246 = vmatpush1.bf16.msra.mxu0 %v3902
        %4247 = vmatprep.subr.bf16.mxu0 0
        %4248 = vmatpush1.bf16.msra.mxu0 %v3903
        %4249 = vmatprep.subr.bf16.mxu0 0
        %4250 = vmatpush1.bf16.msra.mxu0 %v3904
        %4251 = vmatprep.subr.bf16.mxu0 0
        %4252 = vmatpush1.bf16.msra.mxu0 %v3905
        %4253 = vmatprep.mubr.bf16.mxu0 %v3058
        %4254 = vmatmul.mubr.bf16.gmra.mrb[0].mxu0 %v3057
        %v4255 = vpop.f32.mrb[0].mxu0
        %v4256 = vadd.f32 %v4215, %v4255
        %v4257 = vpop.f32.mrb[0].mxu0
        %v4258 = vpop.f32.mrb[0].mxu0
        %v4259 = vadd.f32 %v4218, %v4258
        %v4260 = vpop.f32.mrb[0].mxu0
        %4261 = vdwg.mxu0
        %4262 = vmatprep.subr.bf16.mxu0 0
        %4263 = vmatpush1.bf16.msra.mxu0 %v3906
        %4264 = vmatprep.subr.bf16.mxu0 0
        %4265 = vmatpush1.bf16.msra.mxu0 %v3907
        %4266 = vmatprep.subr.bf16.mxu0 0
        %4267 = vmatpush1.bf16.msra.mxu0 %v3908
        %4268 = vmatprep.subr.bf16.mxu0 0
        %4269 = vmatpush1.bf16.msra.mxu0 %v3909
        %4270 = vmatprep.subr.bf16.mxu0 0
        %4271 = vmatpush1.bf16.msra.mxu0 %v3910
        %4272 = vmatprep.subr.bf16.mxu0 0
        %4273 = vmatpush1.bf16.msra.mxu0 %v3911
        %4274 = vmatprep.subr.bf16.mxu0 0
        %4275 = vmatpush1.bf16.msra.mxu0 %v3912
        %4276 = vmatprep.subr.bf16.mxu0 0
        %4277 = vmatpush1.bf16.msra.mxu0 %v3913
        %4278 = vmatprep.subr.bf16.mxu0 0
        %4279 = vmatpush1.bf16.msra.mxu0 %v3914
        %4280 = vmatprep.subr.bf16.mxu0 0
        %4281 = vmatpush1.bf16.msra.mxu0 %v3915
        %4282 = vmatprep.subr.bf16.mxu0 0
        %4283 = vmatpush1.bf16.msra.mxu0 %v3916
        %4284 = vmatprep.subr.bf16.mxu0 0
        %4285 = vmatpush1.bf16.msra.mxu0 %v3917
        %4286 = vmatprep.subr.bf16.mxu0 0
        %4287 = vmatpush1.bf16.msra.mxu0 %v3918
        %4288 = vmatprep.subr.bf16.mxu0 0
        %4289 = vmatpush1.bf16.msra.mxu0 %v3919
        %4290 = vmatprep.subr.bf16.mxu0 0
        %4291 = vmatpush1.bf16.msra.mxu0 %v3920
        %4292 = vmatprep.subr.bf16.mxu0 0
        %4293 = vmatpush1.bf16.msra.mxu0 %v3921
        %4294 = vmatprep.mubr.bf16.mxu0 %v3060
        %4295 = vmatmul.mubr.bf16.gmra.mrb[0].mxu0 %v3059
        %v4296 = vpop.f32.mrb[0].mxu0
        %v4297 = vadd.f32 %v4256, %v4296
        %v4298 = vpop.f32.mrb[0].mxu0
        %v4299 = vpop.f32.mrb[0].mxu0
        %v4300 = vadd.f32 %v4259, %v4299
        %v4301 = vpop.f32.mrb[0].mxu0
        %4302 = vdwg.mxu0
        %4303 = vmatprep.subr.bf16.mxu0 0
        %4304 = vmatpush1.bf16.msra.mxu0 %v3922
        %4305 = vmatprep.subr.bf16.mxu0 0
        %4306 = vmatpush1.bf16.msra.mxu0 %v3923
        %4307 = vmatprep.subr.bf16.mxu0 0
        %4308 = vmatpush1.bf16.msra.mxu0 %v3924
        %4309 = vmatprep.subr.bf16.mxu0 0
        %4310 = vmatpush1.bf16.msra.mxu0 %v3925
        %4311 = vmatprep.subr.bf16.mxu0 0
        %4312 = vmatpush1.bf16.msra.mxu0 %v3926
        %4313 = vmatprep.subr.bf16.mxu0 0
        %4314 = vmatpush1.bf16.msra.mxu0 %v3927
        %4315 = vmatprep.subr.bf16.mxu0 0
        %4316 = vmatpush1.bf16.msra.mxu0 %v3928
        %4317 = vmatprep.subr.bf16.mxu0 0
        %4318 = vmatpush1.bf16.msra.mxu0 %v3929
        %4319 = vmatprep.subr.bf16.mxu0 0
        %4320 = vmatpush1.bf16.msra.mxu0 %v3930
        %4321 = vmatprep.subr.bf16.mxu0 0
        %4322 = vmatpush1.bf16.msra.mxu0 %v3931
        %4323 = vmatprep.subr.bf16.mxu0 0
        %4324 = vmatpush1.bf16.msra.mxu0 %v3932
        %4325 = vmatprep.subr.bf16.mxu0 0
        %4326 = vmatpush1.bf16.msra.mxu0 %v3933
        %4327 = vmatprep.subr.bf16.mxu0 0
        %4328 = vmatpush1.bf16.msra.mxu0 %v3934
        %4329 = vmatprep.subr.bf16.mxu0 0
        %4330 = vmatpush1.bf16.msra.mxu0 %v3935
        %4331 = vmatprep.subr.bf16.mxu0 0
        %4332 = vmatpush1.bf16.msra.mxu0 %v3936
        %4333 = vmatprep.subr.bf16.mxu0 0
        %4334 = vmatpush1.bf16.msra.mxu0 %v3937
        %4335 = vmatprep.mubr.bf16.mxu0 %v3062
        %4336 = vmatmul.mubr.bf16.gmra.mrb[0].mxu0 %v3061
        %v4337 = vpop.f32.mrb[0].mxu0
        %v4338 = vadd.f32 %v4297, %v4337
        %v4339 = vpop.f32.mrb[0].mxu0
        %v4340 = vpop.f32.mrb[0].mxu0
        %v4341 = vadd.f32 %v4300, %v4340
        %v4342 = vpop.f32.mrb[0].mxu0
        %4343 = vdwg.mxu0
        %4344 = vmatprep.subr.bf16.mxu0 0
        %4345 = vmatpush1.bf16.msra.mxu0 %v3938
        %4346 = vmatprep.subr.bf16.mxu0 0
        %4347 = vmatpush1.bf16.msra.mxu0 %v3939
        %4348 = vmatprep.subr.bf16.mxu0 0
        %4349 = vmatpush1.bf16.msra.mxu0 %v3940
        %4350 = vmatprep.subr.bf16.mxu0 0
        %4351 = vmatpush1.bf16.msra.mxu0 %v3941
        %4352 = vmatprep.subr.bf16.mxu0 0
        %4353 = vmatpush1.bf16.msra.mxu0 %v3942
        %4354 = vmatprep.subr.bf16.mxu0 0
        %4355 = vmatpush1.bf16.msra.mxu0 %v3943
        %4356 = vmatprep.subr.bf16.mxu0 0
        %4357 = vmatpush1.bf16.msra.mxu0 %v3944
        %4358 = vmatprep.subr.bf16.mxu0 0
        %4359 = vmatpush1.bf16.msra.mxu0 %v3945
        %4360 = vmatprep.subr.bf16.mxu0 0
        %4361 = vmatpush1.bf16.msra.mxu0 %v3946
        %4362 = vmatprep.subr.bf16.mxu0 0
        %4363 = vmatpush1.bf16.msra.mxu0 %v3947
        %4364 = vmatprep.subr.bf16.mxu0 0
        %4365 = vmatpush1.bf16.msra.mxu0 %v3948
        %4366 = vmatprep.subr.bf16.mxu0 0
        %4367 = vmatpush1.bf16.msra.mxu0 %v3949
        %4368 = vmatprep.subr.bf16.mxu0 0
        %4369 = vmatpush1.bf16.msra.mxu0 %v3950
        %4370 = vmatprep.subr.bf16.mxu0 0
        %4371 = vmatpush1.bf16.msra.mxu0 %v3951
        %4372 = vmatprep.subr.bf16.mxu0 0
        %4373 = vmatpush1.bf16.msra.mxu0 %v3952
        %4374 = vmatprep.subr.bf16.mxu0 0
        %4375 = vmatpush1.bf16.msra.mxu0 %v3953
        %4376 = vmatprep.mubr.bf16.mxu0 %v3064
        %4377 = vmatmul.mubr.bf16.gmra.mrb[0].mxu0 %v3063
        %v4378 = vpop.f32.mrb[0].mxu0
        %v4379 = vadd.f32 %v4338, %v4378
        %v4380 = vpop.f32.mrb[0].mxu0
        %v4381 = vpop.f32.mrb[0].mxu0
        %v4382 = vadd.f32 %v4341, %v4381
        %v4383 = vpop.f32.mrb[0].mxu0
        %4384 = vdwg.mxu0
        %4385 = vmatprep.subr.bf16.mxu0 0
        %4386 = vmatpush1.bf16.msra.mxu0 %v3954
        %4387 = vmatprep.subr.bf16.mxu0 0
        %4388 = vmatpush1.bf16.msra.mxu0 %v3955
        %4389 = vmatprep.subr.bf16.mxu0 0
        %4390 = vmatpush1.bf16.msra.mxu0 %v3956
        %4391 = vmatprep.subr.bf16.mxu0 0
        %4392 = vmatpush1.bf16.msra.mxu0 %v3957
        %4393 = vmatprep.subr.bf16.mxu0 0
        %4394 = vmatpush1.bf16.msra.mxu0 %v3958
        %4395 = vmatprep.subr.bf16.mxu0 0
        %4396 = vmatpush1.bf16.msra.mxu0 %v3959
        %4397 = vmatprep.subr.bf16.mxu0 0
        %4398 = vmatpush1.bf16.msra.mxu0 %v3960
        %4399 = vmatprep.subr.bf16.mxu0 0
        %4400 = vmatpush1.bf16.msra.mxu0 %v3961
        %4401 = vmatprep.subr.bf16.mxu0 0
        %4402 = vmatpush1.bf16.msra.mxu0 %v3962
        %4403 = vmatprep.subr.bf16.mxu0 0
        %4404 = vmatpush1.bf16.msra.mxu0 %v3963
        %4405 = vmatprep.subr.bf16.mxu0 0
        %4406 = vmatpush1.bf16.msra.mxu0 %v3964
        %4407 = vmatprep.subr.bf16.mxu0 0
        %4408 = vmatpush1.bf16.msra.mxu0 %v3965
        %4409 = vmatprep.subr.bf16.mxu0 0
        %4410 = vmatpush1.bf16.msra.mxu0 %v3966
        %4411 = vmatprep.subr.bf16.mxu0 0
        %4412 = vmatpush1.bf16.msra.mxu0 %v3967
        %4413 = vmatprep.subr.bf16.mxu0 0
        %4414 = vmatpush1.bf16.msra.mxu0 %v3968
        %4415 = vmatprep.subr.bf16.mxu0 0
        %4416 = vmatpush1.bf16.msra.mxu0 %v3969
        %4417 = vmatprep.mubr.bf16.mxu0 %v3066
        %4418 = vmatmul.mubr.bf16.gmra.mrb[0].mxu0 %v3065
        %v4419 = vpop.f32.mrb[0].mxu0
        %v4420 = vadd.f32 %v4379, %v4419
        %v4421 = vpop.f32.mrb[0].mxu0
        %v4422 = vpop.f32.mrb[0].mxu0
        %v4423 = vadd.f32 %v4382, %v4422
        %v4424 = vpop.f32.mrb[0].mxu0
        %4425 = vdwg.mxu0
        %v4426 = vadd.f32 %v2201, %v4420
        %v4427 = vadd.f32 %v2202, %v4423
        %v4428 = vld [vmem:[%s925] sm:$0x1]
        %v4429 = vld [vmem:[%s928] sm:$0x1]
        %v4430 = vsel %vm1196, %v4426, 0.0
        %4431 = vadd.xlane.f32.xlu0 %v4430
        %v4432 = vpop.xlane.xlu0 %4431
        %v4433 = vsel %vm1196, %v4427, 0.0
        %4434 = vadd.xlane.f32.xlu0 %v4433
        %v4435 = vpop.xlane.xlu0 %4434
        %v4436 = vmul.f32 %v4432, %v2166
        %v4437 = vmul.f32 %v4435, %v2166
        %v4438 = vsub.f32 %v4426, %v4436
        %v4439 = vsub.f32 %v4427, %v4437
        %v4440 = vmul.f32 %v4438, %v4438
        %v4441 = vmul.f32 %v4439, %v4439
        %v4442 = vsel %vm1196, %v4440, 0.0
        %4443 = vadd.xlane.f32.xlu0 %v4442
        %v4444 = vpop.xlane.xlu0 %4443
        %v4445 = vsel %vm1196, %v4441, 0.0
        %4446 = vadd.xlane.f32.xlu0 %v4445
        %v4447 = vpop.xlane.xlu0 %4446
        %v4448 = vmul.f32 %v4444, %v2166
        %v4449 = vmul.f32 %v4447, %v2166
        %v4450 = vadd.f32 %v4448, 1e-05
        %v4451 = vadd.f32 %v4449, 1e-05
        %v4452 = vrsqrt.pop %v4450
        %v4453 = vrsqrt.pop %v4451
        %v4454 = vmul.f32 %v4438, %v4452
        %v4455 = vmul.f32 %v4439, %v4453
        %v4457 = vlaneseq
        %v4458 = vshrl.u32 %v4457, 7
        %v4459 = vsub.s32 0, %v4458
        %v4460 = vrot.slane %v4428, %v4459
        %v4462 = vmul.f32 %v4454, %v4460
        %v4463 = vmul.f32 %v4455, %v4460
        %v4465 = vlaneseq
        %v4466 = vshrl.u32 %v4465, 7
        %v4467 = vsub.s32 0, %v4466
        %v4468 = vrot.slane %v4429, %v4467
        %v4470 = vadd.f32 %v4462, %v4468
        %v4471 = vadd.f32 %v4463, %v4468
        %4472 = vst.msk [vmem:[#allocation2] sm:$0xff] %vm1196, %v4470
        %4473 = vst.msk [vmem:[#allocation2 + $0x8] sm:$0xff] %vm1196, %v4471
        %p4474 = scmp.eq.s32.totalorder %s37, 1
        // Predicated region
        $region125: #{album_event_classifier_forward.1} parent=119 // pred_check
          %p4475 = pneg %p4474
        $region126: #{album_event_classifier_forward.1} parent=119 // pred_check_branch
          %4477 = sbr.rel (%p4475) target = $region128
        $region127: #{album_event_classifier_forward.1} parent=119 // pred_region
          %v4478 = vld [vmem:[#allocation2] sm:$0xff]
          %v4479 = vld [vmem:[#allocation2 + $0x8] sm:$0xff]
          %v4480 = vld [vmem:[%s5] sm:$0x3]
          %vm4481 = vcmask 130048
          %v4483 = vsel %vm4481, %v4480, 0
          %4485 = vmatprep.subr.mxu0 0.0
          %4486 = vmatpush1.msra.mxu0 %v4478
          %4487 = vmatprep.subr.mxu0 0.0
          %4488 = vmatpush1.msra.mxu0 %v4479
          %4489 = vmatprep.subr.mxu0 0.0
          %4490 = vmatpush1.msra.mxu0 0.0
          %4491 = vmatprep.subr.mxu0 0.0
          %4492 = vmatpush1.msra.mxu0 0.0
          %4493 = vmatprep.subr.mxu0 0.0
          %4494 = vmatpush1.msra.mxu0 0.0
          %4495 = vmatprep.subr.mxu0 0.0
          %4496 = vmatpush1.msra.mxu0 0.0
          %4497 = vmatprep.subr.mxu0 0.0
          %4498 = vmatpush1.msra.mxu0 0.0
          %4499 = vmatprep.subr.mxu0 0.0
          %4500 = vmatpush1.msra.mxu0 0.0
          %4501 = vmatprep.subr.mxu0 0.0
          %4502 = vmatpush1.msra.mxu0 0.0
          %4503 = vmatprep.subr.mxu0 0.0
          %4504 = vmatpush1.msra.mxu0 0.0
          %4505 = vmatprep.subr.mxu0 0.0
          %4506 = vmatpush1.msra.mxu0 0.0
          %4507 = vmatprep.subr.mxu0 0.0
          %4508 = vmatpush1.msra.mxu0 0.0
          %4509 = vmatprep.subr.mxu0 0.0
          %4510 = vmatpush1.msra.mxu0 0.0
          %4511 = vmatprep.subr.mxu0 0.0
          %4512 = vmatpush1.msra.mxu0 0.0
          %4513 = vmatprep.subr.mxu0 0.0
          %4514 = vmatpush1.msra.mxu0 0.0
          %4515 = vmatprep.subr.mxu0 0.0
          %4516 = vmatpush1.msra.mxu0 0.0
          %4517 = vmatprep.subr.mxu0 0.0
          %4518 = vmatpush1.msra.mxu0 0.0
          %4519 = vmatprep.subr.mxu0 0.0
          %4520 = vmatpush1.msra.mxu0 0.0
          %4521 = vmatprep.subr.mxu0 0.0
          %4522 = vmatpush1.msra.mxu0 0.0
          %4523 = vmatprep.subr.mxu0 0.0
          %4524 = vmatpush1.msra.mxu0 0.0
          %4525 = vmatprep.subr.mxu0 0.0
          %4526 = vmatpush1.msra.mxu0 0.0
          %4527 = vmatprep.subr.mxu0 0.0
          %4528 = vmatpush1.msra.mxu0 0.0
          %4529 = vmatprep.subr.mxu0 0.0
          %4530 = vmatpush1.msra.mxu0 0.0
          %4531 = vmatprep.subr.mxu0 0.0
          %4532 = vmatpush1.msra.mxu0 0.0
          %4533 = vmatprep.subr.mxu0 0.0
          %4534 = vmatpush1.msra.mxu0 0.0
          %4535 = vmatprep.subr.mxu0 0.0
          %4536 = vmatpush1.msra.mxu0 0.0
          %4537 = vmatprep.subr.mxu0 0.0
          %4538 = vmatpush1.msra.mxu0 0.0
          %4539 = vmatprep.subr.mxu0 0.0
          %4540 = vmatpush1.msra.mxu0 0.0
          %4541 = vmatprep.subr.mxu0 0.0
          %4542 = vmatpush1.msra.mxu0 0.0
          %4543 = vmatprep.subr.mxu0 0.0
          %4544 = vmatpush1.msra.mxu0 0.0
          %4545 = vmatprep.subr.mxu0 0.0
          %4546 = vmatpush1.msra.mxu0 0.0
          %4547 = vmatprep.subr.mxu0 0.0
          %4548 = vmatpush1.msra.mxu0 0.0
          %4549 = vmatprep.mubr.f32.mxu0 0.0
          %4550 = vmatmul.mubr.f32.gmra.mrb[0].mxu0 %v4483
          %v4551 = vpop.f32.mrb[0].mxu0
          %v4552 = vadd.f32 0.0, %v4551
          %v4553 = vpop.f32.mrb[0].mxu0
          %4554 = vdwg.mxu0
          %v4555 = vld [vmem:[%s19] sm:$0x1]
          %v4556 = vld [vmem:[%s20] sm:$0x1]
          %vm4557 = vcmask 517120
          %v4558 = vsel %vm4557, %v4552, 0.0
          %4559 = vadd.xlane.f32.xlu0 %v4558
          %v4560 = vpop.xlane.xlu0 %4559
          %v4561 = vmul.f32 %v4560, %v2166
          %v4562 = vsub.f32 %v4552, %v4561
          %v4563 = vmul.f32 %v4562, %v4562
          %v4564 = vsel %vm4557, %v4563, 0.0
          %4565 = vadd.xlane.f32.xlu0 %v4564
          %v4566 = vpop.xlane.xlu0 %4565
          %v4567 = vmul.f32 %v4566, %v2166
          %v4568 = vadd.f32 %v4567, 1e-05
          %v4569 = vrsqrt.pop %v4568
          %v4570 = vmul.f32 %v4562, %v4569
          %v4572 = vlaneseq
          %v4573 = vshrl.u32 %v4572, 7
          %v4574 = vsub.s32 0, %v4573
          %v4575 = vrot.slane %v4555, %v4574
          %v4577 = vmul.f32 %v4570, %v4575
          %v4579 = vlaneseq
          %v4580 = vshrl.u32 %v4579, 7
          %v4581 = vsub.s32 0, %v4580
          %v4582 = vrot.slane %v4556, %v4581
          %v4584 = vadd.f32 %v4577, %v4582
          %v4585 = vld [vmem:[%s21] sm:$0xff]
          %v4586 = vld [vmem:[%s21 + $0x8] sm:$0xff]
          %v4587 = vld [vmem:[%s21 + $0x10] sm:$0xff]
          %v4588 = vld [vmem:[%s21 + $0x18] sm:$0xff]
          %v4589 = vld [vmem:[%s21 + $0x20] sm:$0xff]
          %v4590 = vld [vmem:[%s21 + $0x28] sm:$0xff]
          %v4591 = vld [vmem:[%s21 + $0x30] sm:$0xff]
          %v4592 = vld [vmem:[%s21 + $0x38] sm:$0xff]
          %v4593 = vld [vmem:[%s22] sm:$0x1]
          %v4595 = vlaneseq
          %v4596 = vshrl.u32 %v4595, 7
          %v4597 = vsub.s32 0, %v4596
          %v4598 = vrot.slane %v4593, %v4597
          %v4601 = vsel %vm1196, %v4584, 0
          %4603 = vmatprep.subr.mxu0 0.0
          %4604 = vmatpush1.msra.mxu0 %v4585
          %4605 = vmatprep.subr.mxu0 0.0
          %4606 = vmatpush1.msra.mxu0 %v4586
          %4607 = vmatprep.subr.mxu0 0.0
          %4608 = vmatpush1.msra.mxu0 %v4587
          %4609 = vmatprep.subr.mxu0 0.0
          %4610 = vmatpush1.msra.mxu0 %v4588
          %4611 = vmatprep.subr.mxu0 0.0
          %4612 = vmatpush1.msra.mxu0 %v4589
          %4613 = vmatprep.subr.mxu0 0.0
          %4614 = vmatpush1.msra.mxu0 %v4590
          %4615 = vmatprep.subr.mxu0 0.0
          %4616 = vmatpush1.msra.mxu0 %v4591
          %4617 = vmatprep.subr.mxu0 0.0
          %4618 = vmatpush1.msra.mxu0 %v4592
          %4619 = vmatprep.subr.mxu0 0.0
          %4620 = vmatpush1.msra.mxu0 0.0
          %4621 = vmatprep.subr.mxu0 0.0
          %4622 = vmatpush1.msra.mxu0 0.0
          %4623 = vmatprep.subr.mxu0 0.0
          %4624 = vmatpush1.msra.mxu0 0.0
          %4625 = vmatprep.subr.mxu0 0.0
          %4626 = vmatpush1.msra.mxu0 0.0
          %4627 = vmatprep.subr.mxu0 0.0
          %4628 = vmatpush1.msra.mxu0 0.0
          %4629 = vmatprep.subr.mxu0 0.0
          %4630 = vmatpush1.msra.mxu0 0.0
          %4631 = vmatprep.subr.mxu0 0.0
          %4632 = vmatpush1.msra.mxu0 0.0
          %4633 = vmatprep.subr.mxu0 0.0
          %4634 = vmatpush1.msra.mxu0 0.0
          %4635 = vmatprep.subr.mxu0 0.0
          %4636 = vmatpush1.msra.mxu0 0.0
          %4637 = vmatprep.subr.mxu0 0.0
          %4638 = vmatpush1.msra.mxu0 0.0
          %4639 = vmatprep.subr.mxu0 0.0
          %4640 = vmatpush1.msra.mxu0 0.0
          %4641 = vmatprep.subr.mxu0 0.0
          %4642 = vmatpush1.msra.mxu0 0.0
          %4643 = vmatprep.subr.mxu0 0.0
          %4644 = vmatpush1.msra.mxu0 0.0
          %4645 = vmatprep.subr.mxu0 0.0
          %4646 = vmatpush1.msra.mxu0 0.0
          %4647 = vmatprep.subr.mxu0 0.0
          %4648 = vmatpush1.msra.mxu0 0.0
          %4649 = vmatprep.subr.mxu0 0.0
          %4650 = vmatpush1.msra.mxu0 0.0
          %4651 = vmatprep.subr.mxu0 0.0
          %4652 = vmatpush1.msra.mxu0 0.0
          %4653 = vmatprep.subr.mxu0 0.0
          %4654 = vmatpush1.msra.mxu0 0.0
          %4655 = vmatprep.subr.mxu0 0.0
          %4656 = vmatpush1.msra.mxu0 0.0
          %4657 = vmatprep.subr.mxu0 0.0
          %4658 = vmatpush1.msra.mxu0 0.0
          %4659 = vmatprep.subr.mxu0 0.0
          %4660 = vmatpush1.msra.mxu0 0.0
          %4661 = vmatprep.subr.mxu0 0.0
          %4662 = vmatpush1.msra.mxu0 0.0
          %4663 = vmatprep.subr.mxu0 0.0
          %4664 = vmatpush1.msra.mxu0 0.0
          %4665 = vmatprep.subr.mxu0 0.0
          %4666 = vmatpush1.msra.mxu0 0.0
          %4667 = vmatprep.mubr.f32.mxu0 0.0
          %4668 = vmatmul.mubr.f32.gmra.mrb[0].mxu0 %v4601
          %v4669 = vpop.f32.mrb[0].mxu0
          %v4670 = vadd.f32 %v4598, %v4669
          %v4671 = vpop.f32.mrb[0].mxu0
          %4672 = vdwg.mxu0
          %v4673 = vmax.f32 %v4670, 0.0
          %v4674 = vld [vmem:[%s23] sm:$0xff]
          %v4675 = vld [vmem:[%s23 + $0x8] sm:$0xff]
          %v4676 = vld [vmem:[%s23 + $0x10] sm:$0xff]
          %v4677 = vld [vmem:[%s23 + $0x18] sm:$0xff]
          %v4678 = vld [vmem:[%s23 + $0x20] sm:$0xff]
          %v4679 = vld [vmem:[%s23 + $0x28] sm:$0xff]
          %v4680 = vld [vmem:[%s23 + $0x30] sm:$0xff]
          %v4681 = vld [vmem:[%s23 + $0x38] sm:$0xff]
          %v4682 = vld [vmem:[%s24] sm:$0x1]
          %v4684 = vlaneseq
          %v4685 = vshrl.u32 %v4684, 7
          %v4686 = vsub.s32 0, %v4685
          %v4687 = vrot.slane %v4682, %v4686
          %v4690 = vsel %vm1196, %v4673, 0
          %4692 = vmatprep.subr.mxu0 0.0
          %4693 = vmatpush1.msra.mxu0 %v4674
          %4694 = vmatprep.subr.mxu0 0.0
          %4695 = vmatpush1.msra.mxu0 %v4675
          %4696 = vmatprep.subr.mxu0 0.0
          %4697 = vmatpush1.msra.mxu0 %v4676
          %4698 = vmatprep.subr.mxu0 0.0
          %4699 = vmatpush1.msra.mxu0 %v4677
          %4700 = vmatprep.subr.mxu0 0.0
          %4701 = vmatpush1.msra.mxu0 %v4678
          %4702 = vmatprep.subr.mxu0 0.0
          %4703 = vmatpush1.msra.mxu0 %v4679
          %4704 = vmatprep.subr.mxu0 0.0
          %4705 = vmatpush1.msra.mxu0 %v4680
          %4706 = vmatprep.subr.mxu0 0.0
          %4707 = vmatpush1.msra.mxu0 %v4681
          %4708 = vmatprep.subr.mxu0 0.0
          %4709 = vmatpush1.msra.mxu0 0.0
          %4710 = vmatprep.subr.mxu0 0.0
          %4711 = vmatpush1.msra.mxu0 0.0
          %4712 = vmatprep.subr.mxu0 0.0
          %4713 = vmatpush1.msra.mxu0 0.0
          %4714 = vmatprep.subr.mxu0 0.0
          %4715 = vmatpush1.msra.mxu0 0.0
          %4716 = vmatprep.subr.mxu0 0.0
          %4717 = vmatpush1.msra.mxu0 0.0
          %4718 = vmatprep.subr.mxu0 0.0
          %4719 = vmatpush1.msra.mxu0 0.0
          %4720 = vmatprep.subr.mxu0 0.0
          %4721 = vmatpush1.msra.mxu0 0.0
          %4722 = vmatprep.subr.mxu0 0.0
          %4723 = vmatpush1.msra.mxu0 0.0
          %4724 = vmatprep.subr.mxu0 0.0
          %4725 = vmatpush1.msra.mxu0 0.0
          %4726 = vmatprep.subr.mxu0 0.0
          %4727 = vmatpush1.msra.mxu0 0.0
          %4728 = vmatprep.subr.mxu0 0.0
          %4729 = vmatpush1.msra.mxu0 0.0
          %4730 = vmatprep.subr.mxu0 0.0
          %4731 = vmatpush1.msra.mxu0 0.0
          %4732 = vmatprep.subr.mxu0 0.0
          %4733 = vmatpush1.msra.mxu0 0.0
          %4734 = vmatprep.subr.mxu0 0.0
          %4735 = vmatpush1.msra.mxu0 0.0
          %4736 = vmatprep.subr.mxu0 0.0
          %4737 = vmatpush1.msra.mxu0 0.0
          %4738 = vmatprep.subr.mxu0 0.0
          %4739 = vmatpush1.msra.mxu0 0.0
          %4740 = vmatprep.subr.mxu0 0.0
          %4741 = vmatpush1.msra.mxu0 0.0
          %4742 = vmatprep.subr.mxu0 0.0
          %4743 = vmatpush1.msra.mxu0 0.0
          %4744 = vmatprep.subr.mxu0 0.0
          %4745 = vmatpush1.msra.mxu0 0.0
          %4746 = vmatprep.subr.mxu0 0.0
          %4747 = vmatpush1.msra.mxu0 0.0
          %4748 = vmatprep.subr.mxu0 0.0
          %4749 = vmatpush1.msra.mxu0 0.0
          %4750 = vmatprep.subr.mxu0 0.0
          %4751 = vmatpush1.msra.mxu0 0.0
          %4752 = vmatprep.subr.mxu0 0.0
          %4753 = vmatpush1.msra.mxu0 0.0
          %4754 = vmatprep.subr.mxu0 0.0
          %4755 = vmatpush1.msra.mxu0 0.0
          %4756 = vmatprep.mubr.f32.mxu0 0.0
          %4757 = vmatmul.mubr.f32.gmra.mrb[0].mxu0 %v4690
          %v4758 = vpop.f32.mrb[0].mxu0
          %v4759 = vadd.f32 %v4687, %v4758
          %v4760 = vpop.f32.mrb[0].mxu0
          %4761 = vdwg.mxu0
          %4762 = vst [vmem:[#allocation3] sm:$0x3] %v4759
        $region128: #{album_event_classifier_forward.1} parent=119 // pred_fallthru
          _
        // Predicated region
        $region129: #{album_event_classifier_forward.1} parent=119 // pred_check
          %p4763 = pneg %p635
        $region130: #{album_event_classifier_forward.1} parent=119 // pred_check_branch
          %4765 = sbr.rel (%p4763) target = $region132
        $region131: #{album_event_classifier_forward.1} parent=119 // pred_region
          %s4767 = ssub.s32 32, 32
          %4768 = vsyncadd [#allocation4], %s4767
          %s4770 = sshll.u32 [#allocation3], 4
          %s4771 = int_to_ptr.vmem [resolvable:$true] %s4770
          %4773 = dma.vmem_to_hbm [thread:$0]  %s4771, 32, %s25, [#allocation4]
        $region132: #{album_event_classifier_forward.1} parent=119 // pred_fallthru
          _
        // Predicated region
        $region133: #{album_event_classifier_forward.1} parent=119 // pred_check
          %p4774 = pneg %p635
        $region134: #{album_event_classifier_forward.1} parent=119 // pred_check_branch
          %4776 = sbr.rel (%p4774) target = $region136
        $region135: #{album_event_classifier_forward.1} parent=119 // pred_region
          %4777 = dma.done [#allocation4], 32
        $region136: #{album_event_classifier_forward.1} parent=119 // pred_fallthru
          _
      $region120: #{album_event_classifier_forward.1} parent=5 // pred_fallthru
        _
      %p4778 = scmp.le.s32.totalorder 2, %s32
      // Predicated region
      $region137: #{album_event_classifier_forward.1} parent=5 // pred_check
        %p4779 = pneg %p4778
      $region138: #{album_event_classifier_forward.1} parent=5 // pred_check_branch
        %4781 = sbr.rel (%p4779) target = $region140
      $region139: #{album_event_classifier_forward.1} parent=5 // pred_region
        %s4782 = ssub.s32 %s32, 2
      $region140: #{album_event_classifier_forward.1} parent=5 // pred_fallthru
        _
    $region6: #{album_event_classifier_forward.1} parent=1 // loop_footer
      %s36 = sadd.s32 1, %s32
    $region7: #{album_event_classifier_forward.1} parent=1 // loop_footer_branch
      %31 = sbr.rel target = $region3
    $region8: #{album_event_classifier_forward.1} parent=1 // loop_exit
      _
    %4783 = vsyncpa [#allocation4], 1
    %s4784 = scalar_lea.sflag [#allocation4], 1
    %4785 = vsyncpa %s4784, 1

</llo_original>
